<compile_context>
chip_gen: v6e
topology: v6e:2x2x1
jax: 0.10.0
libtpu: 0.0.40
codegen_flags: <defaults>
</compile_context>

<pallas_src>
import jax
import jax.numpy as jnp
from jax.experimental import pallas as pl
from jax.experimental.pallas import tpu as pltpu

BATCH_SIZE = 1
ENC_EMB_DIM = 256


# ----------------------------------------------------------------------------
# Fused encoder kernel (single pallas_call, no grid).
#   refs layout (positional):
#     src_ref                       : (S,)        int32  SMEM  token ids
#     emb_ref                       : (Vpad, E)   f32    VMEM  embedding table
#     wih0_ref, whh0_ref, b0_ref    : layer-0 weights (E,4H), (H,4H), (1,4H)
#     [wcat_ref, b_ref] * (L-1)     : upper layers (2H,4H), (1,4H)
#     h_out_ref, c_out_ref          : (L, H)      f32    VMEM  outputs
#     xw_ref                        : (S, 4H)     f32    VMEM  scratch
#   Gate-column order is [i, f, o, g] (pre-permuted at weight-prep time).
# ----------------------------------------------------------------------------
def make_encoder_kernel(n_layers, seq_len, hid_dim, vocab_pad):
    S, H, V = seq_len, hid_dim, vocab_pad

    def kernel(*refs):
        src_ref, emb_ref, wih0_ref, whh0_ref, b0_ref = refs[:5]
        upper = [(refs[5 + 2 * i], refs[5 + 2 * i + 1])
                 for i in range(n_layers - 1)]
        n_in = 5 + 2 * (n_layers - 1)
        h_out_ref = refs[n_in]
        c_out_ref = refs[n_in + 1]
        xw_ref = refs[n_in + 2]

        # ---- Embedding gather as one-hot @ table (tiny MXU matmul, no
        #      dynamic sublane loads / concatenates in the prologue).
        row_iota = jax.lax.broadcasted_iota(jnp.int32, (S, V), 0)
        col_iota = jax.lax.broadcasted_iota(jnp.int32, (S, V), 1)
        ids = jnp.zeros((S, V), jnp.int32)
        for t in range(S):
            ids = jnp.where(row_iota == t, src_ref[t], ids)
        onehot = (col_iota == ids).astype(jnp.float32)          # (S, Vpad)
        x = jnp.dot(onehot, emb_ref[...],
                    preferred_element_type=jnp.float32)          # (S, E)

        # ---- Layer 0: bulk input matmul, kept OFF the recurrent chain and
        #      parked in VMEM scratch (static per-step row loads later).
        xw_ref[...] = jnp.dot(x, wih0_ref[...],
                              preferred_element_type=jnp.float32) + b0_ref[...]

        # ---- Recurrent states (one (1, H) vreg each).
        h = [jnp.zeros((1, H), jnp.float32) for _ in range(n_layers)]
        c = [jnp.zeros((1, H), jnp.float32) for _ in range(n_layers)]

        def lstm_cell(gates, c_prev):
            # gates columns are [i | f | o | g]
            sig = jax.nn.sigmoid(gates[:, 0:3 * H])
            i_g = sig[:, 0:H]
            f_g = sig[:, H:2 * H]
            o_g = sig[:, 2 * H:3 * H]
            g_g = jnp.tanh(gates[:, 3 * H:4 * H])
            c_new = f_g * c_prev + i_g * g_g
            h_new = o_g * jnp.tanh(c_new)
            return h_new, c_new

        # ---- Wavefront over (layer, time): at wave w, layer l runs step
        #      t = w - l.  Layers are visited high->low inside a wave so that
        #      layer l reads h[l-1] (layer l-1's step-t value from the
        #      previous wave) BEFORE layer l-1 overwrites it with step t+1.
        #      Serial chain depth: S + n_layers - 1 instead of S * n_layers.
        for w in range(S + n_layers - 1):
            for l in reversed(range(n_layers)):
                t = w - l
                if t < 0 or t >= S:
                    continue
                if l == 0:
                    # input contribution precomputed -> only the (1,H)@(H,4H)
                    # recurrent matmul is on the chain.  Weight ref indexed at
                    # point of use: streams VMEM -> MXU, never lives in vregs.
                    gates = xw_ref[t:t + 1, :] + jnp.dot(
                        h[0], whh0_ref[...],
                        preferred_element_type=jnp.float32)        # (1, 4H)
                else:
                    wcat_ref, b_ref = upper[l - 1]
                    # fused input+recurrent matmul: [x_t | h_{t-1}] @ [Wih;Whh]
                    xh = jnp.concatenate([h[l - 1], h[l]], axis=1)  # (1, 2H)
                    gates = jnp.dot(xh, wcat_ref[...],
                                    preferred_element_type=jnp.float32
                                    ) + b_ref[...]                  # (1, 4H)
                h[l], c[l] = lstm_cell(gates, c[l])

        for l in range(n_layers):
            h_out_ref[l:l + 1, :] = h[l]
            c_out_ref[l:l + 1, :] = c[l]

    return kernel


def encoder_pallas(src_tokens, embedding, layer_params):
    """src_tokens: (S,) int32. Returns (hidden, cell) each (n_layers, H)."""
    S = src_tokens.shape[0]
    n_layers = len(layer_params)
    H = layer_params[0]["w_hh_t"].shape[0]
    V_pad = embedding.shape[0]

    operands = [src_tokens, embedding,
                layer_params[0]["w_ih_t"], layer_params[0]["w_hh_t"],
                layer_params[0]["b"]]
    in_specs = ([pl.BlockSpec(memory_space=pltpu.MemorySpace.SMEM)]
                + [pl.BlockSpec(memory_space=pltpu.MemorySpace.VMEM)] * 4)
    for lp in layer_params[1:]:
        operands += [lp["w_cat"], lp["b"]]
        in_specs += [pl.BlockSpec(memory_space=pltpu.MemorySpace.VMEM)] * 2

    kernel = make_encoder_kernel(n_layers, S, H, V_pad)
    hidden, cell = pl.pallas_call(
        kernel,
        out_shape=(
            jax.ShapeDtypeStruct((n_layers, H), jnp.float32),
            jax.ShapeDtypeStruct((n_layers, H), jnp.float32),
        ),
        in_specs=in_specs,
        out_specs=(
            pl.BlockSpec(memory_space=pltpu.MemorySpace.VMEM),
            pl.BlockSpec(memory_space=pltpu.MemorySpace.VMEM),
        ),
        scratch_shapes=[pltpu.VMEM((S, 4 * H), jnp.float32)],  # layer-0 xw
    )(*operands)
    return hidden, cell


# ----------------------------------------------------------------------------
# Parameter construction (PyTorch nn.LSTM layout) + kernel-side prep.
# ----------------------------------------------------------------------------
def init_raw_params(key, input_dim, emb_dim, hid_dim, n_layers):
    keys = jax.random.split(key, 1 + 4 * n_layers)
    emb = jax.random.normal(keys[0], (input_dim, emb_dim), jnp.float32) * 0.1
    bound = 1.0 / float(hid_dim) ** 0.5
    layers = []
    for l in range(n_layers):
        d_in = emb_dim if l == 0 else hid_dim
        k_wi, k_wh, k_bi, k_bh = keys[1 + 4 * l:1 + 4 * (l + 1)]
        layers.append({
            "w_ih": jax.random.uniform(k_wi, (4 * hid_dim, d_in), jnp.float32,
                                       -bound, bound),
            "w_hh": jax.random.uniform(k_wh, (4 * hid_dim, hid_dim),
                                       jnp.float32, -bound, bound),
            "b_ih": jax.random.uniform(k_bi, (4 * hid_dim,), jnp.float32,
                                       -bound, bound),
            "b_hh": jax.random.uniform(k_bh, (4 * hid_dim,), jnp.float32,
                                       -bound, bound),
        })
    return {"embedding": emb, "layers": layers}


def prepare_kernel_params(raw, hid_dim):
    """Transpose weights, permute gate columns i,f,g,o -> i,f,o,g, pad vocab,
    and pre-concat [w_ih; w_hh] for layers >= 1 (fused per-step matmul)."""
    H = hid_dim
    perm = jnp.concatenate([
        jnp.arange(0, H), jnp.arange(H, 2 * H),
        jnp.arange(3 * H, 4 * H), jnp.arange(2 * H, 3 * H)
    ])
    emb = raw["embedding"]
    V, E = emb.shape
    V_pad = ((V + 127) // 128) * 128          # lane-friendly one-hot gather
    emb_padded = jnp.zeros((V_pad, E), emb.dtype).at[:V].set(emb)

    layers = []
    for idx, lp in enumerate(raw["layers"]):
        w_ih_t = lp["w_ih"].T[:, perm]                          # (D_in, 4H)
        w_hh_t = lp["w_hh"].T[:, perm]                          # (H, 4H)
        b = (lp["b_ih"] + lp["b_hh"])[perm].reshape(1, -1)      # (1, 4H)
        if idx == 0:
            layers.append({"w_ih_t": w_ih_t, "w_hh_t": w_hh_t, "b": b})
        else:
            layers.append({
                "w_hh_t": w_hh_t,   # kept only for shape introspection
                "w_cat": jnp.concatenate([w_ih_t, w_hh_t], axis=0),  # (2H,4H)
                "b": b,
            })
    return {"embedding": emb_padded, "layers": layers}


@jax.jit
def encoder_forward(kparams, src):
    # src: (S, BATCH_SIZE) int tokens  (PyTorch time-major convention)
    assert src.ndim == 2 and src.shape[1] == BATCH_SIZE, (
        "kernel assumes batch size == BATCH_SIZE (=1)")
    src_tokens = src.reshape(-1).astype(jnp.int32)           # (S,)
    hidden, cell = encoder_pallas(src_tokens, kparams["embedding"],
                                  kparams["layers"])
    # Match PyTorch output layout: (n_layers, batch=1, H)
    return hidden[:, None, :], cell[:, None, :]


# ----------------------------------------------------------------------------
# Pure-JAX reference using the *raw* (PyTorch-layout, i,f,g,o-order) params.
# ----------------------------------------------------------------------------
def encoder_reference(raw, src):
    x = jnp.take(raw["embedding"], src.reshape(-1), axis=0)  # (S, E)
    hs, cs = [], []
    for lp in raw["layers"]:
        H = lp["w_hh"].shape[1]
        wih_t, whh_t = lp["w_ih"].T, lp["w_hh"].T
        b = (lp["b_ih"] + lp["b_hh"]).reshape(1, -1)
        h = jnp.zeros((1, H), jnp.float32)
        c = jnp.zeros((1, H), jnp.float32)
        xw = x @ wih_t + b
        ys = []
        for t in range(x.shape[0]):
            gates = xw[t:t + 1] + h @ whh_t
            i_g = jax.nn.sigmoid(gates[:, 0:H])
            f_g = jax.nn.sigmoid(gates[:, H:2 * H])
            g_g = jnp.tanh(gates[:, 2 * H:3 * H])
            o_g = jax.nn.sigmoid(gates[:, 3 * H:4 * H])
            c = f_g * c + i_g * g_g
            h = o_g * jnp.tanh(c)
            ys.append(h)
        x = jnp.concatenate(ys, axis=0)
        hs.append(h)
        cs.append(c)
    return jnp.stack(hs, 0), jnp.stack(cs, 0)


if __name__ == "__main__":
    INPUT_DIM = 50            # vocab size
    EMB_DIM = ENC_EMB_DIM     # 256, fixed by the module's reshape constant
    HID_DIM = 128
    N_LAYERS = 2
    SEQ_LEN = 8

    key = jax.random.PRNGKey(0)
    k_param, k_src = jax.random.split(key)
    raw_params = init_raw_params(k_param, INPUT_DIM, EMB_DIM, HID_DIM,
                                 N_LAYERS)
    kernel_params = prepare_kernel_params(raw_params, HID_DIM)
    src = jax.random.randint(k_src, (SEQ_LEN, BATCH_SIZE), 0, INPUT_DIM,
                             dtype=jnp.int32)

    hidden, cell = encoder_forward(kernel_params, src)
    jax.block_until_ready((hidden, cell))

    h_ref, c_ref = encoder_reference(raw_params, src)
    assert hidden.shape == (N_LAYERS, BATCH_SIZE, HID_DIM)
    assert cell.shape == (N_LAYERS, BATCH_SIZE, HID_DIM)
    assert jnp.allclose(hidden, h_ref, atol=1e-4, rtol=1e-4)
    assert jnp.allclose(cell, c_ref, atol=1e-4, rtol=1e-4)

    print("KERNEL_OK")
</pallas_src>

<mosaic_0001>
module attributes {stable_mosaic.version = 11 : i64} {
  func.func @kernel(%arg0: memref<8xi32, #tpu.memory_space<smem>>, %arg1: memref<128x256xf32, #tpu.memory_space<vmem>>, %arg2: memref<256x512xf32, #tpu.memory_space<vmem>>, %arg3: memref<128x512xf32, #tpu.memory_space<vmem>>, %arg4: memref<1x512xf32, #tpu.memory_space<vmem>>, %arg5: memref<256x512xf32, #tpu.memory_space<vmem>>, %arg6: memref<1x512xf32, #tpu.memory_space<vmem>>, %arg7: memref<2x128xf32, #tpu.memory_space<vmem>>, %arg8: memref<2x128xf32, #tpu.memory_space<vmem>>, %arg9: memref<8x512xf32, #tpu.memory_space<vmem>>) attributes {dimension_semantics = [], scalar_prefetch = 0 : i64, scratch_operands = 1 : i64, tpu.core_type = #tpu.core_type<tc>} {
    %0 = tpu.iota {dimensions = array<i32: 0>} : vector<8x128xi32>
    %1 = tpu.iota {dimensions = array<i32: 1>} : vector<8x128xi32>
    %c0_i32 = arith.constant 0 : i32
    %2 = vector.broadcast %c0_i32 : i32 to vector<8x128xi32>
    %c0_i32_0 = arith.constant 0 : i32
    %3 = vector.broadcast %c0_i32_0 : i32 to vector<8x128xi32>
    %4 = arith.cmpi eq, %0, %3 : vector<8x128xi32>
    %c0 = arith.constant 0 : index
    %5 = memref.load %arg0[%c0] : memref<8xi32, #tpu.memory_space<smem>>
    %6 = vector.broadcast %5 : i32 to vector<8x128xi32>
    %7 = arith.select %4, %6, %2 : vector<8x128xi1>, vector<8x128xi32>
    %c1_i32 = arith.constant 1 : i32
    %8 = vector.broadcast %c1_i32 : i32 to vector<8x128xi32>
    %9 = arith.cmpi eq, %0, %8 : vector<8x128xi32>
    %c1 = arith.constant 1 : index
    %10 = memref.load %arg0[%c1] : memref<8xi32, #tpu.memory_space<smem>>
    %11 = vector.broadcast %10 : i32 to vector<8x128xi32>
    %12 = arith.select %9, %11, %7 : vector<8x128xi1>, vector<8x128xi32>
    %c2_i32 = arith.constant 2 : i32
    %13 = vector.broadcast %c2_i32 : i32 to vector<8x128xi32>
    %14 = arith.cmpi eq, %0, %13 : vector<8x128xi32>
    %c2 = arith.constant 2 : index
    %15 = memref.load %arg0[%c2] : memref<8xi32, #tpu.memory_space<smem>>
    %16 = vector.broadcast %15 : i32 to vector<8x128xi32>
    %17 = arith.select %14, %16, %12 : vector<8x128xi1>, vector<8x128xi32>
    %c3_i32 = arith.constant 3 : i32
    %18 = vector.broadcast %c3_i32 : i32 to vector<8x128xi32>
    %19 = arith.cmpi eq, %0, %18 : vector<8x128xi32>
    %c3 = arith.constant 3 : index
    %20 = memref.load %arg0[%c3] : memref<8xi32, #tpu.memory_space<smem>>
    %21 = vector.broadcast %20 : i32 to vector<8x128xi32>
    %22 = arith.select %19, %21, %17 : vector<8x128xi1>, vector<8x128xi32>
    %c4_i32 = arith.constant 4 : i32
    %23 = vector.broadcast %c4_i32 : i32 to vector<8x128xi32>
    %24 = arith.cmpi eq, %0, %23 : vector<8x128xi32>
    %c4 = arith.constant 4 : index
    %25 = memref.load %arg0[%c4] : memref<8xi32, #tpu.memory_space<smem>>
    %26 = vector.broadcast %25 : i32 to vector<8x128xi32>
    %27 = arith.select %24, %26, %22 : vector<8x128xi1>, vector<8x128xi32>
    %c5_i32 = arith.constant 5 : i32
    %28 = vector.broadcast %c5_i32 : i32 to vector<8x128xi32>
    %29 = arith.cmpi eq, %0, %28 : vector<8x128xi32>
    %c5 = arith.constant 5 : index
    %30 = memref.load %arg0[%c5] : memref<8xi32, #tpu.memory_space<smem>>
    %31 = vector.broadcast %30 : i32 to vector<8x128xi32>
    %32 = arith.select %29, %31, %27 : vector<8x128xi1>, vector<8x128xi32>
    %c6_i32 = arith.constant 6 : i32
    %33 = vector.broadcast %c6_i32 : i32 to vector<8x128xi32>
    %34 = arith.cmpi eq, %0, %33 : vector<8x128xi32>
    %c6 = arith.constant 6 : index
    %35 = memref.load %arg0[%c6] : memref<8xi32, #tpu.memory_space<smem>>
    %36 = vector.broadcast %35 : i32 to vector<8x128xi32>
    %37 = arith.select %34, %36, %32 : vector<8x128xi1>, vector<8x128xi32>
    %c7_i32 = arith.constant 7 : i32
    %38 = vector.broadcast %c7_i32 : i32 to vector<8x128xi32>
    %39 = arith.cmpi eq, %0, %38 : vector<8x128xi32>
    %c7 = arith.constant 7 : index
    %40 = memref.load %arg0[%c7] : memref<8xi32, #tpu.memory_space<smem>>
    %41 = vector.broadcast %40 : i32 to vector<8x128xi32>
    %42 = arith.select %39, %41, %37 : vector<8x128xi1>, vector<8x128xi32>
    %43 = arith.cmpi eq, %1, %42 : vector<8x128xi32>
    %44 = arith.extui %43 : vector<8x128xi1> to vector<8x128xi32>
    %45 = arith.sitofp %44 : vector<8x128xi32> to vector<8x128xf32>
    %c0_1 = arith.constant 0 : index
    %c0_2 = arith.constant 0 : index
    %46 = vector.load %arg1[%c0_1, %c0_2] : memref<128x256xf32, #tpu.memory_space<vmem>>, vector<128x256xf32>
    %cst = arith.constant dense<0.000000e+00> : vector<8x256xf32>
    %47 = tpu.matmul %45, %46, %cst {dimension_numbers = #tpu.dot_dimension_numbers<[1], [0], [0], [1], [0, 0, 1, 1], [], []>} : vector<8x128xf32>, vector<128x256xf32>, vector<8x256xf32> -> vector<8x256xf32>
    %c0_3 = arith.constant 0 : index
    %c0_4 = arith.constant 0 : index
    %48 = vector.load %arg2[%c0_3, %c0_4] : memref<256x512xf32, #tpu.memory_space<vmem>>, vector<256x512xf32>
    %cst_5 = arith.constant dense<0.000000e+00> : vector<8x512xf32>
    %49 = tpu.matmul %47, %48, %cst_5 {dimension_numbers = #tpu.dot_dimension_numbers<[1], [0], [0], [1], [0, 0, 1, 1], [], []>} : vector<8x256xf32>, vector<256x512xf32>, vector<8x512xf32> -> vector<8x512xf32>
    %c0_6 = arith.constant 0 : index
    %c0_7 = arith.constant 0 : index
    %50 = vector.load %arg4[%c0_6, %c0_7] : memref<1x512xf32, #tpu.memory_space<vmem>>, vector<1x512xf32>
    %51 = vector.broadcast %50 : vector<1x512xf32> to vector<8x512xf32>
    %52 = arith.addf %49, %51 : vector<8x512xf32>
    %c0_8 = arith.constant 0 : index
    %c0_9 = arith.constant 0 : index
    %53 = vector.load %arg9[%c0_8, %c0_9] : memref<8x512xf32, #tpu.memory_space<vmem>>, vector<8x512xf32>
    tpu.vector_store %arg9[%c0_8, %c0_9], %52 {strides = array<i32>} : memref<8x512xf32, #tpu.memory_space<vmem>>, vector<8x512xf32>,
    %cst_10 = arith.constant 0.000000e+00 : f32
    %54 = vector.broadcast %cst_10 : f32 to vector<1x128xf32>
    %cst_11 = arith.constant 0.000000e+00 : f32
    %55 = vector.broadcast %cst_11 : f32 to vector<1x128xf32>
    %cst_12 = arith.constant 0.000000e+00 : f32
    %56 = vector.broadcast %cst_12 : f32 to vector<1x128xf32>
    %cst_13 = arith.constant 0.000000e+00 : f32
    %57 = vector.broadcast %cst_13 : f32 to vector<1x128xf32>
    %c0_14 = arith.constant 0 : index
    %c0_15 = arith.constant 0 : index
    %58 = vector.load %arg9[%c0_14, %c0_15] : memref<8x512xf32, #tpu.memory_space<vmem>>, vector<1x512xf32>
    %c0_16 = arith.constant 0 : index
    %c0_17 = arith.constant 0 : index
    %59 = vector.load %arg3[%c0_16, %c0_17] : memref<128x512xf32, #tpu.memory_space<vmem>>, vector<128x512xf32>
    %cst_18 = arith.constant dense<0.000000e+00> : vector<1x512xf32>
    %60 = tpu.matmul %54, %59, %cst_18 {dimension_numbers = #tpu.dot_dimension_numbers<[1], [0], [0], [1], [0, 0, 1, 1], [], []>} : vector<1x128xf32>, vector<128x512xf32>, vector<1x512xf32> -> vector<1x512xf32>
    %61 = arith.addf %58, %60 : vector<1x512xf32>
    %62 = vector.extract_strided_slice %61 {offsets = [0, 0], sizes = [1, 384], strides = [1, 1]} : vector<1x512xf32> to vector<1x384xf32>
    %63 = arith.negf %62 : vector<1x384xf32>
    %64 = math.exp %63 : vector<1x384xf32>
    %cst_19 = arith.constant 1.000000e+00 : f32
    %65 = vector.broadcast %cst_19 : f32 to vector<1x384xf32>
    %66 = arith.addf %65, %64 : vector<1x384xf32>
    %67 = arith.divf %65, %66 : vector<1x384xf32>
    %68 = vector.extract_strided_slice %67 {offsets = [0, 0], sizes = [1, 128], strides = [1, 1]} : vector<1x384xf32> to vector<1x128xf32>
    %69 = vector.extract_strided_slice %67 {offsets = [0, 128], sizes = [1, 128], strides = [1, 1]} : vector<1x384xf32> to vector<1x128xf32>
    %70 = vector.extract_strided_slice %67 {offsets = [0, 256], sizes = [1, 128], strides = [1, 1]} : vector<1x384xf32> to vector<1x128xf32>
    %71 = vector.extract_strided_slice %61 {offsets = [0, 384], sizes = [1, 128], strides = [1, 1]} : vector<1x512xf32> to vector<1x128xf32>
    %72 = math.tanh %71 : vector<1x128xf32>
    %73 = arith.mulf %69, %56 : vector<1x128xf32>
    %74 = arith.mulf %68, %72 : vector<1x128xf32>
    %75 = arith.addf %73, %74 : vector<1x128xf32>
    %76 = math.tanh %75 : vector<1x128xf32>
    %77 = arith.mulf %70, %76 : vector<1x128xf32>
    %78 = tpu.concatenate %77, %55 in 1 : vector<1x128xf32>, vector<1x128xf32> -> vector<1x256xf32>
    %c0_20 = arith.constant 0 : index
    %c0_21 = arith.constant 0 : index
    %79 = vector.load %arg5[%c0_20, %c0_21] : memref<256x512xf32, #tpu.memory_space<vmem>>, vector<256x512xf32>
    %cst_22 = arith.constant dense<0.000000e+00> : vector<1x512xf32>
    %80 = tpu.matmul %78, %79, %cst_22 {dimension_numbers = #tpu.dot_dimension_numbers<[1], [0], [0], [1], [0, 0, 1, 1], [], []>} : vector<1x256xf32>, vector<256x512xf32>, vector<1x512xf32> -> vector<1x512xf32>
    %c0_23 = arith.constant 0 : index
    %c0_24 = arith.constant 0 : index
    %81 = vector.load %arg6[%c0_23, %c0_24] : memref<1x512xf32, #tpu.memory_space<vmem>>, vector<1x512xf32>
    %82 = arith.addf %80, %81 : vector<1x512xf32>
    %83 = vector.extract_strided_slice %82 {offsets = [0, 0], sizes = [1, 384], strides = [1, 1]} : vector<1x512xf32> to vector<1x384xf32>
    %84 = arith.negf %83 : vector<1x384xf32>
    %85 = math.exp %84 : vector<1x384xf32>
    %cst_25 = arith.constant 1.000000e+00 : f32
    %86 = vector.broadcast %cst_25 : f32 to vector<1x384xf32>
    %87 = arith.addf %86, %85 : vector<1x384xf32>
    %88 = arith.divf %86, %87 : vector<1x384xf32>
    %89 = vector.extract_strided_slice %88 {offsets = [0, 0], sizes = [1, 128], strides = [1, 1]} : vector<1x384xf32> to vector<1x128xf32>
    %90 = vector.extract_strided_slice %88 {offsets = [0, 128], sizes = [1, 128], strides = [1, 1]} : vector<1x384xf32> to vector<1x128xf32>
    %91 = vector.extract_strided_slice %88 {offsets = [0, 256], sizes = [1, 128], strides = [1, 1]} : vector<1x384xf32> to vector<1x128xf32>
    %92 = vector.extract_strided_slice %82 {offsets = [0, 384], sizes = [1, 128], strides = [1, 1]} : vector<1x512xf32> to vector<1x128xf32>
    %93 = math.tanh %92 : vector<1x128xf32>
    %94 = arith.mulf %90, %57 : vector<1x128xf32>
    %95 = arith.mulf %89, %93 : vector<1x128xf32>
    %96 = arith.addf %94, %95 : vector<1x128xf32>
    %97 = math.tanh %96 : vector<1x128xf32>
    %98 = arith.mulf %91, %97 : vector<1x128xf32>
    %c1_26 = arith.constant 1 : index
    %c0_27 = arith.constant 0 : index
    %99 = vector.load %arg9[%c1_26, %c0_27] : memref<8x512xf32, #tpu.memory_space<vmem>>, vector<1x512xf32>
    %c0_28 = arith.constant 0 : index
    %c0_29 = arith.constant 0 : index
    %100 = vector.load %arg3[%c0_28, %c0_29] : memref<128x512xf32, #tpu.memory_space<vmem>>, vector<128x512xf32>
    %cst_30 = arith.constant dense<0.000000e+00> : vector<1x512xf32>
    %101 = tpu.matmul %77, %100, %cst_30 {dimension_numbers = #tpu.dot_dimension_numbers<[1], [0], [0], [1], [0, 0, 1, 1], [], []>} : vector<1x128xf32>, vector<128x512xf32>, vector<1x512xf32> -> vector<1x512xf32>
    %102 = arith.addf %99, %101 : vector<1x512xf32>
    %103 = vector.extract_strided_slice %102 {offsets = [0, 0], sizes = [1, 384], strides = [1, 1]} : vector<1x512xf32> to vector<1x384xf32>
    %104 = arith.negf %103 : vector<1x384xf32>
    %105 = math.exp %104 : vector<1x384xf32>
    %cst_31 = arith.constant 1.000000e+00 : f32
    %106 = vector.broadcast %cst_31 : f32 to vector<1x384xf32>
    %107 = arith.addf %106, %105 : vector<1x384xf32>
    %108 = arith.divf %106, %107 : vector<1x384xf32>
    %109 = vector.extract_strided_slice %108 {offsets = [0, 0], sizes = [1, 128], strides = [1, 1]} : vector<1x384xf32> to vector<1x128xf32>
    %110 = vector.extract_strided_slice %108 {offsets = [0, 128], sizes = [1, 128], strides = [1, 1]} : vector<1x384xf32> to vector<1x128xf32>
    %111 = vector.extract_strided_slice %108 {offsets = [0, 256], sizes = [1, 128], strides = [1, 1]} : vector<1x384xf32> to vector<1x128xf32>
    %112 = vector.extract_strided_slice %102 {offsets = [0, 384], sizes = [1, 128], strides = [1, 1]} : vector<1x512xf32> to vector<1x128xf32>
    %113 = math.tanh %112 : vector<1x128xf32>
    %114 = arith.mulf %110, %75 : vector<1x128xf32>
    %115 = arith.mulf %109, %113 : vector<1x128xf32>
    %116 = arith.addf %114, %115 : vector<1x128xf32>
    %117 = math.tanh %116 : vector<1x128xf32>
    %118 = arith.mulf %111, %117 : vector<1x128xf32>
    %119 = tpu.concatenate %118, %98 in 1 : vector<1x128xf32>, vector<1x128xf32> -> vector<1x256xf32>
    %c0_32 = arith.constant 0 : index
    %c0_33 = arith.constant 0 : index
    %120 = vector.load %arg5[%c0_32, %c0_33] : memref<256x512xf32, #tpu.memory_space<vmem>>, vector<256x512xf32>
    %cst_34 = arith.constant dense<0.000000e+00> : vector<1x512xf32>
    %121 = tpu.matmul %119, %120, %cst_34 {dimension_numbers = #tpu.dot_dimension_numbers<[1], [0], [0], [1], [0, 0, 1, 1], [], []>} : vector<1x256xf32>, vector<256x512xf32>, vector<1x512xf32> -> vector<1x512xf32>
    %c0_35 = arith.constant 0 : index
    %c0_36 = arith.constant 0 : index
    %122 = vector.load %arg6[%c0_35, %c0_36] : memref<1x512xf32, #tpu.memory_space<vmem>>, vector<1x512xf32>
    %123 = arith.addf %121, %122 : vector<1x512xf32>
    %124 = vector.extract_strided_slice %123 {offsets = [0, 0], sizes = [1, 384], strides = [1, 1]} : vector<1x512xf32> to vector<1x384xf32>
    %125 = arith.negf %124 : vector<1x384xf32>
    %126 = math.exp %125 : vector<1x384xf32>
    %cst_37 = arith.constant 1.000000e+00 : f32
    %127 = vector.broadcast %cst_37 : f32 to vector<1x384xf32>
    %128 = arith.addf %127, %126 : vector<1x384xf32>
    %129 = arith.divf %127, %128 : vector<1x384xf32>
    %130 = vector.extract_strided_slice %129 {offsets = [0, 0], sizes = [1, 128], strides = [1, 1]} : vector<1x384xf32> to vector<1x128xf32>
    %131 = vector.extract_strided_slice %129 {offsets = [0, 128], sizes = [1, 128], strides = [1, 1]} : vector<1x384xf32> to vector<1x128xf32>
    %132 = vector.extract_strided_slice %129 {offsets = [0, 256], sizes = [1, 128], strides = [1, 1]} : vector<1x384xf32> to vector<1x128xf32>
    %133 = vector.extract_strided_slice %123 {offsets = [0, 384], sizes = [1, 128], strides = [1, 1]} : vector<1x512xf32> to vector<1x128xf32>
    %134 = math.tanh %133 : vector<1x128xf32>
    %135 = arith.mulf %131, %96 : vector<1x128xf32>
    %136 = arith.mulf %130, %134 : vector<1x128xf32>
    %137 = arith.addf %135, %136 : vector<1x128xf32>
    %138 = math.tanh %137 : vector<1x128xf32>
    %139 = arith.mulf %132, %138 : vector<1x128xf32>
    %c2_38 = arith.constant 2 : index
    %c0_39 = arith.constant 0 : index
    %140 = vector.load %arg9[%c2_38, %c0_39] : memref<8x512xf32, #tpu.memory_space<vmem>>, vector<1x512xf32>
    %c0_40 = arith.constant 0 : index
    %c0_41 = arith.constant 0 : index
    %141 = vector.load %arg3[%c0_40, %c0_41] : memref<128x512xf32, #tpu.memory_space<vmem>>, vector<128x512xf32>
    %cst_42 = arith.constant dense<0.000000e+00> : vector<1x512xf32>
    %142 = tpu.matmul %118, %141, %cst_42 {dimension_numbers = #tpu.dot_dimension_numbers<[1], [0], [0], [1], [0, 0, 1, 1], [], []>} : vector<1x128xf32>, vector<128x512xf32>, vector<1x512xf32> -> vector<1x512xf32>
    %143 = arith.addf %140, %142 : vector<1x512xf32>
    %144 = vector.extract_strided_slice %143 {offsets = [0, 0], sizes = [1, 384], strides = [1, 1]} : vector<1x512xf32> to vector<1x384xf32>
    %145 = arith.negf %144 : vector<1x384xf32>
    %146 = math.exp %145 : vector<1x384xf32>
    %cst_43 = arith.constant 1.000000e+00 : f32
    %147 = vector.broadcast %cst_43 : f32 to vector<1x384xf32>
    %148 = arith.addf %147, %146 : vector<1x384xf32>
    %149 = arith.divf %147, %148 : vector<1x384xf32>
    %150 = vector.extract_strided_slice %149 {offsets = [0, 0], sizes = [1, 128], strides = [1, 1]} : vector<1x384xf32> to vector<1x128xf32>
    %151 = vector.extract_strided_slice %149 {offsets = [0, 128], sizes = [1, 128], strides = [1, 1]} : vector<1x384xf32> to vector<1x128xf32>
    %152 = vector.extract_strided_slice %149 {offsets = [0, 256], sizes = [1, 128], strides = [1, 1]} : vector<1x384xf32> to vector<1x128xf32>
    %153 = vector.extract_strided_slice %143 {offsets = [0, 384], sizes = [1, 128], strides = [1, 1]} : vector<1x512xf32> to vector<1x128xf32>
    %154 = math.tanh %153 : vector<1x128xf32>
    %155 = arith.mulf %151, %116 : vector<1x128xf32>
    %156 = arith.mulf %150, %154 : vector<1x128xf32>
    %157 = arith.addf %155, %156 : vector<1x128xf32>
    %158 = math.tanh %157 : vector<1x128xf32>
    %159 = arith.mulf %152, %158 : vector<1x128xf32>
    %160 = tpu.concatenate %159, %139 in 1 : vector<1x128xf32>, vector<1x128xf32> -> vector<1x256xf32>
    %c0_44 = arith.constant 0 : index
    %c0_45 = arith.constant 0 : index
    %161 = vector.load %arg5[%c0_44, %c0_45] : memref<256x512xf32, #tpu.memory_space<vmem>>, vector<256x512xf32>
    %cst_46 = arith.constant dense<0.000000e+00> : vector<1x512xf32>
    %162 = tpu.matmul %160, %161, %cst_46 {dimension_numbers = #tpu.dot_dimension_numbers<[1], [0], [0], [1], [0, 0, 1, 1], [], []>} : vector<1x256xf32>, vector<256x512xf32>, vector<1x512xf32> -> vector<1x512xf32>
    %c0_47 = arith.constant 0 : index
    %c0_48 = arith.constant 0 : index
    %163 = vector.load %arg6[%c0_47, %c0_48] : memref<1x512xf32, #tpu.memory_space<vmem>>, vector<1x512xf32>
    %164 = arith.addf %162, %163 : vector<1x512xf32>
    %165 = vector.extract_strided_slice %164 {offsets = [0, 0], sizes = [1, 384], strides = [1, 1]} : vector<1x512xf32> to vector<1x384xf32>
    %166 = arith.negf %165 : vector<1x384xf32>
    %167 = math.exp %166 : vector<1x384xf32>
    %cst_49 = arith.constant 1.000000e+00 : f32
    %168 = vector.broadcast %cst_49 : f32 to vector<1x384xf32>
    %169 = arith.addf %168, %167 : vector<1x384xf32>
    %170 = arith.divf %168, %169 : vector<1x384xf32>
    %171 = vector.extract_strided_slice %170 {offsets = [0, 0], sizes = [1, 128], strides = [1, 1]} : vector<1x384xf32> to vector<1x128xf32>
    %172 = vector.extract_strided_slice %170 {offsets = [0, 128], sizes = [1, 128], strides = [1, 1]} : vector<1x384xf32> to vector<1x128xf32>
    %173 = vector.extract_strided_slice %170 {offsets = [0, 256], sizes = [1, 128], strides = [1, 1]} : vector<1x384xf32> to vector<1x128xf32>
    %174 = vector.extract_strided_slice %164 {offsets = [0, 384], sizes = [1, 128], strides = [1, 1]} : vector<1x512xf32> to vector<1x128xf32>
    %175 = math.tanh %174 : vector<1x128xf32>
    %176 = arith.mulf %172, %137 : vector<1x128xf32>
    %177 = arith.mulf %171, %175 : vector<1x128xf32>
    %178 = arith.addf %176, %177 : vector<1x128xf32>
    %179 = math.tanh %178 : vector<1x128xf32>
    %180 = arith.mulf %173, %179 : vector<1x128xf32>
    %c3_50 = arith.constant 3 : index
    %c0_51 = arith.constant 0 : index
    %181 = vector.load %arg9[%c3_50, %c0_51] : memref<8x512xf32, #tpu.memory_space<vmem>>, vector<1x512xf32>
    %c0_52 = arith.constant 0 : index
    %c0_53 = arith.constant 0 : index
    %182 = vector.load %arg3[%c0_52, %c0_53] : memref<128x512xf32, #tpu.memory_space<vmem>>, vector<128x512xf32>
    %cst_54 = arith.constant dense<0.000000e+00> : vector<1x512xf32>
    %183 = tpu.matmul %159, %182, %cst_54 {dimension_numbers = #tpu.dot_dimension_numbers<[1], [0], [0], [1], [0, 0, 1, 1], [], []>} : vector<1x128xf32>, vector<128x512xf32>, vector<1x512xf32> -> vector<1x512xf32>
    %184 = arith.addf %181, %183 : vector<1x512xf32>
    %185 = vector.extract_strided_slice %184 {offsets = [0, 0], sizes = [1, 384], strides = [1, 1]} : vector<1x512xf32> to vector<1x384xf32>
    %186 = arith.negf %185 : vector<1x384xf32>
    %187 = math.exp %186 : vector<1x384xf32>
    %cst_55 = arith.constant 1.000000e+00 : f32
    %188 = vector.broadcast %cst_55 : f32 to vector<1x384xf32>
    %189 = arith.addf %188, %187 : vector<1x384xf32>
    %190 = arith.divf %188, %189 : vector<1x384xf32>
    %191 = vector.extract_strided_slice %190 {offsets = [0, 0], sizes = [1, 128], strides = [1, 1]} : vector<1x384xf32> to vector<1x128xf32>
    %192 = vector.extract_strided_slice %190 {offsets = [0, 128], sizes = [1, 128], strides = [1, 1]} : vector<1x384xf32> to vector<1x128xf32>
    %193 = vector.extract_strided_slice %190 {offsets = [0, 256], sizes = [1, 128], strides = [1, 1]} : vector<1x384xf32> to vector<1x128xf32>
    %194 = vector.extract_strided_slice %184 {offsets = [0, 384], sizes = [1, 128], strides = [1, 1]} : vector<1x512xf32> to vector<1x128xf32>
    %195 = math.tanh %194 : vector<1x128xf32>
    %196 = arith.mulf %192, %157 : vector<1x128xf32>
    %197 = arith.mulf %191, %195 : vector<1x128xf32>
    %198 = arith.addf %196, %197 : vector<1x128xf32>
    %199 = math.tanh %198 : vector<1x128xf32>
    %200 = arith.mulf %193, %199 : vector<1x128xf32>
    %201 = tpu.concatenate %200, %180 in 1 : vector<1x128xf32>, vector<1x128xf32> -> vector<1x256xf32>
    %c0_56 = arith.constant 0 : index
    %c0_57 = arith.constant 0 : index
    %202 = vector.load %arg5[%c0_56, %c0_57] : memref<256x512xf32, #tpu.memory_space<vmem>>, vector<256x512xf32>
    %cst_58 = arith.constant dense<0.000000e+00> : vector<1x512xf32>
    %203 = tpu.matmul %201, %202, %cst_58 {dimension_numbers = #tpu.dot_dimension_numbers<[1], [0], [0], [1], [0, 0, 1, 1], [], []>} : vector<1x256xf32>, vector<256x512xf32>, vector<1x512xf32> -> vector<1x512xf32>
    %c0_59 = arith.constant 0 : index
    %c0_60 = arith.constant 0 : index
    %204 = vector.load %arg6[%c0_59, %c0_60] : memref<1x512xf32, #tpu.memory_space<vmem>>, vector<1x512xf32>
    %205 = arith.addf %203, %204 : vector<1x512xf32>
    %206 = vector.extract_strided_slice %205 {offsets = [0, 0], sizes = [1, 384], strides = [1, 1]} : vector<1x512xf32> to vector<1x384xf32>
    %207 = arith.negf %206 : vector<1x384xf32>
    %208 = math.exp %207 : vector<1x384xf32>
    %cst_61 = arith.constant 1.000000e+00 : f32
    %209 = vector.broadcast %cst_61 : f32 to vector<1x384xf32>
    %210 = arith.addf %209, %208 : vector<1x384xf32>
    %211 = arith.divf %209, %210 : vector<1x384xf32>
    %212 = vector.extract_strided_slice %211 {offsets = [0, 0], sizes = [1, 128], strides = [1, 1]} : vector<1x384xf32> to vector<1x128xf32>
    %213 = vector.extract_strided_slice %211 {offsets = [0, 128], sizes = [1, 128], strides = [1, 1]} : vector<1x384xf32> to vector<1x128xf32>
    %214 = vector.extract_strided_slice %211 {offsets = [0, 256], sizes = [1, 128], strides = [1, 1]} : vector<1x384xf32> to vector<1x128xf32>
    %215 = vector.extract_strided_slice %205 {offsets = [0, 384], sizes = [1, 128], strides = [1, 1]} : vector<1x512xf32> to vector<1x128xf32>
    %216 = math.tanh %215 : vector<1x128xf32>
    %217 = arith.mulf %213, %178 : vector<1x128xf32>
    %218 = arith.mulf %212, %216 : vector<1x128xf32>
    %219 = arith.addf %217, %218 : vector<1x128xf32>
    %220 = math.tanh %219 : vector<1x128xf32>
    %221 = arith.mulf %214, %220 : vector<1x128xf32>
    %c4_62 = arith.constant 4 : index
    %c0_63 = arith.constant 0 : index
    %222 = vector.load %arg9[%c4_62, %c0_63] : memref<8x512xf32, #tpu.memory_space<vmem>>, vector<1x512xf32>
    %c0_64 = arith.constant 0 : index
    %c0_65 = arith.constant 0 : index
    %223 = vector.load %arg3[%c0_64, %c0_65] : memref<128x512xf32, #tpu.memory_space<vmem>>, vector<128x512xf32>
    %cst_66 = arith.constant dense<0.000000e+00> : vector<1x512xf32>
    %224 = tpu.matmul %200, %223, %cst_66 {dimension_numbers = #tpu.dot_dimension_numbers<[1], [0], [0], [1], [0, 0, 1, 1], [], []>} : vector<1x128xf32>, vector<128x512xf32>, vector<1x512xf32> -> vector<1x512xf32>
    %225 = arith.addf %222, %224 : vector<1x512xf32>
    %226 = vector.extract_strided_slice %225 {offsets = [0, 0], sizes = [1, 384], strides = [1, 1]} : vector<1x512xf32> to vector<1x384xf32>
    %227 = arith.negf %226 : vector<1x384xf32>
    %228 = math.exp %227 : vector<1x384xf32>
    %cst_67 = arith.constant 1.000000e+00 : f32
    %229 = vector.broadcast %cst_67 : f32 to vector<1x384xf32>
    %230 = arith.addf %229, %228 : vector<1x384xf32>
    %231 = arith.divf %229, %230 : vector<1x384xf32>
    %232 = vector.extract_strided_slice %231 {offsets = [0, 0], sizes = [1, 128], strides = [1, 1]} : vector<1x384xf32> to vector<1x128xf32>
    %233 = vector.extract_strided_slice %231 {offsets = [0, 128], sizes = [1, 128], strides = [1, 1]} : vector<1x384xf32> to vector<1x128xf32>
    %234 = vector.extract_strided_slice %231 {offsets = [0, 256], sizes = [1, 128], strides = [1, 1]} : vector<1x384xf32> to vector<1x128xf32>
    %235 = vector.extract_strided_slice %225 {offsets = [0, 384], sizes = [1, 128], strides = [1, 1]} : vector<1x512xf32> to vector<1x128xf32>
    %236 = math.tanh %235 : vector<1x128xf32>
    %237 = arith.mulf %233, %198 : vector<1x128xf32>
    %238 = arith.mulf %232, %236 : vector<1x128xf32>
    %239 = arith.addf %237, %238 : vector<1x128xf32>
    %240 = math.tanh %239 : vector<1x128xf32>
    %241 = arith.mulf %234, %240 : vector<1x128xf32>
    %242 = tpu.concatenate %241, %221 in 1 : vector<1x128xf32>, vector<1x128xf32> -> vector<1x256xf32>
    %c0_68 = arith.constant 0 : index
    %c0_69 = arith.constant 0 : index
    %243 = vector.load %arg5[%c0_68, %c0_69] : memref<256x512xf32, #tpu.memory_space<vmem>>, vector<256x512xf32>
    %cst_70 = arith.constant dense<0.000000e+00> : vector<1x512xf32>
    %244 = tpu.matmul %242, %243, %cst_70 {dimension_numbers = #tpu.dot_dimension_numbers<[1], [0], [0], [1], [0, 0, 1, 1], [], []>} : vector<1x256xf32>, vector<256x512xf32>, vector<1x512xf32> -> vector<1x512xf32>
    %c0_71 = arith.constant 0 : index
    %c0_72 = arith.constant 0 : index
    %245 = vector.load %arg6[%c0_71, %c0_72] : memref<1x512xf32, #tpu.memory_space<vmem>>, vector<1x512xf32>
    %246 = arith.addf %244, %245 : vector<1x512xf32>
    %247 = vector.extract_strided_slice %246 {offsets = [0, 0], sizes = [1, 384], strides = [1, 1]} : vector<1x512xf32> to vector<1x384xf32>
    %248 = arith.negf %247 : vector<1x384xf32>
    %249 = math.exp %248 : vector<1x384xf32>
    %cst_73 = arith.constant 1.000000e+00 : f32
    %250 = vector.broadcast %cst_73 : f32 to vector<1x384xf32>
    %251 = arith.addf %250, %249 : vector<1x384xf32>
    %252 = arith.divf %250, %251 : vector<1x384xf32>
    %253 = vector.extract_strided_slice %252 {offsets = [0, 0], sizes = [1, 128], strides = [1, 1]} : vector<1x384xf32> to vector<1x128xf32>
    %254 = vector.extract_strided_slice %252 {offsets = [0, 128], sizes = [1, 128], strides = [1, 1]} : vector<1x384xf32> to vector<1x128xf32>
    %255 = vector.extract_strided_slice %252 {offsets = [0, 256], sizes = [1, 128], strides = [1, 1]} : vector<1x384xf32> to vector<1x128xf32>
    %256 = vector.extract_strided_slice %246 {offsets = [0, 384], sizes = [1, 128], strides = [1, 1]} : vector<1x512xf32> to vector<1x128xf32>
    %257 = math.tanh %256 : vector<1x128xf32>
    %258 = arith.mulf %254, %219 : vector<1x128xf32>
    %259 = arith.mulf %253, %257 : vector<1x128xf32>
    %260 = arith.addf %258, %259 : vector<1x128xf32>
    %261 = math.tanh %260 : vector<1x128xf32>
    %262 = arith.mulf %255, %261 : vector<1x128xf32>
    %c5_74 = arith.constant 5 : index
    %c0_75 = arith.constant 0 : index
    %263 = vector.load %arg9[%c5_74, %c0_75] : memref<8x512xf32, #tpu.memory_space<vmem>>, vector<1x512xf32>
    %c0_76 = arith.constant 0 : index
    %c0_77 = arith.constant 0 : index
    %264 = vector.load %arg3[%c0_76, %c0_77] : memref<128x512xf32, #tpu.memory_space<vmem>>, vector<128x512xf32>
    %cst_78 = arith.constant dense<0.000000e+00> : vector<1x512xf32>
    %265 = tpu.matmul %241, %264, %cst_78 {dimension_numbers = #tpu.dot_dimension_numbers<[1], [0], [0], [1], [0, 0, 1, 1], [], []>} : vector<1x128xf32>, vector<128x512xf32>, vector<1x512xf32> -> vector<1x512xf32>
    %266 = arith.addf %263, %265 : vector<1x512xf32>
    %267 = vector.extract_strided_slice %266 {offsets = [0, 0], sizes = [1, 384], strides = [1, 1]} : vector<1x512xf32> to vector<1x384xf32>
    %268 = arith.negf %267 : vector<1x384xf32>
    %269 = math.exp %268 : vector<1x384xf32>
    %cst_79 = arith.constant 1.000000e+00 : f32
    %270 = vector.broadcast %cst_79 : f32 to vector<1x384xf32>
    %271 = arith.addf %270, %269 : vector<1x384xf32>
    %272 = arith.divf %270, %271 : vector<1x384xf32>
    %273 = vector.extract_strided_slice %272 {offsets = [0, 0], sizes = [1, 128], strides = [1, 1]} : vector<1x384xf32> to vector<1x128xf32>
    %274 = vector.extract_strided_slice %272 {offsets = [0, 128], sizes = [1, 128], strides = [1, 1]} : vector<1x384xf32> to vector<1x128xf32>
    %275 = vector.extract_strided_slice %272 {offsets = [0, 256], sizes = [1, 128], strides = [1, 1]} : vector<1x384xf32> to vector<1x128xf32>
    %276 = vector.extract_strided_slice %266 {offsets = [0, 384], sizes = [1, 128], strides = [1, 1]} : vector<1x512xf32> to vector<1x128xf32>
    %277 = math.tanh %276 : vector<1x128xf32>
    %278 = arith.mulf %274, %239 : vector<1x128xf32>
    %279 = arith.mulf %273, %277 : vector<1x128xf32>
    %280 = arith.addf %278, %279 : vector<1x128xf32>
    %281 = math.tanh %280 : vector<1x128xf32>
    %282 = arith.mulf %275, %281 : vector<1x128xf32>
    %283 = tpu.concatenate %282, %262 in 1 : vector<1x128xf32>, vector<1x128xf32> -> vector<1x256xf32>
    %c0_80 = arith.constant 0 : index
    %c0_81 = arith.constant 0 : index
    %284 = vector.load %arg5[%c0_80, %c0_81] : memref<256x512xf32, #tpu.memory_space<vmem>>, vector<256x512xf32>
    %cst_82 = arith.constant dense<0.000000e+00> : vector<1x512xf32>
    %285 = tpu.matmul %283, %284, %cst_82 {dimension_numbers = #tpu.dot_dimension_numbers<[1], [0], [0], [1], [0, 0, 1, 1], [], []>} : vector<1x256xf32>, vector<256x512xf32>, vector<1x512xf32> -> vector<1x512xf32>
    %c0_83 = arith.constant 0 : index
    %c0_84 = arith.constant 0 : index
    %286 = vector.load %arg6[%c0_83, %c0_84] : memref<1x512xf32, #tpu.memory_space<vmem>>, vector<1x512xf32>
    %287 = arith.addf %285, %286 : vector<1x512xf32>
    %288 = vector.extract_strided_slice %287 {offsets = [0, 0], sizes = [1, 384], strides = [1, 1]} : vector<1x512xf32> to vector<1x384xf32>
    %289 = arith.negf %288 : vector<1x384xf32>
    %290 = math.exp %289 : vector<1x384xf32>
    %cst_85 = arith.constant 1.000000e+00 : f32
    %291 = vector.broadcast %cst_85 : f32 to vector<1x384xf32>
    %292 = arith.addf %291, %290 : vector<1x384xf32>
    %293 = arith.divf %291, %292 : vector<1x384xf32>
    %294 = vector.extract_strided_slice %293 {offsets = [0, 0], sizes = [1, 128], strides = [1, 1]} : vector<1x384xf32> to vector<1x128xf32>
    %295 = vector.extract_strided_slice %293 {offsets = [0, 128], sizes = [1, 128], strides = [1, 1]} : vector<1x384xf32> to vector<1x128xf32>
    %296 = vector.extract_strided_slice %293 {offsets = [0, 256], sizes = [1, 128], strides = [1, 1]} : vector<1x384xf32> to vector<1x128xf32>
    %297 = vector.extract_strided_slice %287 {offsets = [0, 384], sizes = [1, 128], strides = [1, 1]} : vector<1x512xf32> to vector<1x128xf32>
    %298 = math.tanh %297 : vector<1x128xf32>
    %299 = arith.mulf %295, %260 : vector<1x128xf32>
    %300 = arith.mulf %294, %298 : vector<1x128xf32>
    %301 = arith.addf %299, %300 : vector<1x128xf32>
    %302 = math.tanh %301 : vector<1x128xf32>
    %303 = arith.mulf %296, %302 : vector<1x128xf32>
    %c6_86 = arith.constant 6 : index
    %c0_87 = arith.constant 0 : index
    %304 = vector.load %arg9[%c6_86, %c0_87] : memref<8x512xf32, #tpu.memory_space<vmem>>, vector<1x512xf32>
    %c0_88 = arith.constant 0 : index
    %c0_89 = arith.constant 0 : index
    %305 = vector.load %arg3[%c0_88, %c0_89] : memref<128x512xf32, #tpu.memory_space<vmem>>, vector<128x512xf32>
    %cst_90 = arith.constant dense<0.000000e+00> : vector<1x512xf32>
    %306 = tpu.matmul %282, %305, %cst_90 {dimension_numbers = #tpu.dot_dimension_numbers<[1], [0], [0], [1], [0, 0, 1, 1], [], []>} : vector<1x128xf32>, vector<128x512xf32>, vector<1x512xf32> -> vector<1x512xf32>
    %307 = arith.addf %304, %306 : vector<1x512xf32>
    %308 = vector.extract_strided_slice %307 {offsets = [0, 0], sizes = [1, 384], strides = [1, 1]} : vector<1x512xf32> to vector<1x384xf32>
    %309 = arith.negf %308 : vector<1x384xf32>
    %310 = math.exp %309 : vector<1x384xf32>
    %cst_91 = arith.constant 1.000000e+00 : f32
    %311 = vector.broadcast %cst_91 : f32 to vector<1x384xf32>
    %312 = arith.addf %311, %310 : vector<1x384xf32>
    %313 = arith.divf %311, %312 : vector<1x384xf32>
    %314 = vector.extract_strided_slice %313 {offsets = [0, 0], sizes = [1, 128], strides = [1, 1]} : vector<1x384xf32> to vector<1x128xf32>
    %315 = vector.extract_strided_slice %313 {offsets = [0, 128], sizes = [1, 128], strides = [1, 1]} : vector<1x384xf32> to vector<1x128xf32>
    %316 = vector.extract_strided_slice %313 {offsets = [0, 256], sizes = [1, 128], strides = [1, 1]} : vector<1x384xf32> to vector<1x128xf32>
    %317 = vector.extract_strided_slice %307 {offsets = [0, 384], sizes = [1, 128], strides = [1, 1]} : vector<1x512xf32> to vector<1x128xf32>
    %318 = math.tanh %317 : vector<1x128xf32>
    %319 = arith.mulf %315, %280 : vector<1x128xf32>
    %320 = arith.mulf %314, %318 : vector<1x128xf32>
    %321 = arith.addf %319, %320 : vector<1x128xf32>
    %322 = math.tanh %321 : vector<1x128xf32>
    %323 = arith.mulf %316, %322 : vector<1x128xf32>
    %324 = tpu.concatenate %323, %303 in 1 : vector<1x128xf32>, vector<1x128xf32> -> vector<1x256xf32>
    %c0_92 = arith.constant 0 : index
    %c0_93 = arith.constant 0 : index
    %325 = vector.load %arg5[%c0_92, %c0_93] : memref<256x512xf32, #tpu.memory_space<vmem>>, vector<256x512xf32>
    %cst_94 = arith.constant dense<0.000000e+00> : vector<1x512xf32>
    %326 = tpu.matmul %324, %325, %cst_94 {dimension_numbers = #tpu.dot_dimension_numbers<[1], [0], [0], [1], [0, 0, 1, 1], [], []>} : vector<1x256xf32>, vector<256x512xf32>, vector<1x512xf32> -> vector<1x512xf32>
    %c0_95 = arith.constant 0 : index
    %c0_96 = arith.constant 0 : index
    %327 = vector.load %arg6[%c0_95, %c0_96] : memref<1x512xf32, #tpu.memory_space<vmem>>, vector<1x512xf32>
    %328 = arith.addf %326, %327 : vector<1x512xf32>
    %329 = vector.extract_strided_slice %328 {offsets = [0, 0], sizes = [1, 384], strides = [1, 1]} : vector<1x512xf32> to vector<1x384xf32>
    %330 = arith.negf %329 : vector<1x384xf32>
    %331 = math.exp %330 : vector<1x384xf32>
    %cst_97 = arith.constant 1.000000e+00 : f32
    %332 = vector.broadcast %cst_97 : f32 to vector<1x384xf32>
    %333 = arith.addf %332, %331 : vector<1x384xf32>
    %334 = arith.divf %332, %333 : vector<1x384xf32>
    %335 = vector.extract_strided_slice %334 {offsets = [0, 0], sizes = [1, 128], strides = [1, 1]} : vector<1x384xf32> to vector<1x128xf32>
    %336 = vector.extract_strided_slice %334 {offsets = [0, 128], sizes = [1, 128], strides = [1, 1]} : vector<1x384xf32> to vector<1x128xf32>
    %337 = vector.extract_strided_slice %334 {offsets = [0, 256], sizes = [1, 128], strides = [1, 1]} : vector<1x384xf32> to vector<1x128xf32>
    %338 = vector.extract_strided_slice %328 {offsets = [0, 384], sizes = [1, 128], strides = [1, 1]} : vector<1x512xf32> to vector<1x128xf32>
    %339 = math.tanh %338 : vector<1x128xf32>
    %340 = arith.mulf %336, %301 : vector<1x128xf32>
    %341 = arith.mulf %335, %339 : vector<1x128xf32>
    %342 = arith.addf %340, %341 : vector<1x128xf32>
    %343 = math.tanh %342 : vector<1x128xf32>
    %344 = arith.mulf %337, %343 : vector<1x128xf32>
    %c7_98 = arith.constant 7 : index
    %c0_99 = arith.constant 0 : index
    %345 = vector.load %arg9[%c7_98, %c0_99] : memref<8x512xf32, #tpu.memory_space<vmem>>, vector<1x512xf32>
    %c0_100 = arith.constant 0 : index
    %c0_101 = arith.constant 0 : index
    %346 = vector.load %arg3[%c0_100, %c0_101] : memref<128x512xf32, #tpu.memory_space<vmem>>, vector<128x512xf32>
    %cst_102 = arith.constant dense<0.000000e+00> : vector<1x512xf32>
    %347 = tpu.matmul %323, %346, %cst_102 {dimension_numbers = #tpu.dot_dimension_numbers<[1], [0], [0], [1], [0, 0, 1, 1], [], []>} : vector<1x128xf32>, vector<128x512xf32>, vector<1x512xf32> -> vector<1x512xf32>
    %348 = arith.addf %345, %347 : vector<1x512xf32>
    %349 = vector.extract_strided_slice %348 {offsets = [0, 0], sizes = [1, 384], strides = [1, 1]} : vector<1x512xf32> to vector<1x384xf32>
    %350 = arith.negf %349 : vector<1x384xf32>
    %351 = math.exp %350 : vector<1x384xf32>
    %cst_103 = arith.constant 1.000000e+00 : f32
    %352 = vector.broadcast %cst_103 : f32 to vector<1x384xf32>
    %353 = arith.addf %352, %351 : vector<1x384xf32>
    %354 = arith.divf %352, %353 : vector<1x384xf32>
    %355 = vector.extract_strided_slice %354 {offsets = [0, 0], sizes = [1, 128], strides = [1, 1]} : vector<1x384xf32> to vector<1x128xf32>
    %356 = vector.extract_strided_slice %354 {offsets = [0, 128], sizes = [1, 128], strides = [1, 1]} : vector<1x384xf32> to vector<1x128xf32>
    %357 = vector.extract_strided_slice %354 {offsets = [0, 256], sizes = [1, 128], strides = [1, 1]} : vector<1x384xf32> to vector<1x128xf32>
    %358 = vector.extract_strided_slice %348 {offsets = [0, 384], sizes = [1, 128], strides = [1, 1]} : vector<1x512xf32> to vector<1x128xf32>
    %359 = math.tanh %358 : vector<1x128xf32>
    %360 = arith.mulf %356, %321 : vector<1x128xf32>
    %361 = arith.mulf %355, %359 : vector<1x128xf32>
    %362 = arith.addf %360, %361 : vector<1x128xf32>
    %363 = math.tanh %362 : vector<1x128xf32>
    %364 = arith.mulf %357, %363 : vector<1x128xf32>
    %365 = tpu.concatenate %364, %344 in 1 : vector<1x128xf32>, vector<1x128xf32> -> vector<1x256xf32>
    %c0_104 = arith.constant 0 : index
    %c0_105 = arith.constant 0 : index
    %366 = vector.load %arg5[%c0_104, %c0_105] : memref<256x512xf32, #tpu.memory_space<vmem>>, vector<256x512xf32>
    %cst_106 = arith.constant dense<0.000000e+00> : vector<1x512xf32>
    %367 = tpu.matmul %365, %366, %cst_106 {dimension_numbers = #tpu.dot_dimension_numbers<[1], [0], [0], [1], [0, 0, 1, 1], [], []>} : vector<1x256xf32>, vector<256x512xf32>, vector<1x512xf32> -> vector<1x512xf32>
    %c0_107 = arith.constant 0 : index
    %c0_108 = arith.constant 0 : index
    %368 = vector.load %arg6[%c0_107, %c0_108] : memref<1x512xf32, #tpu.memory_space<vmem>>, vector<1x512xf32>
    %369 = arith.addf %367, %368 : vector<1x512xf32>
    %370 = vector.extract_strided_slice %369 {offsets = [0, 0], sizes = [1, 384], strides = [1, 1]} : vector<1x512xf32> to vector<1x384xf32>
    %371 = arith.negf %370 : vector<1x384xf32>
    %372 = math.exp %371 : vector<1x384xf32>
    %cst_109 = arith.constant 1.000000e+00 : f32
    %373 = vector.broadcast %cst_109 : f32 to vector<1x384xf32>
    %374 = arith.addf %373, %372 : vector<1x384xf32>
    %375 = arith.divf %373, %374 : vector<1x384xf32>
    %376 = vector.extract_strided_slice %375 {offsets = [0, 0], sizes = [1, 128], strides = [1, 1]} : vector<1x384xf32> to vector<1x128xf32>
    %377 = vector.extract_strided_slice %375 {offsets = [0, 128], sizes = [1, 128], strides = [1, 1]} : vector<1x384xf32> to vector<1x128xf32>
    %378 = vector.extract_strided_slice %375 {offsets = [0, 256], sizes = [1, 128], strides = [1, 1]} : vector<1x384xf32> to vector<1x128xf32>
    %379 = vector.extract_strided_slice %369 {offsets = [0, 384], sizes = [1, 128], strides = [1, 1]} : vector<1x512xf32> to vector<1x128xf32>
    %380 = math.tanh %379 : vector<1x128xf32>
    %381 = arith.mulf %377, %342 : vector<1x128xf32>
    %382 = arith.mulf %376, %380 : vector<1x128xf32>
    %383 = arith.addf %381, %382 : vector<1x128xf32>
    %384 = math.tanh %383 : vector<1x128xf32>
    %385 = arith.mulf %378, %384 : vector<1x128xf32>
    %c0_110 = arith.constant 0 : index
    %c0_111 = arith.constant 0 : index
    %386 = vector.load %arg7[%c0_110, %c0_111] : memref<2x128xf32, #tpu.memory_space<vmem>>, vector<1x128xf32>
    tpu.vector_store %arg7[%c0_110, %c0_111], %364 {strides = array<i32>} : memref<2x128xf32, #tpu.memory_space<vmem>>, vector<1x128xf32>,
    %c0_112 = arith.constant 0 : index
    %c0_113 = arith.constant 0 : index
    %387 = vector.load %arg8[%c0_112, %c0_113] : memref<2x128xf32, #tpu.memory_space<vmem>>, vector<1x128xf32>
    tpu.vector_store %arg8[%c0_112, %c0_113], %362 {strides = array<i32>} : memref<2x128xf32, #tpu.memory_space<vmem>>, vector<1x128xf32>,
    %c1_114 = arith.constant 1 : index
    %c0_115 = arith.constant 0 : index
    %388 = vector.load %arg7[%c1_114, %c0_115] : memref<2x128xf32, #tpu.memory_space<vmem>>, vector<1x128xf32>
    tpu.vector_store %arg7[%c1_114, %c0_115], %385 {strides = array<i32>} : memref<2x128xf32, #tpu.memory_space<vmem>>, vector<1x128xf32>,
    %c1_116 = arith.constant 1 : index
    %c0_117 = arith.constant 0 : index
    %389 = vector.load %arg8[%c1_116, %c0_117] : memref<2x128xf32, #tpu.memory_space<vmem>>, vector<1x128xf32>
    tpu.vector_store %arg8[%c1_116, %c0_117], %383 {strides = array<i32>} : memref<2x128xf32, #tpu.memory_space<vmem>>, vector<1x128xf32>,
    return
  }
}

</mosaic_0001>

<llo_original>
// kernel: encoder_forward.1
$region0: #{encoder_forward.1}
  #allocation0 [shape = 'u32[]', space=smem, size = 0x4, offset = 0x4, fixed_abs, tag = 'smem constant byte address 0x4 - core index']
  #allocation1 [shape = 'u32[144,128]{1,0:T(1,128)}', space=vmem, size = 0x12000, scoped, tag = 'internal scratch']
  #allocation2 [shape = 'f32[8,512]{1,0:T(8,128)}', space=vmem, size = 0x4000, scoped, tag = 'scratch operand']
  %s0 = inlined_call_operand.vmem [shape: s32[8], index: 0, kind: input, shape index: {}]
  %s1 = inlined_call_operand.hbm [shape: f32[128,256], index: 1, kind: input, shape index: {}]
  %s2 = inlined_call_operand.hbm [shape: f32[256,512], index: 2, kind: input, shape index: {}]
  %s3 = inlined_call_operand.hbm [shape: f32[128,512], index: 3, kind: input, shape index: {}]
  %s4 = inlined_call_operand.hbm [shape: f32[1,512], index: 4, kind: input, shape index: {}]
  %s5 = inlined_call_operand.hbm [shape: f32[256,512], index: 5, kind: input, shape index: {}]
  %s6 = inlined_call_operand.vmem [shape: f32[1,512], index: 6, kind: input, shape index: {}]
  %s7 = inlined_call_operand.hbm [shape: f32[2,128], index: 7, kind: output, shape index: {0}]
  %s8 = inlined_call_operand.hbm [shape: f32[2,128], index: 8, kind: output, shape index: {1}]
  %9 = xla_tuple %s7, %s8
  %s10 = sld [smem:[#allocation0]]
  $region70: #{encoder_forward.1} parent=0
    _
  %s12 = ssub.s32 1, %s10
  %s13 = scalar_select 0, %s12, %s10
  $region1: #{encoder_forward.1} parent=0
    #allocation3 [shape = 'u8[512]{0}', space=smem, size = 0x200, scoped, tag = 'input window, operand 0, single buffered']
    #allocation4 [shape = 's32[1]{0}', space=sflag, size = 0x4, scoped, tag = 'scoped memory for encoder_forward.1']
    #allocation5 [shape = 's32[1]{0}', space=sflag, size = 0x4, scoped, tag = 'scoped memory for encoder_forward.1']
    #allocation6 [shape = 's32[1]{0}', space=sflag, size = 0x4, scoped, tag = 'scoped memory for encoder_forward.1']
    #allocation7 [shape = 'u8[131072]{0}', space=vmem, size = 0x20000, scoped, tag = 'input window, operand 1, single buffered']
    #allocation8 [shape = 'u8[524288]{0}', space=vmem, size = 0x80000, scoped, tag = 'input window, operand 2, single buffered']
    #allocation9 [shape = 's32[1]{0}', space=sflag, size = 0x4, scoped, tag = 'scoped memory for encoder_forward.1']
    #allocation10 [shape = 'u8[262144]{0}', space=vmem, size = 0x40000, scoped, tag = 'input window, operand 3, single buffered']
    #allocation11 [shape = 'u8[2048]{0}', space=vmem, size = 0x800, scoped, tag = 'input window, operand 4, single buffered']
    #allocation12 [shape = 's32[1]{0}', space=sflag, size = 0x4, scoped, tag = 'scoped memory for encoder_forward.1']
    #allocation13 [shape = 'u8[524288]{0}', space=vmem, size = 0x80000, scoped, tag = 'input window, operand 5, single buffered']
    #allocation14 [shape = 'u8[1024]{0}', space=vmem, size = 0x400, scoped, tag = 'output window, operand 0, single buffered']
    #allocation15 [shape = 'u8[1024]{0}', space=vmem, size = 0x400, scoped, tag = 'output window, operand 1, single buffered']
    #allocation16 [shape = 's32[1]{0}', space=sflag, size = 0x4, scoped, tag = 'scoped memory for encoder_forward.1']
    %14 = vsyncpa [#allocation6], 0
    %15 = vsyncpa [#allocation4], 0
    %16 = vsyncpa [#allocation9], 0
    %17 = vsyncpa [#allocation12], 0
    %18 = vsyncpa [#allocation5], 0
    %19 = vsyncpa [#allocation16], 0
    // Predicated region
    $region2: #{encoder_forward.1} parent=1 // pred_check
      _
    $region3: #{encoder_forward.1} parent=1 // pred_check_branch
      %21 = sbr.rel (0) target = $region5
    $region4: #{encoder_forward.1} parent=1 // pred_region
      %s23 = ssub.s32 16, 16
      %24 = vsyncadd [#allocation6], %s23
      %s26 = sshll.u32 %s0, 4
      %s27 = int_to_ptr.vmem [resolvable:$true] %s26
      %29 = dma.vmem_to_smem %s27, 16, [#allocation3], [#allocation6]
    $region5: #{encoder_forward.1} parent=1 // pred_fallthru
      _
    // Predicated region
    $region6: #{encoder_forward.1} parent=1 // pred_check
      _
    $region7: #{encoder_forward.1} parent=1 // pred_check_branch
      %31 = sbr.rel (0) target = $region9
    $region8: #{encoder_forward.1} parent=1 // pred_region
      %s33 = ssub.s32 4096, 4096
      %34 = vsyncadd [#allocation4], %s33
      %s35 = sshll.u32 [#allocation7], 4
      %s36 = int_to_ptr.vmem [resolvable:$true] %s35
      %41 = dma.hbm_to_vmem [thread:$0]  %s1, 4096, %s36, [#allocation4], 256, 256, 16
    $region9: #{encoder_forward.1} parent=1 // pred_fallthru
      _
    // Predicated region
    $region10: #{encoder_forward.1} parent=1 // pred_check
      _
    $region11: #{encoder_forward.1} parent=1 // pred_check_branch
      %43 = sbr.rel (0) target = $region13
    $region12: #{encoder_forward.1} parent=1 // pred_region
      %s45 = ssub.s32 16384, 16384
      %46 = vsyncadd [#allocation9], %s45
      %s47 = sshll.u32 [#allocation8], 4
      %s48 = int_to_ptr.vmem [resolvable:$true] %s47
      %53 = dma.hbm_to_vmem [thread:$0]  %s2, 16384, %s48, [#allocation9], 512, 512, 32
    $region13: #{encoder_forward.1} parent=1 // pred_fallthru
      _
    // Predicated region
    $region14: #{encoder_forward.1} parent=1 // pred_check
      _
    $region15: #{encoder_forward.1} parent=1 // pred_check_branch
      %55 = sbr.rel (0) target = $region17
    $region16: #{encoder_forward.1} parent=1 // pred_region
      %s57 = ssub.s32 8192, 8192
      %58 = vsyncadd [#allocation9], %s57
      %s59 = sshll.u32 [#allocation10], 4
      %s60 = int_to_ptr.vmem [resolvable:$true] %s59
      %65 = dma.hbm_to_vmem [thread:$0]  %s3, 8192, %s60, [#allocation9], 512, 512, 32
    $region17: #{encoder_forward.1} parent=1 // pred_fallthru
      _
    // Predicated region
    $region18: #{encoder_forward.1} parent=1 // pred_check
      _
    $region19: #{encoder_forward.1} parent=1 // pred_check_branch
      %67 = sbr.rel (0) target = $region21
    $region20: #{encoder_forward.1} parent=1 // pred_region
      %s69 = ssub.s32 64, 64
      %70 = vsyncadd [#allocation12], %s69
      %s72 = sshll.u32 [#allocation11], 4
      %s73 = int_to_ptr.vmem [resolvable:$true] %s72
      %75 = dma.hbm_to_vmem [thread:$0]  %s4, 64, %s73, [#allocation12]
    $region21: #{encoder_forward.1} parent=1 // pred_fallthru
      _
    // Predicated region
    $region22: #{encoder_forward.1} parent=1 // pred_check
      _
    $region23: #{encoder_forward.1} parent=1 // pred_check_branch
      %77 = sbr.rel (0) target = $region25
    $region24: #{encoder_forward.1} parent=1 // pred_region
      %s79 = ssub.s32 16384, 16384
      %80 = vsyncadd [#allocation12], %s79
      %s81 = sshll.u32 [#allocation13], 4
      %s82 = int_to_ptr.vmem [resolvable:$true] %s81
      %87 = dma.hbm_to_vmem [thread:$0]  %s5, 16384, %s82, [#allocation12], 512, 512, 32
    $region25: #{encoder_forward.1} parent=1 // pred_fallthru
      _
    // Predicated region
    $region26: #{encoder_forward.1} parent=1 // pred_check
      _
    $region27: #{encoder_forward.1} parent=1 // pred_check_branch
      %89 = sbr.rel (0) target = $region29
    $region28: #{encoder_forward.1} parent=1 // pred_region
      _
    $region29: #{encoder_forward.1} parent=1 // pred_fallthru
      _
    // Predicated region
    $region30: #{encoder_forward.1} parent=1 // pred_check
      _
    $region31: #{encoder_forward.1} parent=1 // pred_check_branch
      %91 = sbr.rel (0) target = $region33
    $region32: #{encoder_forward.1} parent=1 // pred_region
      %92 = dma.done [#allocation6], 16
    $region33: #{encoder_forward.1} parent=1 // pred_fallthru
      _
    // Predicated region
    $region34: #{encoder_forward.1} parent=1 // pred_check
      _
    $region35: #{encoder_forward.1} parent=1 // pred_check_branch
      %94 = sbr.rel (0) target = $region37
    $region36: #{encoder_forward.1} parent=1 // pred_region
      %95 = dma.done [#allocation4], 4096
    $region37: #{encoder_forward.1} parent=1 // pred_fallthru
      _
    // Predicated region
    $region38: #{encoder_forward.1} parent=1 // pred_check
      _
    $region39: #{encoder_forward.1} parent=1 // pred_check_branch
      %97 = sbr.rel (0) target = $region41
    $region40: #{encoder_forward.1} parent=1 // pred_region
      %98 = dma.done [#allocation9], 16384
    $region41: #{encoder_forward.1} parent=1 // pred_fallthru
      _
    // Predicated region
    $region42: #{encoder_forward.1} parent=1 // pred_check
      _
    $region43: #{encoder_forward.1} parent=1 // pred_check_branch
      %100 = sbr.rel (0) target = $region45
    $region44: #{encoder_forward.1} parent=1 // pred_region
      %101 = dma.done [#allocation9], 8192
    $region45: #{encoder_forward.1} parent=1 // pred_fallthru
      _
    // Predicated region
    $region46: #{encoder_forward.1} parent=1 // pred_check
      _
    $region47: #{encoder_forward.1} parent=1 // pred_check_branch
      %103 = sbr.rel (0) target = $region49
    $region48: #{encoder_forward.1} parent=1 // pred_region
      %104 = dma.done [#allocation12], 64
    $region49: #{encoder_forward.1} parent=1 // pred_fallthru
      _
    // Predicated region
    $region50: #{encoder_forward.1} parent=1 // pred_check
      _
    $region51: #{encoder_forward.1} parent=1 // pred_check_branch
      %106 = sbr.rel (0) target = $region53
    $region52: #{encoder_forward.1} parent=1 // pred_region
      %107 = dma.done [#allocation12], 16384
    $region53: #{encoder_forward.1} parent=1 // pred_fallthru
      _
    %108 = sfence
    %v109 = vlaneseq
    %v110 = vshrl.u32 %v109, 7
    %v111 = vlaneseq
    %v112 = vand.u32 %v111, 127
    %vm113 = vcmp.eq.s32.totalorder %v110, 0
    %s114 = sld [smem:[#allocation3]]
    %v115 = vstv %s114
    %v116 = vsel %vm113, %v115, 0
    %vm117 = vcmp.eq.s32.totalorder %v110, 1
    %s118 = sld [smem:[#allocation3 + $0x1]]
    %v119 = vstv %s118
    %v120 = vsel %vm117, %v119, %v116
    %vm121 = vcmp.eq.s32.totalorder %v110, 2
    %s122 = sld [smem:[#allocation3 + $0x2]]
    %v123 = vstv %s122
    %v124 = vsel %vm121, %v123, %v120
    %vm125 = vcmp.eq.s32.totalorder %v110, 3
    %s126 = sld [smem:[#allocation3 + $0x3]]
    %v127 = vstv %s126
    %v128 = vsel %vm125, %v127, %v124
    %vm129 = vcmp.eq.s32.totalorder %v110, 4
    %s130 = sld [smem:[#allocation3 + $0x4]]
    %v131 = vstv %s130
    %v132 = vsel %vm129, %v131, %v128
    %vm133 = vcmp.eq.s32.totalorder %v110, 5
    %s134 = sld [smem:[#allocation3 + $0x5]]
    %v135 = vstv %s134
    %v136 = vsel %vm133, %v135, %v132
    %vm137 = vcmp.eq.s32.totalorder %v110, 6
    %s138 = sld [smem:[#allocation3 + $0x6]]
    %v139 = vstv %s138
    %v140 = vsel %vm137, %v139, %v136
    %vm141 = vcmp.eq.s32.totalorder %v110, 7
    %s142 = sld [smem:[#allocation3 + $0x7]]
    %v143 = vstv %s142
    %v144 = vsel %vm141, %v143, %v140
    %vm145 = vcmp.eq.s32.totalorder %v112, %v144
    %v146 = vsel %vm145, 1, 0
    %v147 = vcvt.s32.f32 %v146
    %v148 = vld [vmem:[#allocation7] sm:$0xff]
    %v149 = vld [vmem:[#allocation7 + $0x8] sm:$0xff]
    %v150 = vld [vmem:[#allocation7 + $0x10] sm:$0xff]
    %v151 = vld [vmem:[#allocation7 + $0x18] sm:$0xff]
    %v152 = vld [vmem:[#allocation7 + $0x20] sm:$0xff]
    %v153 = vld [vmem:[#allocation7 + $0x28] sm:$0xff]
    %v154 = vld [vmem:[#allocation7 + $0x30] sm:$0xff]
    %v155 = vld [vmem:[#allocation7 + $0x38] sm:$0xff]
    %v156 = vld [vmem:[#allocation7 + $0x40] sm:$0xff]
    %v157 = vld [vmem:[#allocation7 + $0x48] sm:$0xff]
    %v158 = vld [vmem:[#allocation7 + $0x50] sm:$0xff]
    %v159 = vld [vmem:[#allocation7 + $0x58] sm:$0xff]
    %v160 = vld [vmem:[#allocation7 + $0x60] sm:$0xff]
    %v161 = vld [vmem:[#allocation7 + $0x68] sm:$0xff]
    %v162 = vld [vmem:[#allocation7 + $0x70] sm:$0xff]
    %v163 = vld [vmem:[#allocation7 + $0x78] sm:$0xff]
    %v164 = vld [vmem:[#allocation7 + $0x80] sm:$0xff]
    %v165 = vld [vmem:[#allocation7 + $0x88] sm:$0xff]
    %v166 = vld [vmem:[#allocation7 + $0x90] sm:$0xff]
    %v167 = vld [vmem:[#allocation7 + $0x98] sm:$0xff]
    %v168 = vld [vmem:[#allocation7 + $0xa0] sm:$0xff]
    %v169 = vld [vmem:[#allocation7 + $0xa8] sm:$0xff]
    %v170 = vld [vmem:[#allocation7 + $0xb0] sm:$0xff]
    %v171 = vld [vmem:[#allocation7 + $0xb8] sm:$0xff]
    %v172 = vld [vmem:[#allocation7 + $0xc0] sm:$0xff]
    %v173 = vld [vmem:[#allocation7 + $0xc8] sm:$0xff]
    %v174 = vld [vmem:[#allocation7 + $0xd0] sm:$0xff]
    %v175 = vld [vmem:[#allocation7 + $0xd8] sm:$0xff]
    %v176 = vld [vmem:[#allocation7 + $0xe0] sm:$0xff]
    %v177 = vld [vmem:[#allocation7 + $0xe8] sm:$0xff]
    %v178 = vld [vmem:[#allocation7 + $0xf0] sm:$0xff]
    %v179 = vld [vmem:[#allocation7 + $0xf8] sm:$0xff]
    %180 = vmatprep.subr.mxu0 %v179
    %181 = vmatpush1.msra.mxu0 %v178
    %182 = vmatprep.subr.mxu0 %v177
    %183 = vmatpush1.msra.mxu0 %v176
    %184 = vmatprep.subr.mxu0 %v175
    %185 = vmatpush1.msra.mxu0 %v174
    %186 = vmatprep.subr.mxu0 %v173
    %187 = vmatpush1.msra.mxu0 %v172
    %188 = vmatprep.subr.mxu0 %v171
    %189 = vmatpush1.msra.mxu0 %v170
    %190 = vmatprep.subr.mxu0 %v169
    %191 = vmatpush1.msra.mxu0 %v168
    %192 = vmatprep.subr.mxu0 %v167
    %193 = vmatpush1.msra.mxu0 %v166
    %194 = vmatprep.subr.mxu0 %v165
    %195 = vmatpush1.msra.mxu0 %v164
    %196 = vmatprep.subr.mxu0 %v163
    %197 = vmatpush1.msra.mxu0 %v162
    %198 = vmatprep.subr.mxu0 %v161
    %199 = vmatpush1.msra.mxu0 %v160
    %200 = vmatprep.subr.mxu0 %v159
    %201 = vmatpush1.msra.mxu0 %v158
    %202 = vmatprep.subr.mxu0 %v157
    %203 = vmatpush1.msra.mxu0 %v156
    %204 = vmatprep.subr.mxu0 %v155
    %205 = vmatpush1.msra.mxu0 %v154
    %206 = vmatprep.subr.mxu0 %v153
    %207 = vmatpush1.msra.mxu0 %v152
    %208 = vmatprep.subr.mxu0 %v151
    %209 = vmatpush1.msra.mxu0 %v150
    %210 = vmatprep.subr.mxu0 %v149
    %211 = vmatpush1.msra.mxu0 %v148
    %212 = vmatprep.subr.mxu0 0.0
    %213 = vmatpush2.msra.mxu0 0.0
    %214 = vmatprep.subr.mxu0 0.0
    %215 = vmatpush2.msra.mxu0 0.0
    %216 = vmatprep.subr.mxu0 0.0
    %217 = vmatpush2.msra.mxu0 0.0
    %218 = vmatprep.subr.mxu0 0.0
    %219 = vmatpush2.msra.mxu0 0.0
    %220 = vmatprep.subr.mxu0 0.0
    %221 = vmatpush2.msra.mxu0 0.0
    %222 = vmatprep.subr.mxu0 0.0
    %223 = vmatpush2.msra.mxu0 0.0
    %224 = vmatprep.subr.mxu0 0.0
    %225 = vmatpush2.msra.mxu0 0.0
    %226 = vmatprep.subr.mxu0 0.0
    %227 = vmatpush2.msra.mxu0 0.0
    %228 = vmatprep.subr.mxu0 0.0
    %229 = vmatpush2.msra.mxu0 0.0
    %230 = vmatprep.subr.mxu0 0.0
    %231 = vmatpush2.msra.mxu0 0.0
    %232 = vmatprep.subr.mxu0 0.0
    %233 = vmatpush2.msra.mxu0 0.0
    %234 = vmatprep.subr.mxu0 0.0
    %235 = vmatpush2.msra.mxu0 0.0
    %236 = vmatprep.subr.mxu0 0.0
    %237 = vmatpush2.msra.mxu0 0.0
    %238 = vmatprep.subr.mxu0 0.0
    %239 = vmatpush2.msra.mxu0 0.0
    %240 = vmatprep.subr.mxu0 0.0
    %241 = vmatpush2.msra.mxu0 0.0
    %242 = vmatprep.subr.mxu0 0.0
    %243 = vmatpush2.msra.mxu0 0.0
    %244 = vmatprep.mubr.f32.mxu0 0.0
    %245 = vmatmul.mubr.f32.gmra.mxu0 %v147
    %v246 = vpop.f32.mrf.mxu0
    %v247 = vadd.f32 0.0, %v246
    %v248 = vpop.f32.mrf.mxu0
    %v249 = vadd.f32 0.0, %v248
    %250 = vdwg.mxu0
    %v251 = vld [vmem:[#allocation8] sm:$0xff]
    %v252 = vld [vmem:[#allocation8 + $0x8] sm:$0xff]
    %v253 = vld [vmem:[#allocation8 + $0x10] sm:$0xff]
    %v254 = vld [vmem:[#allocation8 + $0x18] sm:$0xff]
    %v255 = vld [vmem:[#allocation8 + $0x20] sm:$0xff]
    %v256 = vld [vmem:[#allocation8 + $0x28] sm:$0xff]
    %v257 = vld [vmem:[#allocation8 + $0x30] sm:$0xff]
    %v258 = vld [vmem:[#allocation8 + $0x38] sm:$0xff]
    %v259 = vld [vmem:[#allocation8 + $0x40] sm:$0xff]
    %v260 = vld [vmem:[#allocation8 + $0x48] sm:$0xff]
    %v261 = vld [vmem:[#allocation8 + $0x50] sm:$0xff]
    %v262 = vld [vmem:[#allocation8 + $0x58] sm:$0xff]
    %v263 = vld [vmem:[#allocation8 + $0x60] sm:$0xff]
    %v264 = vld [vmem:[#allocation8 + $0x68] sm:$0xff]
    %v265 = vld [vmem:[#allocation8 + $0x70] sm:$0xff]
    %v266 = vld [vmem:[#allocation8 + $0x78] sm:$0xff]
    %v267 = vld [vmem:[#allocation8 + $0x80] sm:$0xff]
    %v268 = vld [vmem:[#allocation8 + $0x88] sm:$0xff]
    %v269 = vld [vmem:[#allocation8 + $0x90] sm:$0xff]
    %v270 = vld [vmem:[#allocation8 + $0x98] sm:$0xff]
    %v271 = vld [vmem:[#allocation8 + $0xa0] sm:$0xff]
    %v272 = vld [vmem:[#allocation8 + $0xa8] sm:$0xff]
    %v273 = vld [vmem:[#allocation8 + $0xb0] sm:$0xff]
    %v274 = vld [vmem:[#allocation8 + $0xb8] sm:$0xff]
    %v275 = vld [vmem:[#allocation8 + $0xc0] sm:$0xff]
    %v276 = vld [vmem:[#allocation8 + $0xc8] sm:$0xff]
    %v277 = vld [vmem:[#allocation8 + $0xd0] sm:$0xff]
    %v278 = vld [vmem:[#allocation8 + $0xd8] sm:$0xff]
    %v279 = vld [vmem:[#allocation8 + $0xe0] sm:$0xff]
    %v280 = vld [vmem:[#allocation8 + $0xe8] sm:$0xff]
    %v281 = vld [vmem:[#allocation8 + $0xf0] sm:$0xff]
    %v282 = vld [vmem:[#allocation8 + $0xf8] sm:$0xff]
    %v283 = vld [vmem:[#allocation8 + $0x100] sm:$0xff]
    %v284 = vld [vmem:[#allocation8 + $0x108] sm:$0xff]
    %v285 = vld [vmem:[#allocation8 + $0x110] sm:$0xff]
    %v286 = vld [vmem:[#allocation8 + $0x118] sm:$0xff]
    %v287 = vld [vmem:[#allocation8 + $0x120] sm:$0xff]
    %v288 = vld [vmem:[#allocation8 + $0x128] sm:$0xff]
    %v289 = vld [vmem:[#allocation8 + $0x130] sm:$0xff]
    %v290 = vld [vmem:[#allocation8 + $0x138] sm:$0xff]
    %v291 = vld [vmem:[#allocation8 + $0x140] sm:$0xff]
    %v292 = vld [vmem:[#allocation8 + $0x148] sm:$0xff]
    %v293 = vld [vmem:[#allocation8 + $0x150] sm:$0xff]
    %v294 = vld [vmem:[#allocation8 + $0x158] sm:$0xff]
    %v295 = vld [vmem:[#allocation8 + $0x160] sm:$0xff]
    %v296 = vld [vmem:[#allocation8 + $0x168] sm:$0xff]
    %v297 = vld [vmem:[#allocation8 + $0x170] sm:$0xff]
    %v298 = vld [vmem:[#allocation8 + $0x178] sm:$0xff]
    %v299 = vld [vmem:[#allocation8 + $0x180] sm:$0xff]
    %v300 = vld [vmem:[#allocation8 + $0x188] sm:$0xff]
    %v301 = vld [vmem:[#allocation8 + $0x190] sm:$0xff]
    %v302 = vld [vmem:[#allocation8 + $0x198] sm:$0xff]
    %v303 = vld [vmem:[#allocation8 + $0x1a0] sm:$0xff]
    %v304 = vld [vmem:[#allocation8 + $0x1a8] sm:$0xff]
    %v305 = vld [vmem:[#allocation8 + $0x1b0] sm:$0xff]
    %v306 = vld [vmem:[#allocation8 + $0x1b8] sm:$0xff]
    %v307 = vld [vmem:[#allocation8 + $0x1c0] sm:$0xff]
    %v308 = vld [vmem:[#allocation8 + $0x1c8] sm:$0xff]
    %v309 = vld [vmem:[#allocation8 + $0x1d0] sm:$0xff]
    %v310 = vld [vmem:[#allocation8 + $0x1d8] sm:$0xff]
    %v311 = vld [vmem:[#allocation8 + $0x1e0] sm:$0xff]
    %v312 = vld [vmem:[#allocation8 + $0x1e8] sm:$0xff]
    %v313 = vld [vmem:[#allocation8 + $0x1f0] sm:$0xff]
    %v314 = vld [vmem:[#allocation8 + $0x1f8] sm:$0xff]
    %v315 = vld [vmem:[#allocation8 + $0x200] sm:$0xff]
    %v316 = vld [vmem:[#allocation8 + $0x208] sm:$0xff]
    %v317 = vld [vmem:[#allocation8 + $0x210] sm:$0xff]
    %v318 = vld [vmem:[#allocation8 + $0x218] sm:$0xff]
    %v319 = vld [vmem:[#allocation8 + $0x220] sm:$0xff]
    %v320 = vld [vmem:[#allocation8 + $0x228] sm:$0xff]
    %v321 = vld [vmem:[#allocation8 + $0x230] sm:$0xff]
    %v322 = vld [vmem:[#allocation8 + $0x238] sm:$0xff]
    %v323 = vld [vmem:[#allocation8 + $0x240] sm:$0xff]
    %v324 = vld [vmem:[#allocation8 + $0x248] sm:$0xff]
    %v325 = vld [vmem:[#allocation8 + $0x250] sm:$0xff]
    %v326 = vld [vmem:[#allocation8 + $0x258] sm:$0xff]
    %v327 = vld [vmem:[#allocation8 + $0x260] sm:$0xff]
    %v328 = vld [vmem:[#allocation8 + $0x268] sm:$0xff]
    %v329 = vld [vmem:[#allocation8 + $0x270] sm:$0xff]
    %v330 = vld [vmem:[#allocation8 + $0x278] sm:$0xff]
    %v331 = vld [vmem:[#allocation8 + $0x280] sm:$0xff]
    %v332 = vld [vmem:[#allocation8 + $0x288] sm:$0xff]
    %v333 = vld [vmem:[#allocation8 + $0x290] sm:$0xff]
    %v334 = vld [vmem:[#allocation8 + $0x298] sm:$0xff]
    %v335 = vld [vmem:[#allocation8 + $0x2a0] sm:$0xff]
    %v336 = vld [vmem:[#allocation8 + $0x2a8] sm:$0xff]
    %v337 = vld [vmem:[#allocation8 + $0x2b0] sm:$0xff]
    %v338 = vld [vmem:[#allocation8 + $0x2b8] sm:$0xff]
    %v339 = vld [vmem:[#allocation8 + $0x2c0] sm:$0xff]
    %v340 = vld [vmem:[#allocation8 + $0x2c8] sm:$0xff]
    %v341 = vld [vmem:[#allocation8 + $0x2d0] sm:$0xff]
    %v342 = vld [vmem:[#allocation8 + $0x2d8] sm:$0xff]
    %v343 = vld [vmem:[#allocation8 + $0x2e0] sm:$0xff]
    %v344 = vld [vmem:[#allocation8 + $0x2e8] sm:$0xff]
    %v345 = vld [vmem:[#allocation8 + $0x2f0] sm:$0xff]
    %v346 = vld [vmem:[#allocation8 + $0x2f8] sm:$0xff]
    %v347 = vld [vmem:[#allocation8 + $0x300] sm:$0xff]
    %v348 = vld [vmem:[#allocation8 + $0x308] sm:$0xff]
    %v349 = vld [vmem:[#allocation8 + $0x310] sm:$0xff]
    %v350 = vld [vmem:[#allocation8 + $0x318] sm:$0xff]
    %v351 = vld [vmem:[#allocation8 + $0x320] sm:$0xff]
    %v352 = vld [vmem:[#allocation8 + $0x328] sm:$0xff]
    %v353 = vld [vmem:[#allocation8 + $0x330] sm:$0xff]
    %v354 = vld [vmem:[#allocation8 + $0x338] sm:$0xff]
    %v355 = vld [vmem:[#allocation8 + $0x340] sm:$0xff]
    %v356 = vld [vmem:[#allocation8 + $0x348] sm:$0xff]
    %v357 = vld [vmem:[#allocation8 + $0x350] sm:$0xff]
    %v358 = vld [vmem:[#allocation8 + $0x358] sm:$0xff]
    %v359 = vld [vmem:[#allocation8 + $0x360] sm:$0xff]
    %v360 = vld [vmem:[#allocation8 + $0x368] sm:$0xff]
    %v361 = vld [vmem:[#allocation8 + $0x370] sm:$0xff]
    %v362 = vld [vmem:[#allocation8 + $0x378] sm:$0xff]
    %v363 = vld [vmem:[#allocation8 + $0x380] sm:$0xff]
    %v364 = vld [vmem:[#allocation8 + $0x388] sm:$0xff]
    %v365 = vld [vmem:[#allocation8 + $0x390] sm:$0xff]
    %v366 = vld [vmem:[#allocation8 + $0x398] sm:$0xff]
    %v367 = vld [vmem:[#allocation8 + $0x3a0] sm:$0xff]
    %v368 = vld [vmem:[#allocation8 + $0x3a8] sm:$0xff]
    %v369 = vld [vmem:[#allocation8 + $0x3b0] sm:$0xff]
    %v370 = vld [vmem:[#allocation8 + $0x3b8] sm:$0xff]
    %v371 = vld [vmem:[#allocation8 + $0x3c0] sm:$0xff]
    %v372 = vld [vmem:[#allocation8 + $0x3c8] sm:$0xff]
    %v373 = vld [vmem:[#allocation8 + $0x3d0] sm:$0xff]
    %v374 = vld [vmem:[#allocation8 + $0x3d8] sm:$0xff]
    %v375 = vld [vmem:[#allocation8 + $0x3e0] sm:$0xff]
    %v376 = vld [vmem:[#allocation8 + $0x3e8] sm:$0xff]
    %v377 = vld [vmem:[#allocation8 + $0x3f0] sm:$0xff]
    %v378 = vld [vmem:[#allocation8 + $0x3f8] sm:$0xff]
    %v379 = vld [vmem:[#allocation11] sm:$0xf]
    %v381 = vlaneseq
    %v382 = vshrl.u32 %v381, 7
    %v383 = vsub.s32 0, %v382
    %v384 = vrot.slane %v379, %v383
    %v385 = vlaneseq
    %v386 = vshrl.u32 %v385, 7
    %v387 = vsub.s32 1, %v386
    %v388 = vrot.slane %v379, %v387
    %v389 = vlaneseq
    %v390 = vshrl.u32 %v389, 7
    %v391 = vsub.s32 2, %v390
    %v392 = vrot.slane %v379, %v391
    %v393 = vlaneseq
    %v394 = vshrl.u32 %v393, 7
    %v395 = vsub.s32 3, %v394
    %v396 = vrot.slane %v379, %v395
    %401 = vmatprep.subr.mxu0 %v312
    %402 = vmatpush1.msra.mxu0 %v311
    %403 = vmatprep.subr.mxu0 %v308
    %404 = vmatpush1.msra.mxu0 %v307
    %405 = vmatprep.subr.mxu0 %v304
    %406 = vmatpush1.msra.mxu0 %v303
    %407 = vmatprep.subr.mxu0 %v300
    %408 = vmatpush1.msra.mxu0 %v299
    %409 = vmatprep.subr.mxu0 %v296
    %410 = vmatpush1.msra.mxu0 %v295
    %411 = vmatprep.subr.mxu0 %v292
    %412 = vmatpush1.msra.mxu0 %v291
    %413 = vmatprep.subr.mxu0 %v288
    %414 = vmatpush1.msra.mxu0 %v287
    %415 = vmatprep.subr.mxu0 %v284
    %416 = vmatpush1.msra.mxu0 %v283
    %417 = vmatprep.subr.mxu0 %v280
    %418 = vmatpush1.msra.mxu0 %v279
    %419 = vmatprep.subr.mxu0 %v276
    %420 = vmatpush1.msra.mxu0 %v275
    %421 = vmatprep.subr.mxu0 %v272
    %422 = vmatpush1.msra.mxu0 %v271
    %423 = vmatprep.subr.mxu0 %v268
    %424 = vmatpush1.msra.mxu0 %v267
    %425 = vmatprep.subr.mxu0 %v264
    %426 = vmatpush1.msra.mxu0 %v263
    %427 = vmatprep.subr.mxu0 %v260
    %428 = vmatpush1.msra.mxu0 %v259
    %429 = vmatprep.subr.mxu0 %v256
    %430 = vmatpush1.msra.mxu0 %v255
    %431 = vmatprep.subr.mxu0 %v252
    %432 = vmatpush1.msra.mxu0 %v251
    %433 = vmatprep.subr.mxu0 %v376
    %434 = vmatpush2.msra.mxu0 %v375
    %435 = vmatprep.subr.mxu0 %v372
    %436 = vmatpush2.msra.mxu0 %v371
    %437 = vmatprep.subr.mxu0 %v368
    %438 = vmatpush2.msra.mxu0 %v367
    %439 = vmatprep.subr.mxu0 %v364
    %440 = vmatpush2.msra.mxu0 %v363
    %441 = vmatprep.subr.mxu0 %v360
    %442 = vmatpush2.msra.mxu0 %v359
    %443 = vmatprep.subr.mxu0 %v356
    %444 = vmatpush2.msra.mxu0 %v355
    %445 = vmatprep.subr.mxu0 %v352
    %446 = vmatpush2.msra.mxu0 %v351
    %447 = vmatprep.subr.mxu0 %v348
    %448 = vmatpush2.msra.mxu0 %v347
    %449 = vmatprep.subr.mxu0 %v344
    %450 = vmatpush2.msra.mxu0 %v343
    %451 = vmatprep.subr.mxu0 %v340
    %452 = vmatpush2.msra.mxu0 %v339
    %453 = vmatprep.subr.mxu0 %v336
    %454 = vmatpush2.msra.mxu0 %v335
    %455 = vmatprep.subr.mxu0 %v332
    %456 = vmatpush2.msra.mxu0 %v331
    %457 = vmatprep.subr.mxu0 %v328
    %458 = vmatpush2.msra.mxu0 %v327
    %459 = vmatprep.subr.mxu0 %v324
    %460 = vmatpush2.msra.mxu0 %v323
    %461 = vmatprep.subr.mxu0 %v320
    %462 = vmatpush2.msra.mxu0 %v319
    %463 = vmatprep.subr.mxu0 %v316
    %464 = vmatpush2.msra.mxu0 %v315
    %465 = vmatprep.mubr.f32.mxu0 %v249
    %466 = vmatmul.mubr.f32.gmra.mxu0 %v247
    %v467 = vpop.f32.mrf.mxu0
    %v468 = vadd.f32 %v384, %v467
    %v469 = vpop.f32.mrf.mxu0
    %v470 = vadd.f32 %v388, %v469
    %471 = vdwg.mxu0
    %472 = vmatprep.subr.mxu0 %v314
    %473 = vmatpush1.msra.mxu0 %v313
    %474 = vmatprep.subr.mxu0 %v310
    %475 = vmatpush1.msra.mxu0 %v309
    %476 = vmatprep.subr.mxu0 %v306
    %477 = vmatpush1.msra.mxu0 %v305
    %478 = vmatprep.subr.mxu0 %v302
    %479 = vmatpush1.msra.mxu0 %v301
    %480 = vmatprep.subr.mxu0 %v298
    %481 = vmatpush1.msra.mxu0 %v297
    %482 = vmatprep.subr.mxu0 %v294
    %483 = vmatpush1.msra.mxu0 %v293
    %484 = vmatprep.subr.mxu0 %v290
    %485 = vmatpush1.msra.mxu0 %v289
    %486 = vmatprep.subr.mxu0 %v286
    %487 = vmatpush1.msra.mxu0 %v285
    %488 = vmatprep.subr.mxu0 %v282
    %489 = vmatpush1.msra.mxu0 %v281
    %490 = vmatprep.subr.mxu0 %v278
    %491 = vmatpush1.msra.mxu0 %v277
    %492 = vmatprep.subr.mxu0 %v274
    %493 = vmatpush1.msra.mxu0 %v273
    %494 = vmatprep.subr.mxu0 %v270
    %495 = vmatpush1.msra.mxu0 %v269
    %496 = vmatprep.subr.mxu0 %v266
    %497 = vmatpush1.msra.mxu0 %v265
    %498 = vmatprep.subr.mxu0 %v262
    %499 = vmatpush1.msra.mxu0 %v261
    %500 = vmatprep.subr.mxu0 %v258
    %501 = vmatpush1.msra.mxu0 %v257
    %502 = vmatprep.subr.mxu0 %v254
    %503 = vmatpush1.msra.mxu0 %v253
    %504 = vmatprep.subr.mxu0 %v378
    %505 = vmatpush2.msra.mxu0 %v377
    %506 = vmatprep.subr.mxu0 %v374
    %507 = vmatpush2.msra.mxu0 %v373
    %508 = vmatprep.subr.mxu0 %v370
    %509 = vmatpush2.msra.mxu0 %v369
    %510 = vmatprep.subr.mxu0 %v366
    %511 = vmatpush2.msra.mxu0 %v365
    %512 = vmatprep.subr.mxu0 %v362
    %513 = vmatpush2.msra.mxu0 %v361
    %514 = vmatprep.subr.mxu0 %v358
    %515 = vmatpush2.msra.mxu0 %v357
    %516 = vmatprep.subr.mxu0 %v354
    %517 = vmatpush2.msra.mxu0 %v353
    %518 = vmatprep.subr.mxu0 %v350
    %519 = vmatpush2.msra.mxu0 %v349
    %520 = vmatprep.subr.mxu0 %v346
    %521 = vmatpush2.msra.mxu0 %v345
    %522 = vmatprep.subr.mxu0 %v342
    %523 = vmatpush2.msra.mxu0 %v341
    %524 = vmatprep.subr.mxu0 %v338
    %525 = vmatpush2.msra.mxu0 %v337
    %526 = vmatprep.subr.mxu0 %v334
    %527 = vmatpush2.msra.mxu0 %v333
    %528 = vmatprep.subr.mxu0 %v330
    %529 = vmatpush2.msra.mxu0 %v329
    %530 = vmatprep.subr.mxu0 %v326
    %531 = vmatpush2.msra.mxu0 %v325
    %532 = vmatprep.subr.mxu0 %v322
    %533 = vmatpush2.msra.mxu0 %v321
    %534 = vmatprep.subr.mxu0 %v318
    %535 = vmatpush2.msra.mxu0 %v317
    %536 = vmatprep.mubr.f32.mxu0 %v249
    %537 = vmatmul.mubr.f32.gmra.mxu0 %v247
    %v538 = vpop.f32.mrf.mxu0
    %v539 = vadd.f32 %v392, %v538
    %v540 = vpop.f32.mrf.mxu0
    %v541 = vadd.f32 %v396, %v540
    %542 = vdwg.mxu0
    %543 = vst [vmem:[#allocation2] sm:$0xff] %v468
    %544 = vst [vmem:[#allocation2 + $0x8] sm:$0xff] %v470
    %545 = vst [vmem:[#allocation2 + $0x10] sm:$0xff] %v539
    %546 = vst [vmem:[#allocation2 + $0x18] sm:$0xff] %v541
    %v547 = vld [vmem:[#allocation2] ss:$8 sm:$0xf]
    %v548 = vld [vmem:[#allocation10] sm:$0xff]
    %v549 = vld [vmem:[#allocation10 + $0x8] sm:$0xff]
    %v550 = vld [vmem:[#allocation10 + $0x10] sm:$0xff]
    %v551 = vld [vmem:[#allocation10 + $0x18] sm:$0xff]
    %v552 = vld [vmem:[#allocation10 + $0x20] sm:$0xff]
    %v553 = vld [vmem:[#allocation10 + $0x28] sm:$0xff]
    %v554 = vld [vmem:[#allocation10 + $0x30] sm:$0xff]
    %v555 = vld [vmem:[#allocation10 + $0x38] sm:$0xff]
    %v556 = vld [vmem:[#allocation10 + $0x40] sm:$0xff]
    %v557 = vld [vmem:[#allocation10 + $0x48] sm:$0xff]
    %v558 = vld [vmem:[#allocation10 + $0x50] sm:$0xff]
    %v559 = vld [vmem:[#allocation10 + $0x58] sm:$0xff]
    %v560 = vld [vmem:[#allocation10 + $0x60] sm:$0xff]
    %v561 = vld [vmem:[#allocation10 + $0x68] sm:$0xff]
    %v562 = vld [vmem:[#allocation10 + $0x70] sm:$0xff]
    %v563 = vld [vmem:[#allocation10 + $0x78] sm:$0xff]
    %v564 = vld [vmem:[#allocation10 + $0x80] sm:$0xff]
    %v565 = vld [vmem:[#allocation10 + $0x88] sm:$0xff]
    %v566 = vld [vmem:[#allocation10 + $0x90] sm:$0xff]
    %v567 = vld [vmem:[#allocation10 + $0x98] sm:$0xff]
    %v568 = vld [vmem:[#allocation10 + $0xa0] sm:$0xff]
    %v569 = vld [vmem:[#allocation10 + $0xa8] sm:$0xff]
    %v570 = vld [vmem:[#allocation10 + $0xb0] sm:$0xff]
    %v571 = vld [vmem:[#allocation10 + $0xb8] sm:$0xff]
    %v572 = vld [vmem:[#allocation10 + $0xc0] sm:$0xff]
    %v573 = vld [vmem:[#allocation10 + $0xc8] sm:$0xff]
    %v574 = vld [vmem:[#allocation10 + $0xd0] sm:$0xff]
    %v575 = vld [vmem:[#allocation10 + $0xd8] sm:$0xff]
    %v576 = vld [vmem:[#allocation10 + $0xe0] sm:$0xff]
    %v577 = vld [vmem:[#allocation10 + $0xe8] sm:$0xff]
    %v578 = vld [vmem:[#allocation10 + $0xf0] sm:$0xff]
    %v579 = vld [vmem:[#allocation10 + $0xf8] sm:$0xff]
    %v580 = vld [vmem:[#allocation10 + $0x100] sm:$0xff]
    %v581 = vld [vmem:[#allocation10 + $0x108] sm:$0xff]
    %v582 = vld [vmem:[#allocation10 + $0x110] sm:$0xff]
    %v583 = vld [vmem:[#allocation10 + $0x118] sm:$0xff]
    %v584 = vld [vmem:[#allocation10 + $0x120] sm:$0xff]
    %v585 = vld [vmem:[#allocation10 + $0x128] sm:$0xff]
    %v586 = vld [vmem:[#allocation10 + $0x130] sm:$0xff]
    %v587 = vld [vmem:[#allocation10 + $0x138] sm:$0xff]
    %v588 = vld [vmem:[#allocation10 + $0x140] sm:$0xff]
    %v589 = vld [vmem:[#allocation10 + $0x148] sm:$0xff]
    %v590 = vld [vmem:[#allocation10 + $0x150] sm:$0xff]
    %v591 = vld [vmem:[#allocation10 + $0x158] sm:$0xff]
    %v592 = vld [vmem:[#allocation10 + $0x160] sm:$0xff]
    %v593 = vld [vmem:[#allocation10 + $0x168] sm:$0xff]
    %v594 = vld [vmem:[#allocation10 + $0x170] sm:$0xff]
    %v595 = vld [vmem:[#allocation10 + $0x178] sm:$0xff]
    %v596 = vld [vmem:[#allocation10 + $0x180] sm:$0xff]
    %v597 = vld [vmem:[#allocation10 + $0x188] sm:$0xff]
    %v598 = vld [vmem:[#allocation10 + $0x190] sm:$0xff]
    %v599 = vld [vmem:[#allocation10 + $0x198] sm:$0xff]
    %v600 = vld [vmem:[#allocation10 + $0x1a0] sm:$0xff]
    %v601 = vld [vmem:[#allocation10 + $0x1a8] sm:$0xff]
    %v602 = vld [vmem:[#allocation10 + $0x1b0] sm:$0xff]
    %v603 = vld [vmem:[#allocation10 + $0x1b8] sm:$0xff]
    %v604 = vld [vmem:[#allocation10 + $0x1c0] sm:$0xff]
    %v605 = vld [vmem:[#allocation10 + $0x1c8] sm:$0xff]
    %v606 = vld [vmem:[#allocation10 + $0x1d0] sm:$0xff]
    %v607 = vld [vmem:[#allocation10 + $0x1d8] sm:$0xff]
    %v608 = vld [vmem:[#allocation10 + $0x1e0] sm:$0xff]
    %v609 = vld [vmem:[#allocation10 + $0x1e8] sm:$0xff]
    %v610 = vld [vmem:[#allocation10 + $0x1f0] sm:$0xff]
    %v611 = vld [vmem:[#allocation10 + $0x1f8] sm:$0xff]
    %612 = vmatprep.subr.mxu0 %v609
    %613 = vmatpush1.msra.mxu0 %v608
    %614 = vmatprep.subr.mxu0 %v605
    %615 = vmatpush1.msra.mxu0 %v604
    %616 = vmatprep.subr.mxu0 %v601
    %617 = vmatpush1.msra.mxu0 %v600
    %618 = vmatprep.subr.mxu0 %v597
    %619 = vmatpush1.msra.mxu0 %v596
    %620 = vmatprep.subr.mxu0 %v593
    %621 = vmatpush1.msra.mxu0 %v592
    %622 = vmatprep.subr.mxu0 %v589
    %623 = vmatpush1.msra.mxu0 %v588
    %624 = vmatprep.subr.mxu0 %v585
    %625 = vmatpush1.msra.mxu0 %v584
    %626 = vmatprep.subr.mxu0 %v581
    %627 = vmatpush1.msra.mxu0 %v580
    %628 = vmatprep.subr.mxu0 %v577
    %629 = vmatpush1.msra.mxu0 %v576
    %630 = vmatprep.subr.mxu0 %v573
    %631 = vmatpush1.msra.mxu0 %v572
    %632 = vmatprep.subr.mxu0 %v569
    %633 = vmatpush1.msra.mxu0 %v568
    %634 = vmatprep.subr.mxu0 %v565
    %635 = vmatpush1.msra.mxu0 %v564
    %636 = vmatprep.subr.mxu0 %v561
    %637 = vmatpush1.msra.mxu0 %v560
    %638 = vmatprep.subr.mxu0 %v557
    %639 = vmatpush1.msra.mxu0 %v556
    %640 = vmatprep.subr.mxu0 %v553
    %641 = vmatpush1.msra.mxu0 %v552
    %642 = vmatprep.subr.mxu0 %v549
    %643 = vmatpush1.msra.mxu0 %v548
    %644 = vmatprep.subr.mxu0 0.0
    %645 = vmatpush2.msra.mxu0 0.0
    %646 = vmatprep.subr.mxu0 0.0
    %647 = vmatpush2.msra.mxu0 0.0
    %648 = vmatprep.subr.mxu0 0.0
    %649 = vmatpush2.msra.mxu0 0.0
    %650 = vmatprep.subr.mxu0 0.0
    %651 = vmatpush2.msra.mxu0 0.0
    %652 = vmatprep.subr.mxu0 0.0
    %653 = vmatpush2.msra.mxu0 0.0
    %654 = vmatprep.subr.mxu0 0.0
    %655 = vmatpush2.msra.mxu0 0.0
    %656 = vmatprep.subr.mxu0 0.0
    %657 = vmatpush2.msra.mxu0 0.0
    %658 = vmatprep.subr.mxu0 0.0
    %659 = vmatpush2.msra.mxu0 0.0
    %660 = vmatprep.subr.mxu0 0.0
    %661 = vmatpush2.msra.mxu0 0.0
    %662 = vmatprep.subr.mxu0 0.0
    %663 = vmatpush2.msra.mxu0 0.0
    %664 = vmatprep.subr.mxu0 0.0
    %665 = vmatpush2.msra.mxu0 0.0
    %666 = vmatprep.subr.mxu0 0.0
    %667 = vmatpush2.msra.mxu0 0.0
    %668 = vmatprep.subr.mxu0 0.0
    %669 = vmatpush2.msra.mxu0 0.0
    %670 = vmatprep.subr.mxu0 0.0
    %671 = vmatpush2.msra.mxu0 0.0
    %672 = vmatprep.subr.mxu0 0.0
    %673 = vmatpush2.msra.mxu0 0.0
    %674 = vmatprep.subr.mxu0 0.0
    %675 = vmatpush2.msra.mxu0 0.0
    %676 = vmatprep.mubr.f32.mxu0 0.0
    %677 = vmatmul.mubr.f32.gmra.mxu0 0.0
    %v678 = vpop.f32.mrf.mxu0
    %v679 = vadd.f32 0.0, %v678
    %v680 = vpop.f32.mrf.mxu0
    %v681 = vadd.f32 0.0, %v680
    %682 = vdwg.mxu0
    %683 = vmatprep.subr.mxu0 %v611
    %684 = vmatpush1.msra.mxu0 %v610
    %685 = vmatprep.subr.mxu0 %v607
    %686 = vmatpush1.msra.mxu0 %v606
    %687 = vmatprep.subr.mxu0 %v603
    %688 = vmatpush1.msra.mxu0 %v602
    %689 = vmatprep.subr.mxu0 %v599
    %690 = vmatpush1.msra.mxu0 %v598
    %691 = vmatprep.subr.mxu0 %v595
    %692 = vmatpush1.msra.mxu0 %v594
    %693 = vmatprep.subr.mxu0 %v591
    %694 = vmatpush1.msra.mxu0 %v590
    %695 = vmatprep.subr.mxu0 %v587
    %696 = vmatpush1.msra.mxu0 %v586
    %697 = vmatprep.subr.mxu0 %v583
    %698 = vmatpush1.msra.mxu0 %v582
    %699 = vmatprep.subr.mxu0 %v579
    %700 = vmatpush1.msra.mxu0 %v578
    %701 = vmatprep.subr.mxu0 %v575
    %702 = vmatpush1.msra.mxu0 %v574
    %703 = vmatprep.subr.mxu0 %v571
    %704 = vmatpush1.msra.mxu0 %v570
    %705 = vmatprep.subr.mxu0 %v567
    %706 = vmatpush1.msra.mxu0 %v566
    %707 = vmatprep.subr.mxu0 %v563
    %708 = vmatpush1.msra.mxu0 %v562
    %709 = vmatprep.subr.mxu0 %v559
    %710 = vmatpush1.msra.mxu0 %v558
    %711 = vmatprep.subr.mxu0 %v555
    %712 = vmatpush1.msra.mxu0 %v554
    %713 = vmatprep.subr.mxu0 %v551
    %714 = vmatpush1.msra.mxu0 %v550
    %715 = vmatprep.subr.mxu0 0.0
    %716 = vmatpush2.msra.mxu0 0.0
    %717 = vmatprep.subr.mxu0 0.0
    %718 = vmatpush2.msra.mxu0 0.0
    %719 = vmatprep.subr.mxu0 0.0
    %720 = vmatpush2.msra.mxu0 0.0
    %721 = vmatprep.subr.mxu0 0.0
    %722 = vmatpush2.msra.mxu0 0.0
    %723 = vmatprep.subr.mxu0 0.0
    %724 = vmatpush2.msra.mxu0 0.0
    %725 = vmatprep.subr.mxu0 0.0
    %726 = vmatpush2.msra.mxu0 0.0
    %727 = vmatprep.subr.mxu0 0.0
    %728 = vmatpush2.msra.mxu0 0.0
    %729 = vmatprep.subr.mxu0 0.0
    %730 = vmatpush2.msra.mxu0 0.0
    %731 = vmatprep.subr.mxu0 0.0
    %732 = vmatpush2.msra.mxu0 0.0
    %733 = vmatprep.subr.mxu0 0.0
    %734 = vmatpush2.msra.mxu0 0.0
    %735 = vmatprep.subr.mxu0 0.0
    %736 = vmatpush2.msra.mxu0 0.0
    %737 = vmatprep.subr.mxu0 0.0
    %738 = vmatpush2.msra.mxu0 0.0
    %739 = vmatprep.subr.mxu0 0.0
    %740 = vmatpush2.msra.mxu0 0.0
    %741 = vmatprep.subr.mxu0 0.0
    %742 = vmatpush2.msra.mxu0 0.0
    %743 = vmatprep.subr.mxu0 0.0
    %744 = vmatpush2.msra.mxu0 0.0
    %745 = vmatprep.subr.mxu0 0.0
    %746 = vmatpush2.msra.mxu0 0.0
    %747 = vmatprep.mubr.f32.mxu0 0.0
    %748 = vmatmul.mubr.f32.gmra.mxu0 0.0
    %v749 = vpop.f32.mrf.mxu0
    %v750 = vadd.f32 0.0, %v749
    %v751 = vpop.f32.mrf.mxu0
    %v752 = vadd.f32 0.0, %v751
    %753 = vdwg.mxu0
    %v758 = vcombine.low %v679, %v681
    %v759 = vcombine.low %v750, %v752
    %v761 = vunpack.c.l.s4 1966171168
    %v762 = vunpack.c.0.s8 %v761
    %v763 = vlaneseq
    %v764 = vshrl.u32 %v763, 7
    %v765 = vsub.s32 %v762, %v764
    %v766 = vrot.slane %v758, %v765
    %v768 = vunpack.c.l.s4 1966171168
    %v769 = vunpack.c.0.s8 %v768
    %v770 = vlaneseq
    %v771 = vshrl.u32 %v770, 7
    %v772 = vsub.s32 %v769, %v771
    %v773 = vrot.slane %v759, %v772
    %v774 = vcombine.low %v766, %v773
    %v776 = vunpack.c.l.s4 1966171168
    %v777 = vunpack.c.0.s8 %v776
    %v778 = vlaneseq
    %v779 = vshrl.u32 %v778, 7
    %v780 = vsub.s32 %v777, %v779
    %v781 = vrot.slane %v774, %v780
    %v783 = vadd.f32 %v547, %v781
    %v784 = vxor.u32 %v783, 2147483648
    %v785 = vmul.f32 %v784, 1.442695
    %v786 = vpow.pop %v785
    %v787 = vadd.f32 %v786, 1.0
    %v788 = vrcp.pop %v787
    %v789 = vmul.f32 1.0, %v788
    %v791 = vrot.slane %v783, 3
    %v793 = vtanh.pop %v791
    %v795 = vrot.slane %v789, 1
    %v797 = vmul.f32 %v795, 0.0
    %v798 = vmul.f32 %v789, %v793
    %v799 = vadd.f32 %v797, %v798
    %v800 = vtanh.pop %v799
    %v801 = vrot.slane %v789, 2
    %v803 = vmul.f32 %v801, %v800
    %v804 = vld [vmem:[#allocation13] sm:$0xff]
    %v805 = vld [vmem:[#allocation13 + $0x8] sm:$0xff]
    %v806 = vld [vmem:[#allocation13 + $0x10] sm:$0xff]
    %v807 = vld [vmem:[#allocation13 + $0x18] sm:$0xff]
    %v808 = vld [vmem:[#allocation13 + $0x20] sm:$0xff]
    %v809 = vld [vmem:[#allocation13 + $0x28] sm:$0xff]
    %v810 = vld [vmem:[#allocation13 + $0x30] sm:$0xff]
    %v811 = vld [vmem:[#allocation13 + $0x38] sm:$0xff]
    %v812 = vld [vmem:[#allocation13 + $0x40] sm:$0xff]
    %v813 = vld [vmem:[#allocation13 + $0x48] sm:$0xff]
    %v814 = vld [vmem:[#allocation13 + $0x50] sm:$0xff]
    %v815 = vld [vmem:[#allocation13 + $0x58] sm:$0xff]
    %v816 = vld [vmem:[#allocation13 + $0x60] sm:$0xff]
    %v817 = vld [vmem:[#allocation13 + $0x68] sm:$0xff]
    %v818 = vld [vmem:[#allocation13 + $0x70] sm:$0xff]
    %v819 = vld [vmem:[#allocation13 + $0x78] sm:$0xff]
    %v820 = vld [vmem:[#allocation13 + $0x80] sm:$0xff]
    %v821 = vld [vmem:[#allocation13 + $0x88] sm:$0xff]
    %v822 = vld [vmem:[#allocation13 + $0x90] sm:$0xff]
    %v823 = vld [vmem:[#allocation13 + $0x98] sm:$0xff]
    %v824 = vld [vmem:[#allocation13 + $0xa0] sm:$0xff]
    %v825 = vld [vmem:[#allocation13 + $0xa8] sm:$0xff]
    %v826 = vld [vmem:[#allocation13 + $0xb0] sm:$0xff]
    %v827 = vld [vmem:[#allocation13 + $0xb8] sm:$0xff]
    %v828 = vld [vmem:[#allocation13 + $0xc0] sm:$0xff]
    %v829 = vld [vmem:[#allocation13 + $0xc8] sm:$0xff]
    %v830 = vld [vmem:[#allocation13 + $0xd0] sm:$0xff]
    %v831 = vld [vmem:[#allocation13 + $0xd8] sm:$0xff]
    %v832 = vld [vmem:[#allocation13 + $0xe0] sm:$0xff]
    %v833 = vld [vmem:[#allocation13 + $0xe8] sm:$0xff]
    %v834 = vld [vmem:[#allocation13 + $0xf0] sm:$0xff]
    %v835 = vld [vmem:[#allocation13 + $0xf8] sm:$0xff]
    %v836 = vld [vmem:[#allocation13 + $0x100] sm:$0xff]
    %v837 = vld [vmem:[#allocation13 + $0x108] sm:$0xff]
    %v838 = vld [vmem:[#allocation13 + $0x110] sm:$0xff]
    %v839 = vld [vmem:[#allocation13 + $0x118] sm:$0xff]
    %v840 = vld [vmem:[#allocation13 + $0x120] sm:$0xff]
    %v841 = vld [vmem:[#allocation13 + $0x128] sm:$0xff]
    %v842 = vld [vmem:[#allocation13 + $0x130] sm:$0xff]
    %v843 = vld [vmem:[#allocation13 + $0x138] sm:$0xff]
    %v844 = vld [vmem:[#allocation13 + $0x140] sm:$0xff]
    %v845 = vld [vmem:[#allocation13 + $0x148] sm:$0xff]
    %v846 = vld [vmem:[#allocation13 + $0x150] sm:$0xff]
    %v847 = vld [vmem:[#allocation13 + $0x158] sm:$0xff]
    %v848 = vld [vmem:[#allocation13 + $0x160] sm:$0xff]
    %v849 = vld [vmem:[#allocation13 + $0x168] sm:$0xff]
    %v850 = vld [vmem:[#allocation13 + $0x170] sm:$0xff]
    %v851 = vld [vmem:[#allocation13 + $0x178] sm:$0xff]
    %v852 = vld [vmem:[#allocation13 + $0x180] sm:$0xff]
    %v853 = vld [vmem:[#allocation13 + $0x188] sm:$0xff]
    %v854 = vld [vmem:[#allocation13 + $0x190] sm:$0xff]
    %v855 = vld [vmem:[#allocation13 + $0x198] sm:$0xff]
    %v856 = vld [vmem:[#allocation13 + $0x1a0] sm:$0xff]
    %v857 = vld [vmem:[#allocation13 + $0x1a8] sm:$0xff]
    %v858 = vld [vmem:[#allocation13 + $0x1b0] sm:$0xff]
    %v859 = vld [vmem:[#allocation13 + $0x1b8] sm:$0xff]
    %v860 = vld [vmem:[#allocation13 + $0x1c0] sm:$0xff]
    %v861 = vld [vmem:[#allocation13 + $0x1c8] sm:$0xff]
    %v862 = vld [vmem:[#allocation13 + $0x1d0] sm:$0xff]
    %v863 = vld [vmem:[#allocation13 + $0x1d8] sm:$0xff]
    %v864 = vld [vmem:[#allocation13 + $0x1e0] sm:$0xff]
    %v865 = vld [vmem:[#allocation13 + $0x1e8] sm:$0xff]
    %v866 = vld [vmem:[#allocation13 + $0x1f0] sm:$0xff]
    %v867 = vld [vmem:[#allocation13 + $0x1f8] sm:$0xff]
    %v868 = vld [vmem:[#allocation13 + $0x200] sm:$0xff]
    %v869 = vld [vmem:[#allocation13 + $0x208] sm:$0xff]
    %v870 = vld [vmem:[#allocation13 + $0x210] sm:$0xff]
    %v871 = vld [vmem:[#allocation13 + $0x218] sm:$0xff]
    %v872 = vld [vmem:[#allocation13 + $0x220] sm:$0xff]
    %v873 = vld [vmem:[#allocation13 + $0x228] sm:$0xff]
    %v874 = vld [vmem:[#allocation13 + $0x230] sm:$0xff]
    %v875 = vld [vmem:[#allocation13 + $0x238] sm:$0xff]
    %v876 = vld [vmem:[#allocation13 + $0x240] sm:$0xff]
    %v877 = vld [vmem:[#allocation13 + $0x248] sm:$0xff]
    %v878 = vld [vmem:[#allocation13 + $0x250] sm:$0xff]
    %v879 = vld [vmem:[#allocation13 + $0x258] sm:$0xff]
    %v880 = vld [vmem:[#allocation13 + $0x260] sm:$0xff]
    %v881 = vld [vmem:[#allocation13 + $0x268] sm:$0xff]
    %v882 = vld [vmem:[#allocation13 + $0x270] sm:$0xff]
    %v883 = vld [vmem:[#allocation13 + $0x278] sm:$0xff]
    %v884 = vld [vmem:[#allocation13 + $0x280] sm:$0xff]
    %v885 = vld [vmem:[#allocation13 + $0x288] sm:$0xff]
    %v886 = vld [vmem:[#allocation13 + $0x290] sm:$0xff]
    %v887 = vld [vmem:[#allocation13 + $0x298] sm:$0xff]
    %v888 = vld [vmem:[#allocation13 + $0x2a0] sm:$0xff]
    %v889 = vld [vmem:[#allocation13 + $0x2a8] sm:$0xff]
    %v890 = vld [vmem:[#allocation13 + $0x2b0] sm:$0xff]
    %v891 = vld [vmem:[#allocation13 + $0x2b8] sm:$0xff]
    %v892 = vld [vmem:[#allocation13 + $0x2c0] sm:$0xff]
    %v893 = vld [vmem:[#allocation13 + $0x2c8] sm:$0xff]
    %v894 = vld [vmem:[#allocation13 + $0x2d0] sm:$0xff]
    %v895 = vld [vmem:[#allocation13 + $0x2d8] sm:$0xff]
    %v896 = vld [vmem:[#allocation13 + $0x2e0] sm:$0xff]
    %v897 = vld [vmem:[#allocation13 + $0x2e8] sm:$0xff]
    %v898 = vld [vmem:[#allocation13 + $0x2f0] sm:$0xff]
    %v899 = vld [vmem:[#allocation13 + $0x2f8] sm:$0xff]
    %v900 = vld [vmem:[#allocation13 + $0x300] sm:$0xff]
    %v901 = vld [vmem:[#allocation13 + $0x308] sm:$0xff]
    %v902 = vld [vmem:[#allocation13 + $0x310] sm:$0xff]
    %v903 = vld [vmem:[#allocation13 + $0x318] sm:$0xff]
    %v904 = vld [vmem:[#allocation13 + $0x320] sm:$0xff]
    %v905 = vld [vmem:[#allocation13 + $0x328] sm:$0xff]
    %v906 = vld [vmem:[#allocation13 + $0x330] sm:$0xff]
    %v907 = vld [vmem:[#allocation13 + $0x338] sm:$0xff]
    %v908 = vld [vmem:[#allocation13 + $0x340] sm:$0xff]
    %v909 = vld [vmem:[#allocation13 + $0x348] sm:$0xff]
    %v910 = vld [vmem:[#allocation13 + $0x350] sm:$0xff]
    %v911 = vld [vmem:[#allocation13 + $0x358] sm:$0xff]
    %v912 = vld [vmem:[#allocation13 + $0x360] sm:$0xff]
    %v913 = vld [vmem:[#allocation13 + $0x368] sm:$0xff]
    %v914 = vld [vmem:[#allocation13 + $0x370] sm:$0xff]
    %v915 = vld [vmem:[#allocation13 + $0x378] sm:$0xff]
    %v916 = vld [vmem:[#allocation13 + $0x380] sm:$0xff]
    %v917 = vld [vmem:[#allocation13 + $0x388] sm:$0xff]
    %v918 = vld [vmem:[#allocation13 + $0x390] sm:$0xff]
    %v919 = vld [vmem:[#allocation13 + $0x398] sm:$0xff]
    %v920 = vld [vmem:[#allocation13 + $0x3a0] sm:$0xff]
    %v921 = vld [vmem:[#allocation13 + $0x3a8] sm:$0xff]
    %v922 = vld [vmem:[#allocation13 + $0x3b0] sm:$0xff]
    %v923 = vld [vmem:[#allocation13 + $0x3b8] sm:$0xff]
    %v924 = vld [vmem:[#allocation13 + $0x3c0] sm:$0xff]
    %v925 = vld [vmem:[#allocation13 + $0x3c8] sm:$0xff]
    %v926 = vld [vmem:[#allocation13 + $0x3d0] sm:$0xff]
    %v927 = vld [vmem:[#allocation13 + $0x3d8] sm:$0xff]
    %v928 = vld [vmem:[#allocation13 + $0x3e0] sm:$0xff]
    %v929 = vld [vmem:[#allocation13 + $0x3e8] sm:$0xff]
    %v930 = vld [vmem:[#allocation13 + $0x3f0] sm:$0xff]
    %v931 = vld [vmem:[#allocation13 + $0x3f8] sm:$0xff]
    %v932 = vld [vmem:[%s6] sm:$0xf]
    %v934 = vlaneseq
    %v935 = vshrl.u32 %v934, 7
    %v936 = vsub.s32 0, %v935
    %v937 = vrot.slane %v932, %v936
    %v938 = vlaneseq
    %v939 = vshrl.u32 %v938, 7
    %v940 = vsub.s32 1, %v939
    %v941 = vrot.slane %v932, %v940
    %v942 = vlaneseq
    %v943 = vshrl.u32 %v942, 7
    %v944 = vsub.s32 2, %v943
    %v945 = vrot.slane %v932, %v944
    %v946 = vlaneseq
    %v947 = vshrl.u32 %v946, 7
    %v948 = vsub.s32 3, %v947
    %v949 = vrot.slane %v932, %v948
    %954 = vmatprep.subr.mxu0 %v865
    %955 = vmatpush1.msra.mxu0 %v864
    %956 = vmatprep.subr.mxu0 %v861
    %957 = vmatpush1.msra.mxu0 %v860
    %958 = vmatprep.subr.mxu0 %v857
    %959 = vmatpush1.msra.mxu0 %v856
    %960 = vmatprep.subr.mxu0 %v853
    %961 = vmatpush1.msra.mxu0 %v852
    %962 = vmatprep.subr.mxu0 %v849
    %963 = vmatpush1.msra.mxu0 %v848
    %964 = vmatprep.subr.mxu0 %v845
    %965 = vmatpush1.msra.mxu0 %v844
    %966 = vmatprep.subr.mxu0 %v841
    %967 = vmatpush1.msra.mxu0 %v840
    %968 = vmatprep.subr.mxu0 %v837
    %969 = vmatpush1.msra.mxu0 %v836
    %970 = vmatprep.subr.mxu0 %v833
    %971 = vmatpush1.msra.mxu0 %v832
    %972 = vmatprep.subr.mxu0 %v829
    %973 = vmatpush1.msra.mxu0 %v828
    %974 = vmatprep.subr.mxu0 %v825
    %975 = vmatpush1.msra.mxu0 %v824
    %976 = vmatprep.subr.mxu0 %v821
    %977 = vmatpush1.msra.mxu0 %v820
    %978 = vmatprep.subr.mxu0 %v817
    %979 = vmatpush1.msra.mxu0 %v816
    %980 = vmatprep.subr.mxu0 %v813
    %981 = vmatpush1.msra.mxu0 %v812
    %982 = vmatprep.subr.mxu0 %v809
    %983 = vmatpush1.msra.mxu0 %v808
    %984 = vmatprep.subr.mxu0 %v805
    %985 = vmatpush1.msra.mxu0 %v804
    %986 = vmatprep.subr.mxu0 %v929
    %987 = vmatpush2.msra.mxu0 %v928
    %988 = vmatprep.subr.mxu0 %v925
    %989 = vmatpush2.msra.mxu0 %v924
    %990 = vmatprep.subr.mxu0 %v921
    %991 = vmatpush2.msra.mxu0 %v920
    %992 = vmatprep.subr.mxu0 %v917
    %993 = vmatpush2.msra.mxu0 %v916
    %994 = vmatprep.subr.mxu0 %v913
    %995 = vmatpush2.msra.mxu0 %v912
    %996 = vmatprep.subr.mxu0 %v909
    %997 = vmatpush2.msra.mxu0 %v908
    %998 = vmatprep.subr.mxu0 %v905
    %999 = vmatpush2.msra.mxu0 %v904
    %1000 = vmatprep.subr.mxu0 %v901
    %1001 = vmatpush2.msra.mxu0 %v900
    %1002 = vmatprep.subr.mxu0 %v897
    %1003 = vmatpush2.msra.mxu0 %v896
    %1004 = vmatprep.subr.mxu0 %v893
    %1005 = vmatpush2.msra.mxu0 %v892
    %1006 = vmatprep.subr.mxu0 %v889
    %1007 = vmatpush2.msra.mxu0 %v888
    %1008 = vmatprep.subr.mxu0 %v885
    %1009 = vmatpush2.msra.mxu0 %v884
    %1010 = vmatprep.subr.mxu0 %v881
    %1011 = vmatpush2.msra.mxu0 %v880
    %1012 = vmatprep.subr.mxu0 %v877
    %1013 = vmatpush2.msra.mxu0 %v876
    %1014 = vmatprep.subr.mxu0 %v873
    %1015 = vmatpush2.msra.mxu0 %v872
    %1016 = vmatprep.subr.mxu0 %v869
    %1017 = vmatpush2.msra.mxu0 %v868
    %1018 = vmatprep.mubr.f32.mxu0 0.0
    %1019 = vmatmul.mubr.f32.gmra.mxu0 %v803
    %v1020 = vpop.f32.mrf.mxu0
    %v1021 = vadd.f32 %v937, %v1020
    %v1022 = vpop.f32.mrf.mxu0
    %v1023 = vadd.f32 %v941, %v1022
    %1024 = vdwg.mxu0
    %1025 = vmatprep.subr.mxu0 %v867
    %1026 = vmatpush1.msra.mxu0 %v866
    %1027 = vmatprep.subr.mxu0 %v863
    %1028 = vmatpush1.msra.mxu0 %v862
    %1029 = vmatprep.subr.mxu0 %v859
    %1030 = vmatpush1.msra.mxu0 %v858
    %1031 = vmatprep.subr.mxu0 %v855
    %1032 = vmatpush1.msra.mxu0 %v854
    %1033 = vmatprep.subr.mxu0 %v851
    %1034 = vmatpush1.msra.mxu0 %v850
    %1035 = vmatprep.subr.mxu0 %v847
    %1036 = vmatpush1.msra.mxu0 %v846
    %1037 = vmatprep.subr.mxu0 %v843
    %1038 = vmatpush1.msra.mxu0 %v842
    %1039 = vmatprep.subr.mxu0 %v839
    %1040 = vmatpush1.msra.mxu0 %v838
    %1041 = vmatprep.subr.mxu0 %v835
    %1042 = vmatpush1.msra.mxu0 %v834
    %1043 = vmatprep.subr.mxu0 %v831
    %1044 = vmatpush1.msra.mxu0 %v830
    %1045 = vmatprep.subr.mxu0 %v827
    %1046 = vmatpush1.msra.mxu0 %v826
    %1047 = vmatprep.subr.mxu0 %v823
    %1048 = vmatpush1.msra.mxu0 %v822
    %1049 = vmatprep.subr.mxu0 %v819
    %1050 = vmatpush1.msra.mxu0 %v818
    %1051 = vmatprep.subr.mxu0 %v815
    %1052 = vmatpush1.msra.mxu0 %v814
    %1053 = vmatprep.subr.mxu0 %v811
    %1054 = vmatpush1.msra.mxu0 %v810
    %1055 = vmatprep.subr.mxu0 %v807
    %1056 = vmatpush1.msra.mxu0 %v806
    %1057 = vmatprep.subr.mxu0 %v931
    %1058 = vmatpush2.msra.mxu0 %v930
    %1059 = vmatprep.subr.mxu0 %v927
    %1060 = vmatpush2.msra.mxu0 %v926
    %1061 = vmatprep.subr.mxu0 %v923
    %1062 = vmatpush2.msra.mxu0 %v922
    %1063 = vmatprep.subr.mxu0 %v919
    %1064 = vmatpush2.msra.mxu0 %v918
    %1065 = vmatprep.subr.mxu0 %v915
    %1066 = vmatpush2.msra.mxu0 %v914
    %1067 = vmatprep.subr.mxu0 %v911
    %1068 = vmatpush2.msra.mxu0 %v910
    %1069 = vmatprep.subr.mxu0 %v907
    %1070 = vmatpush2.msra.mxu0 %v906
    %1071 = vmatprep.subr.mxu0 %v903
    %1072 = vmatpush2.msra.mxu0 %v902
    %1073 = vmatprep.subr.mxu0 %v899
    %1074 = vmatpush2.msra.mxu0 %v898
    %1075 = vmatprep.subr.mxu0 %v895
    %1076 = vmatpush2.msra.mxu0 %v894
    %1077 = vmatprep.subr.mxu0 %v891
    %1078 = vmatpush2.msra.mxu0 %v890
    %1079 = vmatprep.subr.mxu0 %v887
    %1080 = vmatpush2.msra.mxu0 %v886
    %1081 = vmatprep.subr.mxu0 %v883
    %1082 = vmatpush2.msra.mxu0 %v882
    %1083 = vmatprep.subr.mxu0 %v879
    %1084 = vmatpush2.msra.mxu0 %v878
    %1085 = vmatprep.subr.mxu0 %v875
    %1086 = vmatpush2.msra.mxu0 %v874
    %1087 = vmatprep.subr.mxu0 %v871
    %1088 = vmatpush2.msra.mxu0 %v870
    %1089 = vmatprep.mubr.f32.mxu0 0.0
    %1090 = vmatmul.mubr.f32.gmra.mxu0 %v803
    %v1091 = vpop.f32.mrf.mxu0
    %v1092 = vadd.f32 %v945, %v1091
    %v1093 = vpop.f32.mrf.mxu0
    %v1094 = vadd.f32 %v949, %v1093
    %1095 = vdwg.mxu0
    %v1096 = vxor.u32 %v1021, 2147483648
    %v1097 = vxor.u32 %v1023, 2147483648
    %v1098 = vxor.u32 %v1092, 2147483648
    %v1099 = vmul.f32 %v1096, 1.442695
    %v1100 = vpow.pop %v1099
    %v1101 = vmul.f32 %v1097, 1.442695
    %v1102 = vpow.pop %v1101
    %v1103 = vmul.f32 %v1098, 1.442695
    %v1104 = vpow.pop %v1103
    %v1105 = vadd.f32 %v1100, 1.0
    %v1106 = vadd.f32 %v1102, 1.0
    %v1107 = vadd.f32 %v1104, 1.0
    %v1108 = vrcp.pop %v1105
    %v1109 = vmul.f32 1.0, %v1108
    %v1110 = vrcp.pop %v1106
    %v1111 = vmul.f32 1.0, %v1110
    %v1112 = vrcp.pop %v1107
    %v1113 = vmul.f32 1.0, %v1112
    %v1114 = vtanh.pop %v1094
    %v1115 = vmul.f32 %v1111, 0.0
    %v1116 = vmul.f32 %v1109, %v1114
    %v1117 = vadd.f32 %v1115, %v1116
    %v1118 = vtanh.pop %v1117
    %v1119 = vmul.f32 %v1113, %v1118
    %s1120 = scalar_lea.vmem [#allocation2], 1
    %v1121 = vld [vmem:[%s1120] ss:$8 sm:$0xf]
    %1122 = vmatprep.subr.mxu0 %v609
    %1123 = vmatpush1.msra.mxu0 %v608
    %1124 = vmatprep.subr.mxu0 %v605
    %1125 = vmatpush1.msra.mxu0 %v604
    %1126 = vmatprep.subr.mxu0 %v601
    %1127 = vmatpush1.msra.mxu0 %v600
    %1128 = vmatprep.subr.mxu0 %v597
    %1129 = vmatpush1.msra.mxu0 %v596
    %1130 = vmatprep.subr.mxu0 %v593
    %1131 = vmatpush1.msra.mxu0 %v592
    %1132 = vmatprep.subr.mxu0 %v589
    %1133 = vmatpush1.msra.mxu0 %v588
    %1134 = vmatprep.subr.mxu0 %v585
    %1135 = vmatpush1.msra.mxu0 %v584
    %1136 = vmatprep.subr.mxu0 %v581
    %1137 = vmatpush1.msra.mxu0 %v580
    %1138 = vmatprep.subr.mxu0 %v577
    %1139 = vmatpush1.msra.mxu0 %v576
    %1140 = vmatprep.subr.mxu0 %v573
    %1141 = vmatpush1.msra.mxu0 %v572
    %1142 = vmatprep.subr.mxu0 %v569
    %1143 = vmatpush1.msra.mxu0 %v568
    %1144 = vmatprep.subr.mxu0 %v565
    %1145 = vmatpush1.msra.mxu0 %v564
    %1146 = vmatprep.subr.mxu0 %v561
    %1147 = vmatpush1.msra.mxu0 %v560
    %1148 = vmatprep.subr.mxu0 %v557
    %1149 = vmatpush1.msra.mxu0 %v556
    %1150 = vmatprep.subr.mxu0 %v553
    %1151 = vmatpush1.msra.mxu0 %v552
    %1152 = vmatprep.subr.mxu0 %v549
    %1153 = vmatpush1.msra.mxu0 %v548
    %1154 = vmatprep.subr.mxu0 0.0
    %1155 = vmatpush2.msra.mxu0 0.0
    %1156 = vmatprep.subr.mxu0 0.0
    %1157 = vmatpush2.msra.mxu0 0.0
    %1158 = vmatprep.subr.mxu0 0.0
    %1159 = vmatpush2.msra.mxu0 0.0
    %1160 = vmatprep.subr.mxu0 0.0
    %1161 = vmatpush2.msra.mxu0 0.0
    %1162 = vmatprep.subr.mxu0 0.0
    %1163 = vmatpush2.msra.mxu0 0.0
    %1164 = vmatprep.subr.mxu0 0.0
    %1165 = vmatpush2.msra.mxu0 0.0
    %1166 = vmatprep.subr.mxu0 0.0
    %1167 = vmatpush2.msra.mxu0 0.0
    %1168 = vmatprep.subr.mxu0 0.0
    %1169 = vmatpush2.msra.mxu0 0.0
    %1170 = vmatprep.subr.mxu0 0.0
    %1171 = vmatpush2.msra.mxu0 0.0
    %1172 = vmatprep.subr.mxu0 0.0
    %1173 = vmatpush2.msra.mxu0 0.0
    %1174 = vmatprep.subr.mxu0 0.0
    %1175 = vmatpush2.msra.mxu0 0.0
    %1176 = vmatprep.subr.mxu0 0.0
    %1177 = vmatpush2.msra.mxu0 0.0
    %1178 = vmatprep.subr.mxu0 0.0
    %1179 = vmatpush2.msra.mxu0 0.0
    %1180 = vmatprep.subr.mxu0 0.0
    %1181 = vmatpush2.msra.mxu0 0.0
    %1182 = vmatprep.subr.mxu0 0.0
    %1183 = vmatpush2.msra.mxu0 0.0
    %1184 = vmatprep.subr.mxu0 0.0
    %1185 = vmatpush2.msra.mxu0 0.0
    %1186 = vmatprep.mubr.f32.mxu0 0.0
    %1187 = vmatmul.mubr.f32.gmra.mxu0 %v803
    %v1188 = vpop.f32.mrf.mxu0
    %v1189 = vadd.f32 0.0, %v1188
    %v1190 = vpop.f32.mrf.mxu0
    %v1191 = vadd.f32 0.0, %v1190
    %1192 = vdwg.mxu0
    %1193 = vmatprep.subr.mxu0 %v611
    %1194 = vmatpush1.msra.mxu0 %v610
    %1195 = vmatprep.subr.mxu0 %v607
    %1196 = vmatpush1.msra.mxu0 %v606
    %1197 = vmatprep.subr.mxu0 %v603
    %1198 = vmatpush1.msra.mxu0 %v602
    %1199 = vmatprep.subr.mxu0 %v599
    %1200 = vmatpush1.msra.mxu0 %v598
    %1201 = vmatprep.subr.mxu0 %v595
    %1202 = vmatpush1.msra.mxu0 %v594
    %1203 = vmatprep.subr.mxu0 %v591
    %1204 = vmatpush1.msra.mxu0 %v590
    %1205 = vmatprep.subr.mxu0 %v587
    %1206 = vmatpush1.msra.mxu0 %v586
    %1207 = vmatprep.subr.mxu0 %v583
    %1208 = vmatpush1.msra.mxu0 %v582
    %1209 = vmatprep.subr.mxu0 %v579
    %1210 = vmatpush1.msra.mxu0 %v578
    %1211 = vmatprep.subr.mxu0 %v575
    %1212 = vmatpush1.msra.mxu0 %v574
    %1213 = vmatprep.subr.mxu0 %v571
    %1214 = vmatpush1.msra.mxu0 %v570
    %1215 = vmatprep.subr.mxu0 %v567
    %1216 = vmatpush1.msra.mxu0 %v566
    %1217 = vmatprep.subr.mxu0 %v563
    %1218 = vmatpush1.msra.mxu0 %v562
    %1219 = vmatprep.subr.mxu0 %v559
    %1220 = vmatpush1.msra.mxu0 %v558
    %1221 = vmatprep.subr.mxu0 %v555
    %1222 = vmatpush1.msra.mxu0 %v554
    %1223 = vmatprep.subr.mxu0 %v551
    %1224 = vmatpush1.msra.mxu0 %v550
    %1225 = vmatprep.subr.mxu0 0.0
    %1226 = vmatpush2.msra.mxu0 0.0
    %1227 = vmatprep.subr.mxu0 0.0
    %1228 = vmatpush2.msra.mxu0 0.0
    %1229 = vmatprep.subr.mxu0 0.0
    %1230 = vmatpush2.msra.mxu0 0.0
    %1231 = vmatprep.subr.mxu0 0.0
    %1232 = vmatpush2.msra.mxu0 0.0
    %1233 = vmatprep.subr.mxu0 0.0
    %1234 = vmatpush2.msra.mxu0 0.0
    %1235 = vmatprep.subr.mxu0 0.0
    %1236 = vmatpush2.msra.mxu0 0.0
    %1237 = vmatprep.subr.mxu0 0.0
    %1238 = vmatpush2.msra.mxu0 0.0
    %1239 = vmatprep.subr.mxu0 0.0
    %1240 = vmatpush2.msra.mxu0 0.0
    %1241 = vmatprep.subr.mxu0 0.0
    %1242 = vmatpush2.msra.mxu0 0.0
    %1243 = vmatprep.subr.mxu0 0.0
    %1244 = vmatpush2.msra.mxu0 0.0
    %1245 = vmatprep.subr.mxu0 0.0
    %1246 = vmatpush2.msra.mxu0 0.0
    %1247 = vmatprep.subr.mxu0 0.0
    %1248 = vmatpush2.msra.mxu0 0.0
    %1249 = vmatprep.subr.mxu0 0.0
    %1250 = vmatpush2.msra.mxu0 0.0
    %1251 = vmatprep.subr.mxu0 0.0
    %1252 = vmatpush2.msra.mxu0 0.0
    %1253 = vmatprep.subr.mxu0 0.0
    %1254 = vmatpush2.msra.mxu0 0.0
    %1255 = vmatprep.subr.mxu0 0.0
    %1256 = vmatpush2.msra.mxu0 0.0
    %1257 = vmatprep.mubr.f32.mxu0 0.0
    %1258 = vmatmul.mubr.f32.gmra.mxu0 %v803
    %v1259 = vpop.f32.mrf.mxu0
    %v1260 = vadd.f32 0.0, %v1259
    %v1261 = vpop.f32.mrf.mxu0
    %v1262 = vadd.f32 0.0, %v1261
    %1263 = vdwg.mxu0
    %v1268 = vcombine.low %v1189, %v1191
    %v1269 = vcombine.low %v1260, %v1262
    %v1271 = vunpack.c.l.s4 1966171168
    %v1272 = vunpack.c.0.s8 %v1271
    %v1273 = vlaneseq
    %v1274 = vshrl.u32 %v1273, 7
    %v1275 = vsub.s32 %v1272, %v1274
    %v1276 = vrot.slane %v1268, %v1275
    %v1278 = vunpack.c.l.s4 1966171168
    %v1279 = vunpack.c.0.s8 %v1278
    %v1280 = vlaneseq
    %v1281 = vshrl.u32 %v1280, 7
    %v1282 = vsub.s32 %v1279, %v1281
    %v1283 = vrot.slane %v1269, %v1282
    %v1284 = vcombine.low %v1276, %v1283
    %v1286 = vunpack.c.l.s4 1966171168
    %v1287 = vunpack.c.0.s8 %v1286
    %v1288 = vlaneseq
    %v1289 = vshrl.u32 %v1288, 7
    %v1290 = vsub.s32 %v1287, %v1289
    %v1291 = vrot.slane %v1284, %v1290
    %v1293 = vadd.f32 %v1121, %v1291
    %v1294 = vxor.u32 %v1293, 2147483648
    %v1295 = vmul.f32 %v1294, 1.442695
    %v1296 = vpow.pop %v1295
    %v1297 = vadd.f32 %v1296, 1.0
    %v1298 = vrcp.pop %v1297
    %v1299 = vmul.f32 1.0, %v1298
    %v1301 = vrot.slane %v1293, 3
    %v1303 = vtanh.pop %v1301
    %v1305 = vrot.slane %v1299, 1
    %v1307 = vmul.f32 %v1305, %v799
    %v1308 = vmul.f32 %v1299, %v1303
    %v1309 = vadd.f32 %v1307, %v1308
    %v1310 = vtanh.pop %v1309
    %v1311 = vrot.slane %v1299, 2
    %v1313 = vmul.f32 %v1311, %v1310
    %1314 = vmatprep.subr.mxu0 %v865
    %1315 = vmatpush1.msra.mxu0 %v864
    %1316 = vmatprep.subr.mxu0 %v861
    %1317 = vmatpush1.msra.mxu0 %v860
    %1318 = vmatprep.subr.mxu0 %v857
    %1319 = vmatpush1.msra.mxu0 %v856
    %1320 = vmatprep.subr.mxu0 %v853
    %1321 = vmatpush1.msra.mxu0 %v852
    %1322 = vmatprep.subr.mxu0 %v849
    %1323 = vmatpush1.msra.mxu0 %v848
    %1324 = vmatprep.subr.mxu0 %v845
    %1325 = vmatpush1.msra.mxu0 %v844
    %1326 = vmatprep.subr.mxu0 %v841
    %1327 = vmatpush1.msra.mxu0 %v840
    %1328 = vmatprep.subr.mxu0 %v837
    %1329 = vmatpush1.msra.mxu0 %v836
    %1330 = vmatprep.subr.mxu0 %v833
    %1331 = vmatpush1.msra.mxu0 %v832
    %1332 = vmatprep.subr.mxu0 %v829
    %1333 = vmatpush1.msra.mxu0 %v828
    %1334 = vmatprep.subr.mxu0 %v825
    %1335 = vmatpush1.msra.mxu0 %v824
    %1336 = vmatprep.subr.mxu0 %v821
    %1337 = vmatpush1.msra.mxu0 %v820
    %1338 = vmatprep.subr.mxu0 %v817
    %1339 = vmatpush1.msra.mxu0 %v816
    %1340 = vmatprep.subr.mxu0 %v813
    %1341 = vmatpush1.msra.mxu0 %v812
    %1342 = vmatprep.subr.mxu0 %v809
    %1343 = vmatpush1.msra.mxu0 %v808
    %1344 = vmatprep.subr.mxu0 %v805
    %1345 = vmatpush1.msra.mxu0 %v804
    %1346 = vmatprep.subr.mxu0 %v929
    %1347 = vmatpush2.msra.mxu0 %v928
    %1348 = vmatprep.subr.mxu0 %v925
    %1349 = vmatpush2.msra.mxu0 %v924
    %1350 = vmatprep.subr.mxu0 %v921
    %1351 = vmatpush2.msra.mxu0 %v920
    %1352 = vmatprep.subr.mxu0 %v917
    %1353 = vmatpush2.msra.mxu0 %v916
    %1354 = vmatprep.subr.mxu0 %v913
    %1355 = vmatpush2.msra.mxu0 %v912
    %1356 = vmatprep.subr.mxu0 %v909
    %1357 = vmatpush2.msra.mxu0 %v908
    %1358 = vmatprep.subr.mxu0 %v905
    %1359 = vmatpush2.msra.mxu0 %v904
    %1360 = vmatprep.subr.mxu0 %v901
    %1361 = vmatpush2.msra.mxu0 %v900
    %1362 = vmatprep.subr.mxu0 %v897
    %1363 = vmatpush2.msra.mxu0 %v896
    %1364 = vmatprep.subr.mxu0 %v893
    %1365 = vmatpush2.msra.mxu0 %v892
    %1366 = vmatprep.subr.mxu0 %v889
    %1367 = vmatpush2.msra.mxu0 %v888
    %1368 = vmatprep.subr.mxu0 %v885
    %1369 = vmatpush2.msra.mxu0 %v884
    %1370 = vmatprep.subr.mxu0 %v881
    %1371 = vmatpush2.msra.mxu0 %v880
    %1372 = vmatprep.subr.mxu0 %v877
    %1373 = vmatpush2.msra.mxu0 %v876
    %1374 = vmatprep.subr.mxu0 %v873
    %1375 = vmatpush2.msra.mxu0 %v872
    %1376 = vmatprep.subr.mxu0 %v869
    %1377 = vmatpush2.msra.mxu0 %v868
    %1378 = vmatprep.mubr.f32.mxu0 %v1119
    %1379 = vmatmul.mubr.f32.gmra.mxu0 %v1313
    %v1380 = vpop.f32.mrf.mxu0
    %v1381 = vadd.f32 %v937, %v1380
    %v1382 = vpop.f32.mrf.mxu0
    %v1383 = vadd.f32 %v941, %v1382
    %1384 = vdwg.mxu0
    %1385 = vmatprep.subr.mxu0 %v867
    %1386 = vmatpush1.msra.mxu0 %v866
    %1387 = vmatprep.subr.mxu0 %v863
    %1388 = vmatpush1.msra.mxu0 %v862
    %1389 = vmatprep.subr.mxu0 %v859
    %1390 = vmatpush1.msra.mxu0 %v858
    %1391 = vmatprep.subr.mxu0 %v855
    %1392 = vmatpush1.msra.mxu0 %v854
    %1393 = vmatprep.subr.mxu0 %v851
    %1394 = vmatpush1.msra.mxu0 %v850
    %1395 = vmatprep.subr.mxu0 %v847
    %1396 = vmatpush1.msra.mxu0 %v846
    %1397 = vmatprep.subr.mxu0 %v843
    %1398 = vmatpush1.msra.mxu0 %v842
    %1399 = vmatprep.subr.mxu0 %v839
    %1400 = vmatpush1.msra.mxu0 %v838
    %1401 = vmatprep.subr.mxu0 %v835
    %1402 = vmatpush1.msra.mxu0 %v834
    %1403 = vmatprep.subr.mxu0 %v831
    %1404 = vmatpush1.msra.mxu0 %v830
    %1405 = vmatprep.subr.mxu0 %v827
    %1406 = vmatpush1.msra.mxu0 %v826
    %1407 = vmatprep.subr.mxu0 %v823
    %1408 = vmatpush1.msra.mxu0 %v822
    %1409 = vmatprep.subr.mxu0 %v819
    %1410 = vmatpush1.msra.mxu0 %v818
    %1411 = vmatprep.subr.mxu0 %v815
    %1412 = vmatpush1.msra.mxu0 %v814
    %1413 = vmatprep.subr.mxu0 %v811
    %1414 = vmatpush1.msra.mxu0 %v810
    %1415 = vmatprep.subr.mxu0 %v807
    %1416 = vmatpush1.msra.mxu0 %v806
    %1417 = vmatprep.subr.mxu0 %v931
    %1418 = vmatpush2.msra.mxu0 %v930
    %1419 = vmatprep.subr.mxu0 %v927
    %1420 = vmatpush2.msra.mxu0 %v926
    %1421 = vmatprep.subr.mxu0 %v923
    %1422 = vmatpush2.msra.mxu0 %v922
    %1423 = vmatprep.subr.mxu0 %v919
    %1424 = vmatpush2.msra.mxu0 %v918
    %1425 = vmatprep.subr.mxu0 %v915
    %1426 = vmatpush2.msra.mxu0 %v914
    %1427 = vmatprep.subr.mxu0 %v911
    %1428 = vmatpush2.msra.mxu0 %v910
    %1429 = vmatprep.subr.mxu0 %v907
    %1430 = vmatpush2.msra.mxu0 %v906
    %1431 = vmatprep.subr.mxu0 %v903
    %1432 = vmatpush2.msra.mxu0 %v902
    %1433 = vmatprep.subr.mxu0 %v899
    %1434 = vmatpush2.msra.mxu0 %v898
    %1435 = vmatprep.subr.mxu0 %v895
    %1436 = vmatpush2.msra.mxu0 %v894
    %1437 = vmatprep.subr.mxu0 %v891
    %1438 = vmatpush2.msra.mxu0 %v890
    %1439 = vmatprep.subr.mxu0 %v887
    %1440 = vmatpush2.msra.mxu0 %v886
    %1441 = vmatprep.subr.mxu0 %v883
    %1442 = vmatpush2.msra.mxu0 %v882
    %1443 = vmatprep.subr.mxu0 %v879
    %1444 = vmatpush2.msra.mxu0 %v878
    %1445 = vmatprep.subr.mxu0 %v875
    %1446 = vmatpush2.msra.mxu0 %v874
    %1447 = vmatprep.subr.mxu0 %v871
    %1448 = vmatpush2.msra.mxu0 %v870
    %1449 = vmatprep.mubr.f32.mxu0 %v1119
    %1450 = vmatmul.mubr.f32.gmra.mxu0 %v1313
    %v1451 = vpop.f32.mrf.mxu0
    %v1452 = vadd.f32 %v945, %v1451
    %v1453 = vpop.f32.mrf.mxu0
    %v1454 = vadd.f32 %v949, %v1453
    %1455 = vdwg.mxu0
    %v1456 = vxor.u32 %v1381, 2147483648
    %v1457 = vxor.u32 %v1383, 2147483648
    %v1458 = vxor.u32 %v1452, 2147483648
    %v1459 = vmul.f32 %v1456, 1.442695
    %v1460 = vpow.pop %v1459
    %v1461 = vmul.f32 %v1457, 1.442695
    %v1462 = vpow.pop %v1461
    %v1463 = vmul.f32 %v1458, 1.442695
    %v1464 = vpow.pop %v1463
    %v1465 = vadd.f32 %v1460, 1.0
    %v1466 = vadd.f32 %v1462, 1.0
    %v1467 = vadd.f32 %v1464, 1.0
    %v1468 = vrcp.pop %v1465
    %v1469 = vmul.f32 1.0, %v1468
    %v1470 = vrcp.pop %v1466
    %v1471 = vmul.f32 1.0, %v1470
    %v1472 = vrcp.pop %v1467
    %v1473 = vmul.f32 1.0, %v1472
    %v1474 = vtanh.pop %v1454
    %v1475 = vmul.f32 %v1471, %v1117
    %v1476 = vmul.f32 %v1469, %v1474
    %v1477 = vadd.f32 %v1475, %v1476
    %v1478 = vtanh.pop %v1477
    %v1479 = vmul.f32 %v1473, %v1478
    %s1480 = scalar_lea.vmem [#allocation2], 2
    %v1481 = vld [vmem:[%s1480] ss:$8 sm:$0xf]
    %1482 = vmatprep.subr.mxu0 %v609
    %1483 = vmatpush1.msra.mxu0 %v608
    %1484 = vmatprep.subr.mxu0 %v605
    %1485 = vmatpush1.msra.mxu0 %v604
    %1486 = vmatprep.subr.mxu0 %v601
    %1487 = vmatpush1.msra.mxu0 %v600
    %1488 = vmatprep.subr.mxu0 %v597
    %1489 = vmatpush1.msra.mxu0 %v596
    %1490 = vmatprep.subr.mxu0 %v593
    %1491 = vmatpush1.msra.mxu0 %v592
    %1492 = vmatprep.subr.mxu0 %v589
    %1493 = vmatpush1.msra.mxu0 %v588
    %1494 = vmatprep.subr.mxu0 %v585
    %1495 = vmatpush1.msra.mxu0 %v584
    %1496 = vmatprep.subr.mxu0 %v581
    %1497 = vmatpush1.msra.mxu0 %v580
    %1498 = vmatprep.subr.mxu0 %v577
    %1499 = vmatpush1.msra.mxu0 %v576
    %1500 = vmatprep.subr.mxu0 %v573
    %1501 = vmatpush1.msra.mxu0 %v572
    %1502 = vmatprep.subr.mxu0 %v569
    %1503 = vmatpush1.msra.mxu0 %v568
    %1504 = vmatprep.subr.mxu0 %v565
    %1505 = vmatpush1.msra.mxu0 %v564
    %1506 = vmatprep.subr.mxu0 %v561
    %1507 = vmatpush1.msra.mxu0 %v560
    %1508 = vmatprep.subr.mxu0 %v557
    %1509 = vmatpush1.msra.mxu0 %v556
    %1510 = vmatprep.subr.mxu0 %v553
    %1511 = vmatpush1.msra.mxu0 %v552
    %1512 = vmatprep.subr.mxu0 %v549
    %1513 = vmatpush1.msra.mxu0 %v548
    %1514 = vmatprep.subr.mxu0 0.0
    %1515 = vmatpush2.msra.mxu0 0.0
    %1516 = vmatprep.subr.mxu0 0.0
    %1517 = vmatpush2.msra.mxu0 0.0
    %1518 = vmatprep.subr.mxu0 0.0
    %1519 = vmatpush2.msra.mxu0 0.0
    %1520 = vmatprep.subr.mxu0 0.0
    %1521 = vmatpush2.msra.mxu0 0.0
    %1522 = vmatprep.subr.mxu0 0.0
    %1523 = vmatpush2.msra.mxu0 0.0
    %1524 = vmatprep.subr.mxu0 0.0
    %1525 = vmatpush2.msra.mxu0 0.0
    %1526 = vmatprep.subr.mxu0 0.0
    %1527 = vmatpush2.msra.mxu0 0.0
    %1528 = vmatprep.subr.mxu0 0.0
    %1529 = vmatpush2.msra.mxu0 0.0
    %1530 = vmatprep.subr.mxu0 0.0
    %1531 = vmatpush2.msra.mxu0 0.0
    %1532 = vmatprep.subr.mxu0 0.0
    %1533 = vmatpush2.msra.mxu0 0.0
    %1534 = vmatprep.subr.mxu0 0.0
    %1535 = vmatpush2.msra.mxu0 0.0
    %1536 = vmatprep.subr.mxu0 0.0
    %1537 = vmatpush2.msra.mxu0 0.0
    %1538 = vmatprep.subr.mxu0 0.0
    %1539 = vmatpush2.msra.mxu0 0.0
    %1540 = vmatprep.subr.mxu0 0.0
    %1541 = vmatpush2.msra.mxu0 0.0
    %1542 = vmatprep.subr.mxu0 0.0
    %1543 = vmatpush2.msra.mxu0 0.0
    %1544 = vmatprep.subr.mxu0 0.0
    %1545 = vmatpush2.msra.mxu0 0.0
    %1546 = vmatprep.mubr.f32.mxu0 0.0
    %1547 = vmatmul.mubr.f32.gmra.mxu0 %v1313
    %v1548 = vpop.f32.mrf.mxu0
    %v1549 = vadd.f32 0.0, %v1548
    %v1550 = vpop.f32.mrf.mxu0
    %v1551 = vadd.f32 0.0, %v1550
    %1552 = vdwg.mxu0
    %1553 = vmatprep.subr.mxu0 %v611
    %1554 = vmatpush1.msra.mxu0 %v610
    %1555 = vmatprep.subr.mxu0 %v607
    %1556 = vmatpush1.msra.mxu0 %v606
    %1557 = vmatprep.subr.mxu0 %v603
    %1558 = vmatpush1.msra.mxu0 %v602
    %1559 = vmatprep.subr.mxu0 %v599
    %1560 = vmatpush1.msra.mxu0 %v598
    %1561 = vmatprep.subr.mxu0 %v595
    %1562 = vmatpush1.msra.mxu0 %v594
    %1563 = vmatprep.subr.mxu0 %v591
    %1564 = vmatpush1.msra.mxu0 %v590
    %1565 = vmatprep.subr.mxu0 %v587
    %1566 = vmatpush1.msra.mxu0 %v586
    %1567 = vmatprep.subr.mxu0 %v583
    %1568 = vmatpush1.msra.mxu0 %v582
    %1569 = vmatprep.subr.mxu0 %v579
    %1570 = vmatpush1.msra.mxu0 %v578
    %1571 = vmatprep.subr.mxu0 %v575
    %1572 = vmatpush1.msra.mxu0 %v574
    %1573 = vmatprep.subr.mxu0 %v571
    %1574 = vmatpush1.msra.mxu0 %v570
    %1575 = vmatprep.subr.mxu0 %v567
    %1576 = vmatpush1.msra.mxu0 %v566
    %1577 = vmatprep.subr.mxu0 %v563
    %1578 = vmatpush1.msra.mxu0 %v562
    %1579 = vmatprep.subr.mxu0 %v559
    %1580 = vmatpush1.msra.mxu0 %v558
    %1581 = vmatprep.subr.mxu0 %v555
    %1582 = vmatpush1.msra.mxu0 %v554
    %1583 = vmatprep.subr.mxu0 %v551
    %1584 = vmatpush1.msra.mxu0 %v550
    %1585 = vmatprep.subr.mxu0 0.0
    %1586 = vmatpush2.msra.mxu0 0.0
    %1587 = vmatprep.subr.mxu0 0.0
    %1588 = vmatpush2.msra.mxu0 0.0
    %1589 = vmatprep.subr.mxu0 0.0
    %1590 = vmatpush2.msra.mxu0 0.0
    %1591 = vmatprep.subr.mxu0 0.0
    %1592 = vmatpush2.msra.mxu0 0.0
    %1593 = vmatprep.subr.mxu0 0.0
    %1594 = vmatpush2.msra.mxu0 0.0
    %1595 = vmatprep.subr.mxu0 0.0
    %1596 = vmatpush2.msra.mxu0 0.0
    %1597 = vmatprep.subr.mxu0 0.0
    %1598 = vmatpush2.msra.mxu0 0.0
    %1599 = vmatprep.subr.mxu0 0.0
    %1600 = vmatpush2.msra.mxu0 0.0
    %1601 = vmatprep.subr.mxu0 0.0
    %1602 = vmatpush2.msra.mxu0 0.0
    %1603 = vmatprep.subr.mxu0 0.0
    %1604 = vmatpush2.msra.mxu0 0.0
    %1605 = vmatprep.subr.mxu0 0.0
    %1606 = vmatpush2.msra.mxu0 0.0
    %1607 = vmatprep.subr.mxu0 0.0
    %1608 = vmatpush2.msra.mxu0 0.0
    %1609 = vmatprep.subr.mxu0 0.0
    %1610 = vmatpush2.msra.mxu0 0.0
    %1611 = vmatprep.subr.mxu0 0.0
    %1612 = vmatpush2.msra.mxu0 0.0
    %1613 = vmatprep.subr.mxu0 0.0
    %1614 = vmatpush2.msra.mxu0 0.0
    %1615 = vmatprep.subr.mxu0 0.0
    %1616 = vmatpush2.msra.mxu0 0.0
    %1617 = vmatprep.mubr.f32.mxu0 0.0
    %1618 = vmatmul.mubr.f32.gmra.mxu0 %v1313
    %v1619 = vpop.f32.mrf.mxu0
    %v1620 = vadd.f32 0.0, %v1619
    %v1621 = vpop.f32.mrf.mxu0
    %v1622 = vadd.f32 0.0, %v1621
    %1623 = vdwg.mxu0
    %v1628 = vcombine.low %v1549, %v1551
    %v1629 = vcombine.low %v1620, %v1622
    %v1631 = vunpack.c.l.s4 1966171168
    %v1632 = vunpack.c.0.s8 %v1631
    %v1633 = vlaneseq
    %v1634 = vshrl.u32 %v1633, 7
    %v1635 = vsub.s32 %v1632, %v1634
    %v1636 = vrot.slane %v1628, %v1635
    %v1638 = vunpack.c.l.s4 1966171168
    %v1639 = vunpack.c.0.s8 %v1638
    %v1640 = vlaneseq
    %v1641 = vshrl.u32 %v1640, 7
    %v1642 = vsub.s32 %v1639, %v1641
    %v1643 = vrot.slane %v1629, %v1642
    %v1644 = vcombine.low %v1636, %v1643
    %v1646 = vunpack.c.l.s4 1966171168
    %v1647 = vunpack.c.0.s8 %v1646
    %v1648 = vlaneseq
    %v1649 = vshrl.u32 %v1648, 7
    %v1650 = vsub.s32 %v1647, %v1649
    %v1651 = vrot.slane %v1644, %v1650
    %v1653 = vadd.f32 %v1481, %v1651
    %v1654 = vxor.u32 %v1653, 2147483648
    %v1655 = vmul.f32 %v1654, 1.442695
    %v1656 = vpow.pop %v1655
    %v1657 = vadd.f32 %v1656, 1.0
    %v1658 = vrcp.pop %v1657
    %v1659 = vmul.f32 1.0, %v1658
    %v1661 = vrot.slane %v1653, 3
    %v1663 = vtanh.pop %v1661
    %v1665 = vrot.slane %v1659, 1
    %v1667 = vmul.f32 %v1665, %v1309
    %v1668 = vmul.f32 %v1659, %v1663
    %v1669 = vadd.f32 %v1667, %v1668
    %v1670 = vtanh.pop %v1669
    %v1671 = vrot.slane %v1659, 2
    %v1673 = vmul.f32 %v1671, %v1670
    %1674 = vmatprep.subr.mxu0 %v865
    %1675 = vmatpush1.msra.mxu0 %v864
    %1676 = vmatprep.subr.mxu0 %v861
    %1677 = vmatpush1.msra.mxu0 %v860
    %1678 = vmatprep.subr.mxu0 %v857
    %1679 = vmatpush1.msra.mxu0 %v856
    %1680 = vmatprep.subr.mxu0 %v853
    %1681 = vmatpush1.msra.mxu0 %v852
    %1682 = vmatprep.subr.mxu0 %v849
    %1683 = vmatpush1.msra.mxu0 %v848
    %1684 = vmatprep.subr.mxu0 %v845
    %1685 = vmatpush1.msra.mxu0 %v844
    %1686 = vmatprep.subr.mxu0 %v841
    %1687 = vmatpush1.msra.mxu0 %v840
    %1688 = vmatprep.subr.mxu0 %v837
    %1689 = vmatpush1.msra.mxu0 %v836
    %1690 = vmatprep.subr.mxu0 %v833
    %1691 = vmatpush1.msra.mxu0 %v832
    %1692 = vmatprep.subr.mxu0 %v829
    %1693 = vmatpush1.msra.mxu0 %v828
    %1694 = vmatprep.subr.mxu0 %v825
    %1695 = vmatpush1.msra.mxu0 %v824
    %1696 = vmatprep.subr.mxu0 %v821
    %1697 = vmatpush1.msra.mxu0 %v820
    %1698 = vmatprep.subr.mxu0 %v817
    %1699 = vmatpush1.msra.mxu0 %v816
    %1700 = vmatprep.subr.mxu0 %v813
    %1701 = vmatpush1.msra.mxu0 %v812
    %1702 = vmatprep.subr.mxu0 %v809
    %1703 = vmatpush1.msra.mxu0 %v808
    %1704 = vmatprep.subr.mxu0 %v805
    %1705 = vmatpush1.msra.mxu0 %v804
    %1706 = vmatprep.subr.mxu0 %v929
    %1707 = vmatpush2.msra.mxu0 %v928
    %1708 = vmatprep.subr.mxu0 %v925
    %1709 = vmatpush2.msra.mxu0 %v924
    %1710 = vmatprep.subr.mxu0 %v921
    %1711 = vmatpush2.msra.mxu0 %v920
    %1712 = vmatprep.subr.mxu0 %v917
    %1713 = vmatpush2.msra.mxu0 %v916
    %1714 = vmatprep.subr.mxu0 %v913
    %1715 = vmatpush2.msra.mxu0 %v912
    %1716 = vmatprep.subr.mxu0 %v909
    %1717 = vmatpush2.msra.mxu0 %v908
    %1718 = vmatprep.subr.mxu0 %v905
    %1719 = vmatpush2.msra.mxu0 %v904
    %1720 = vmatprep.subr.mxu0 %v901
    %1721 = vmatpush2.msra.mxu0 %v900
    %1722 = vmatprep.subr.mxu0 %v897
    %1723 = vmatpush2.msra.mxu0 %v896
    %1724 = vmatprep.subr.mxu0 %v893
    %1725 = vmatpush2.msra.mxu0 %v892
    %1726 = vmatprep.subr.mxu0 %v889
    %1727 = vmatpush2.msra.mxu0 %v888
    %1728 = vmatprep.subr.mxu0 %v885
    %1729 = vmatpush2.msra.mxu0 %v884
    %1730 = vmatprep.subr.mxu0 %v881
    %1731 = vmatpush2.msra.mxu0 %v880
    %1732 = vmatprep.subr.mxu0 %v877
    %1733 = vmatpush2.msra.mxu0 %v876
    %1734 = vmatprep.subr.mxu0 %v873
    %1735 = vmatpush2.msra.mxu0 %v872
    %1736 = vmatprep.subr.mxu0 %v869
    %1737 = vmatpush2.msra.mxu0 %v868
    %1738 = vmatprep.mubr.f32.mxu0 %v1479
    %1739 = vmatmul.mubr.f32.gmra.mxu0 %v1673
    %v1740 = vpop.f32.mrf.mxu0
    %v1741 = vadd.f32 %v937, %v1740
    %v1742 = vpop.f32.mrf.mxu0
    %v1743 = vadd.f32 %v941, %v1742
    %1744 = vdwg.mxu0
    %1745 = vmatprep.subr.mxu0 %v867
    %1746 = vmatpush1.msra.mxu0 %v866
    %1747 = vmatprep.subr.mxu0 %v863
    %1748 = vmatpush1.msra.mxu0 %v862
    %1749 = vmatprep.subr.mxu0 %v859
    %1750 = vmatpush1.msra.mxu0 %v858
    %1751 = vmatprep.subr.mxu0 %v855
    %1752 = vmatpush1.msra.mxu0 %v854
    %1753 = vmatprep.subr.mxu0 %v851
    %1754 = vmatpush1.msra.mxu0 %v850
    %1755 = vmatprep.subr.mxu0 %v847
    %1756 = vmatpush1.msra.mxu0 %v846
    %1757 = vmatprep.subr.mxu0 %v843
    %1758 = vmatpush1.msra.mxu0 %v842
    %1759 = vmatprep.subr.mxu0 %v839
    %1760 = vmatpush1.msra.mxu0 %v838
    %1761 = vmatprep.subr.mxu0 %v835
    %1762 = vmatpush1.msra.mxu0 %v834
    %1763 = vmatprep.subr.mxu0 %v831
    %1764 = vmatpush1.msra.mxu0 %v830
    %1765 = vmatprep.subr.mxu0 %v827
    %1766 = vmatpush1.msra.mxu0 %v826
    %1767 = vmatprep.subr.mxu0 %v823
    %1768 = vmatpush1.msra.mxu0 %v822
    %1769 = vmatprep.subr.mxu0 %v819
    %1770 = vmatpush1.msra.mxu0 %v818
    %1771 = vmatprep.subr.mxu0 %v815
    %1772 = vmatpush1.msra.mxu0 %v814
    %1773 = vmatprep.subr.mxu0 %v811
    %1774 = vmatpush1.msra.mxu0 %v810
    %1775 = vmatprep.subr.mxu0 %v807
    %1776 = vmatpush1.msra.mxu0 %v806
    %1777 = vmatprep.subr.mxu0 %v931
    %1778 = vmatpush2.msra.mxu0 %v930
    %1779 = vmatprep.subr.mxu0 %v927
    %1780 = vmatpush2.msra.mxu0 %v926
    %1781 = vmatprep.subr.mxu0 %v923
    %1782 = vmatpush2.msra.mxu0 %v922
    %1783 = vmatprep.subr.mxu0 %v919
    %1784 = vmatpush2.msra.mxu0 %v918
    %1785 = vmatprep.subr.mxu0 %v915
    %1786 = vmatpush2.msra.mxu0 %v914
    %1787 = vmatprep.subr.mxu0 %v911
    %1788 = vmatpush2.msra.mxu0 %v910
    %1789 = vmatprep.subr.mxu0 %v907
    %1790 = vmatpush2.msra.mxu0 %v906
    %1791 = vmatprep.subr.mxu0 %v903
    %1792 = vmatpush2.msra.mxu0 %v902
    %1793 = vmatprep.subr.mxu0 %v899
    %1794 = vmatpush2.msra.mxu0 %v898
    %1795 = vmatprep.subr.mxu0 %v895
    %1796 = vmatpush2.msra.mxu0 %v894
    %1797 = vmatprep.subr.mxu0 %v891
    %1798 = vmatpush2.msra.mxu0 %v890
    %1799 = vmatprep.subr.mxu0 %v887
    %1800 = vmatpush2.msra.mxu0 %v886
    %1801 = vmatprep.subr.mxu0 %v883
    %1802 = vmatpush2.msra.mxu0 %v882
    %1803 = vmatprep.subr.mxu0 %v879
    %1804 = vmatpush2.msra.mxu0 %v878
    %1805 = vmatprep.subr.mxu0 %v875
    %1806 = vmatpush2.msra.mxu0 %v874
    %1807 = vmatprep.subr.mxu0 %v871
    %1808 = vmatpush2.msra.mxu0 %v870
    %1809 = vmatprep.mubr.f32.mxu0 %v1479
    %1810 = vmatmul.mubr.f32.gmra.mxu0 %v1673
    %v1811 = vpop.f32.mrf.mxu0
    %v1812 = vadd.f32 %v945, %v1811
    %v1813 = vpop.f32.mrf.mxu0
    %v1814 = vadd.f32 %v949, %v1813
    %1815 = vdwg.mxu0
    %v1816 = vxor.u32 %v1741, 2147483648
    %v1817 = vxor.u32 %v1743, 2147483648
    %v1818 = vxor.u32 %v1812, 2147483648
    %v1819 = vmul.f32 %v1816, 1.442695
    %v1820 = vpow.pop %v1819
    %v1821 = vmul.f32 %v1817, 1.442695
    %v1822 = vpow.pop %v1821
    %v1823 = vmul.f32 %v1818, 1.442695
    %v1824 = vpow.pop %v1823
    %v1825 = vadd.f32 %v1820, 1.0
    %v1826 = vadd.f32 %v1822, 1.0
    %v1827 = vadd.f32 %v1824, 1.0
    %v1828 = vrcp.pop %v1825
    %v1829 = vmul.f32 1.0, %v1828
    %v1830 = vrcp.pop %v1826
    %v1831 = vmul.f32 1.0, %v1830
    %v1832 = vrcp.pop %v1827
    %v1833 = vmul.f32 1.0, %v1832
    %v1834 = vtanh.pop %v1814
    %v1835 = vmul.f32 %v1831, %v1477
    %v1836 = vmul.f32 %v1829, %v1834
    %v1837 = vadd.f32 %v1835, %v1836
    %v1838 = vtanh.pop %v1837
    %v1839 = vmul.f32 %v1833, %v1838
    %s1840 = scalar_lea.vmem [#allocation2], 3
    %v1841 = vld [vmem:[%s1840] ss:$8 sm:$0xf]
    %1842 = vmatprep.subr.mxu0 %v609
    %1843 = vmatpush1.msra.mxu0 %v608
    %1844 = vmatprep.subr.mxu0 %v605
    %1845 = vmatpush1.msra.mxu0 %v604
    %1846 = vmatprep.subr.mxu0 %v601
    %1847 = vmatpush1.msra.mxu0 %v600
    %1848 = vmatprep.subr.mxu0 %v597
    %1849 = vmatpush1.msra.mxu0 %v596
    %1850 = vmatprep.subr.mxu0 %v593
    %1851 = vmatpush1.msra.mxu0 %v592
    %1852 = vmatprep.subr.mxu0 %v589
    %1853 = vmatpush1.msra.mxu0 %v588
    %1854 = vmatprep.subr.mxu0 %v585
    %1855 = vmatpush1.msra.mxu0 %v584
    %1856 = vmatprep.subr.mxu0 %v581
    %1857 = vmatpush1.msra.mxu0 %v580
    %1858 = vmatprep.subr.mxu0 %v577
    %1859 = vmatpush1.msra.mxu0 %v576
    %1860 = vmatprep.subr.mxu0 %v573
    %1861 = vmatpush1.msra.mxu0 %v572
    %1862 = vmatprep.subr.mxu0 %v569
    %1863 = vmatpush1.msra.mxu0 %v568
    %1864 = vmatprep.subr.mxu0 %v565
    %1865 = vmatpush1.msra.mxu0 %v564
    %1866 = vmatprep.subr.mxu0 %v561
    %1867 = vmatpush1.msra.mxu0 %v560
    %1868 = vmatprep.subr.mxu0 %v557
    %1869 = vmatpush1.msra.mxu0 %v556
    %1870 = vmatprep.subr.mxu0 %v553
    %1871 = vmatpush1.msra.mxu0 %v552
    %1872 = vmatprep.subr.mxu0 %v549
    %1873 = vmatpush1.msra.mxu0 %v548
    %1874 = vmatprep.subr.mxu0 0.0
    %1875 = vmatpush2.msra.mxu0 0.0
    %1876 = vmatprep.subr.mxu0 0.0
    %1877 = vmatpush2.msra.mxu0 0.0
    %1878 = vmatprep.subr.mxu0 0.0
    %1879 = vmatpush2.msra.mxu0 0.0
    %1880 = vmatprep.subr.mxu0 0.0
    %1881 = vmatpush2.msra.mxu0 0.0
    %1882 = vmatprep.subr.mxu0 0.0
    %1883 = vmatpush2.msra.mxu0 0.0
    %1884 = vmatprep.subr.mxu0 0.0
    %1885 = vmatpush2.msra.mxu0 0.0
    %1886 = vmatprep.subr.mxu0 0.0
    %1887 = vmatpush2.msra.mxu0 0.0
    %1888 = vmatprep.subr.mxu0 0.0
    %1889 = vmatpush2.msra.mxu0 0.0
    %1890 = vmatprep.subr.mxu0 0.0
    %1891 = vmatpush2.msra.mxu0 0.0
    %1892 = vmatprep.subr.mxu0 0.0
    %1893 = vmatpush2.msra.mxu0 0.0
    %1894 = vmatprep.subr.mxu0 0.0
    %1895 = vmatpush2.msra.mxu0 0.0
    %1896 = vmatprep.subr.mxu0 0.0
    %1897 = vmatpush2.msra.mxu0 0.0
    %1898 = vmatprep.subr.mxu0 0.0
    %1899 = vmatpush2.msra.mxu0 0.0
    %1900 = vmatprep.subr.mxu0 0.0
    %1901 = vmatpush2.msra.mxu0 0.0
    %1902 = vmatprep.subr.mxu0 0.0
    %1903 = vmatpush2.msra.mxu0 0.0
    %1904 = vmatprep.subr.mxu0 0.0
    %1905 = vmatpush2.msra.mxu0 0.0
    %1906 = vmatprep.mubr.f32.mxu0 0.0
    %1907 = vmatmul.mubr.f32.gmra.mxu0 %v1673
    %v1908 = vpop.f32.mrf.mxu0
    %v1909 = vadd.f32 0.0, %v1908
    %v1910 = vpop.f32.mrf.mxu0
    %v1911 = vadd.f32 0.0, %v1910
    %1912 = vdwg.mxu0
    %1913 = vmatprep.subr.mxu0 %v611
    %1914 = vmatpush1.msra.mxu0 %v610
    %1915 = vmatprep.subr.mxu0 %v607
    %1916 = vmatpush1.msra.mxu0 %v606
    %1917 = vmatprep.subr.mxu0 %v603
    %1918 = vmatpush1.msra.mxu0 %v602
    %1919 = vmatprep.subr.mxu0 %v599
    %1920 = vmatpush1.msra.mxu0 %v598
    %1921 = vmatprep.subr.mxu0 %v595
    %1922 = vmatpush1.msra.mxu0 %v594
    %1923 = vmatprep.subr.mxu0 %v591
    %1924 = vmatpush1.msra.mxu0 %v590
    %1925 = vmatprep.subr.mxu0 %v587
    %1926 = vmatpush1.msra.mxu0 %v586
    %1927 = vmatprep.subr.mxu0 %v583
    %1928 = vmatpush1.msra.mxu0 %v582
    %1929 = vmatprep.subr.mxu0 %v579
    %1930 = vmatpush1.msra.mxu0 %v578
    %1931 = vmatprep.subr.mxu0 %v575
    %1932 = vmatpush1.msra.mxu0 %v574
    %1933 = vmatprep.subr.mxu0 %v571
    %1934 = vmatpush1.msra.mxu0 %v570
    %1935 = vmatprep.subr.mxu0 %v567
    %1936 = vmatpush1.msra.mxu0 %v566
    %1937 = vmatprep.subr.mxu0 %v563
    %1938 = vmatpush1.msra.mxu0 %v562
    %1939 = vmatprep.subr.mxu0 %v559
    %1940 = vmatpush1.msra.mxu0 %v558
    %1941 = vmatprep.subr.mxu0 %v555
    %1942 = vmatpush1.msra.mxu0 %v554
    %1943 = vmatprep.subr.mxu0 %v551
    %1944 = vmatpush1.msra.mxu0 %v550
    %1945 = vmatprep.subr.mxu0 0.0
    %1946 = vmatpush2.msra.mxu0 0.0
    %1947 = vmatprep.subr.mxu0 0.0
    %1948 = vmatpush2.msra.mxu0 0.0
    %1949 = vmatprep.subr.mxu0 0.0
    %1950 = vmatpush2.msra.mxu0 0.0
    %1951 = vmatprep.subr.mxu0 0.0
    %1952 = vmatpush2.msra.mxu0 0.0
    %1953 = vmatprep.subr.mxu0 0.0
    %1954 = vmatpush2.msra.mxu0 0.0
    %1955 = vmatprep.subr.mxu0 0.0
    %1956 = vmatpush2.msra.mxu0 0.0
    %1957 = vmatprep.subr.mxu0 0.0
    %1958 = vmatpush2.msra.mxu0 0.0
    %1959 = vmatprep.subr.mxu0 0.0
    %1960 = vmatpush2.msra.mxu0 0.0
    %1961 = vmatprep.subr.mxu0 0.0
    %1962 = vmatpush2.msra.mxu0 0.0
    %1963 = vmatprep.subr.mxu0 0.0
    %1964 = vmatpush2.msra.mxu0 0.0
    %1965 = vmatprep.subr.mxu0 0.0
    %1966 = vmatpush2.msra.mxu0 0.0
    %1967 = vmatprep.subr.mxu0 0.0
    %1968 = vmatpush2.msra.mxu0 0.0
    %1969 = vmatprep.subr.mxu0 0.0
    %1970 = vmatpush2.msra.mxu0 0.0
    %1971 = vmatprep.subr.mxu0 0.0
    %1972 = vmatpush2.msra.mxu0 0.0
    %1973 = vmatprep.subr.mxu0 0.0
    %1974 = vmatpush2.msra.mxu0 0.0
    %1975 = vmatprep.subr.mxu0 0.0
    %1976 = vmatpush2.msra.mxu0 0.0
    %1977 = vmatprep.mubr.f32.mxu0 0.0
    %1978 = vmatmul.mubr.f32.gmra.mxu0 %v1673
    %v1979 = vpop.f32.mrf.mxu0
    %v1980 = vadd.f32 0.0, %v1979
    %v1981 = vpop.f32.mrf.mxu0
    %v1982 = vadd.f32 0.0, %v1981
    %1983 = vdwg.mxu0
    %v1988 = vcombine.low %v1909, %v1911
    %v1989 = vcombine.low %v1980, %v1982
    %v1991 = vunpack.c.l.s4 1966171168
    %v1992 = vunpack.c.0.s8 %v1991
    %v1993 = vlaneseq
    %v1994 = vshrl.u32 %v1993, 7
    %v1995 = vsub.s32 %v1992, %v1994
    %v1996 = vrot.slane %v1988, %v1995
    %v1998 = vunpack.c.l.s4 1966171168
    %v1999 = vunpack.c.0.s8 %v1998
    %v2000 = vlaneseq
    %v2001 = vshrl.u32 %v2000, 7
    %v2002 = vsub.s32 %v1999, %v2001
    %v2003 = vrot.slane %v1989, %v2002
    %v2004 = vcombine.low %v1996, %v2003
    %v2006 = vunpack.c.l.s4 1966171168
    %v2007 = vunpack.c.0.s8 %v2006
    %v2008 = vlaneseq
    %v2009 = vshrl.u32 %v2008, 7
    %v2010 = vsub.s32 %v2007, %v2009
    %v2011 = vrot.slane %v2004, %v2010
    %v2013 = vadd.f32 %v1841, %v2011
    %v2014 = vxor.u32 %v2013, 2147483648
    %v2015 = vmul.f32 %v2014, 1.442695
    %v2016 = vpow.pop %v2015
    %v2017 = vadd.f32 %v2016, 1.0
    %v2018 = vrcp.pop %v2017
    %v2019 = vmul.f32 1.0, %v2018
    %v2021 = vrot.slane %v2013, 3
    %v2023 = vtanh.pop %v2021
    %v2025 = vrot.slane %v2019, 1
    %v2027 = vmul.f32 %v2025, %v1669
    %v2028 = vmul.f32 %v2019, %v2023
    %v2029 = vadd.f32 %v2027, %v2028
    %v2030 = vtanh.pop %v2029
    %v2031 = vrot.slane %v2019, 2
    %v2033 = vmul.f32 %v2031, %v2030
    %2034 = vmatprep.subr.mxu0 %v865
    %2035 = vmatpush1.msra.mxu0 %v864
    %2036 = vmatprep.subr.mxu0 %v861
    %2037 = vmatpush1.msra.mxu0 %v860
    %2038 = vmatprep.subr.mxu0 %v857
    %2039 = vmatpush1.msra.mxu0 %v856
    %2040 = vmatprep.subr.mxu0 %v853
    %2041 = vmatpush1.msra.mxu0 %v852
    %2042 = vmatprep.subr.mxu0 %v849
    %2043 = vmatpush1.msra.mxu0 %v848
    %2044 = vmatprep.subr.mxu0 %v845
    %2045 = vmatpush1.msra.mxu0 %v844
    %2046 = vmatprep.subr.mxu0 %v841
    %2047 = vmatpush1.msra.mxu0 %v840
    %2048 = vmatprep.subr.mxu0 %v837
    %2049 = vmatpush1.msra.mxu0 %v836
    %2050 = vmatprep.subr.mxu0 %v833
    %2051 = vmatpush1.msra.mxu0 %v832
    %2052 = vmatprep.subr.mxu0 %v829
    %2053 = vmatpush1.msra.mxu0 %v828
    %2054 = vmatprep.subr.mxu0 %v825
    %2055 = vmatpush1.msra.mxu0 %v824
    %2056 = vmatprep.subr.mxu0 %v821
    %2057 = vmatpush1.msra.mxu0 %v820
    %2058 = vmatprep.subr.mxu0 %v817
    %2059 = vmatpush1.msra.mxu0 %v816
    %2060 = vmatprep.subr.mxu0 %v813
    %2061 = vmatpush1.msra.mxu0 %v812
    %2062 = vmatprep.subr.mxu0 %v809
    %2063 = vmatpush1.msra.mxu0 %v808
    %2064 = vmatprep.subr.mxu0 %v805
    %2065 = vmatpush1.msra.mxu0 %v804
    %2066 = vmatprep.subr.mxu0 %v929
    %2067 = vmatpush2.msra.mxu0 %v928
    %2068 = vmatprep.subr.mxu0 %v925
    %2069 = vmatpush2.msra.mxu0 %v924
    %2070 = vmatprep.subr.mxu0 %v921
    %2071 = vmatpush2.msra.mxu0 %v920
    %2072 = vmatprep.subr.mxu0 %v917
    %2073 = vmatpush2.msra.mxu0 %v916
    %2074 = vmatprep.subr.mxu0 %v913
    %2075 = vmatpush2.msra.mxu0 %v912
    %2076 = vmatprep.subr.mxu0 %v909
    %2077 = vmatpush2.msra.mxu0 %v908
    %2078 = vmatprep.subr.mxu0 %v905
    %2079 = vmatpush2.msra.mxu0 %v904
    %2080 = vmatprep.subr.mxu0 %v901
    %2081 = vmatpush2.msra.mxu0 %v900
    %2082 = vmatprep.subr.mxu0 %v897
    %2083 = vmatpush2.msra.mxu0 %v896
    %2084 = vmatprep.subr.mxu0 %v893
    %2085 = vmatpush2.msra.mxu0 %v892
    %2086 = vmatprep.subr.mxu0 %v889
    %2087 = vmatpush2.msra.mxu0 %v888
    %2088 = vmatprep.subr.mxu0 %v885
    %2089 = vmatpush2.msra.mxu0 %v884
    %2090 = vmatprep.subr.mxu0 %v881
    %2091 = vmatpush2.msra.mxu0 %v880
    %2092 = vmatprep.subr.mxu0 %v877
    %2093 = vmatpush2.msra.mxu0 %v876
    %2094 = vmatprep.subr.mxu0 %v873
    %2095 = vmatpush2.msra.mxu0 %v872
    %2096 = vmatprep.subr.mxu0 %v869
    %2097 = vmatpush2.msra.mxu0 %v868
    %2098 = vmatprep.mubr.f32.mxu0 %v1839
    %2099 = vmatmul.mubr.f32.gmra.mxu0 %v2033
    %v2100 = vpop.f32.mrf.mxu0
    %v2101 = vadd.f32 %v937, %v2100
    %v2102 = vpop.f32.mrf.mxu0
    %v2103 = vadd.f32 %v941, %v2102
    %2104 = vdwg.mxu0
    %2105 = vmatprep.subr.mxu0 %v867
    %2106 = vmatpush1.msra.mxu0 %v866
    %2107 = vmatprep.subr.mxu0 %v863
    %2108 = vmatpush1.msra.mxu0 %v862
    %2109 = vmatprep.subr.mxu0 %v859
    %2110 = vmatpush1.msra.mxu0 %v858
    %2111 = vmatprep.subr.mxu0 %v855
    %2112 = vmatpush1.msra.mxu0 %v854
    %2113 = vmatprep.subr.mxu0 %v851
    %2114 = vmatpush1.msra.mxu0 %v850
    %2115 = vmatprep.subr.mxu0 %v847
    %2116 = vmatpush1.msra.mxu0 %v846
    %2117 = vmatprep.subr.mxu0 %v843
    %2118 = vmatpush1.msra.mxu0 %v842
    %2119 = vmatprep.subr.mxu0 %v839
    %2120 = vmatpush1.msra.mxu0 %v838
    %2121 = vmatprep.subr.mxu0 %v835
    %2122 = vmatpush1.msra.mxu0 %v834
    %2123 = vmatprep.subr.mxu0 %v831
    %2124 = vmatpush1.msra.mxu0 %v830
    %2125 = vmatprep.subr.mxu0 %v827
    %2126 = vmatpush1.msra.mxu0 %v826
    %2127 = vmatprep.subr.mxu0 %v823
    %2128 = vmatpush1.msra.mxu0 %v822
    %2129 = vmatprep.subr.mxu0 %v819
    %2130 = vmatpush1.msra.mxu0 %v818
    %2131 = vmatprep.subr.mxu0 %v815
    %2132 = vmatpush1.msra.mxu0 %v814
    %2133 = vmatprep.subr.mxu0 %v811
    %2134 = vmatpush1.msra.mxu0 %v810
    %2135 = vmatprep.subr.mxu0 %v807
    %2136 = vmatpush1.msra.mxu0 %v806
    %2137 = vmatprep.subr.mxu0 %v931
    %2138 = vmatpush2.msra.mxu0 %v930
    %2139 = vmatprep.subr.mxu0 %v927
    %2140 = vmatpush2.msra.mxu0 %v926
    %2141 = vmatprep.subr.mxu0 %v923
    %2142 = vmatpush2.msra.mxu0 %v922
    %2143 = vmatprep.subr.mxu0 %v919
    %2144 = vmatpush2.msra.mxu0 %v918
    %2145 = vmatprep.subr.mxu0 %v915
    %2146 = vmatpush2.msra.mxu0 %v914
    %2147 = vmatprep.subr.mxu0 %v911
    %2148 = vmatpush2.msra.mxu0 %v910
    %2149 = vmatprep.subr.mxu0 %v907
    %2150 = vmatpush2.msra.mxu0 %v906
    %2151 = vmatprep.subr.mxu0 %v903
    %2152 = vmatpush2.msra.mxu0 %v902
    %2153 = vmatprep.subr.mxu0 %v899
    %2154 = vmatpush2.msra.mxu0 %v898
    %2155 = vmatprep.subr.mxu0 %v895
    %2156 = vmatpush2.msra.mxu0 %v894
    %2157 = vmatprep.subr.mxu0 %v891
    %2158 = vmatpush2.msra.mxu0 %v890
    %2159 = vmatprep.subr.mxu0 %v887
    %2160 = vmatpush2.msra.mxu0 %v886
    %2161 = vmatprep.subr.mxu0 %v883
    %2162 = vmatpush2.msra.mxu0 %v882
    %2163 = vmatprep.subr.mxu0 %v879
    %2164 = vmatpush2.msra.mxu0 %v878
    %2165 = vmatprep.subr.mxu0 %v875
    %2166 = vmatpush2.msra.mxu0 %v874
    %2167 = vmatprep.subr.mxu0 %v871
    %2168 = vmatpush2.msra.mxu0 %v870
    %2169 = vmatprep.mubr.f32.mxu0 %v1839
    %2170 = vmatmul.mubr.f32.gmra.mxu0 %v2033
    %v2171 = vpop.f32.mrf.mxu0
    %v2172 = vadd.f32 %v945, %v2171
    %v2173 = vpop.f32.mrf.mxu0
    %v2174 = vadd.f32 %v949, %v2173
    %2175 = vdwg.mxu0
    %v2176 = vxor.u32 %v2101, 2147483648
    %v2177 = vxor.u32 %v2103, 2147483648
    %v2178 = vxor.u32 %v2172, 2147483648
    %v2179 = vmul.f32 %v2176, 1.442695
    %v2180 = vpow.pop %v2179
    %v2181 = vmul.f32 %v2177, 1.442695
    %v2182 = vpow.pop %v2181
    %v2183 = vmul.f32 %v2178, 1.442695
    %v2184 = vpow.pop %v2183
    %v2185 = vadd.f32 %v2180, 1.0
    %v2186 = vadd.f32 %v2182, 1.0
    %v2187 = vadd.f32 %v2184, 1.0
    %v2188 = vrcp.pop %v2185
    %v2189 = vmul.f32 1.0, %v2188
    %v2190 = vrcp.pop %v2186
    %v2191 = vmul.f32 1.0, %v2190
    %v2192 = vrcp.pop %v2187
    %v2193 = vmul.f32 1.0, %v2192
    %v2194 = vtanh.pop %v2174
    %v2195 = vmul.f32 %v2191, %v1837
    %v2196 = vmul.f32 %v2189, %v2194
    %v2197 = vadd.f32 %v2195, %v2196
    %v2198 = vtanh.pop %v2197
    %v2199 = vmul.f32 %v2193, %v2198
    %s2200 = scalar_lea.vmem [#allocation2], 4
    %v2201 = vld [vmem:[%s2200] ss:$8 sm:$0xf]
    %2202 = vmatprep.subr.mxu0 %v609
    %2203 = vmatpush1.msra.mxu0 %v608
    %2204 = vmatprep.subr.mxu0 %v605
    %2205 = vmatpush1.msra.mxu0 %v604
    %2206 = vmatprep.subr.mxu0 %v601
    %2207 = vmatpush1.msra.mxu0 %v600
    %2208 = vmatprep.subr.mxu0 %v597
    %2209 = vmatpush1.msra.mxu0 %v596
    %2210 = vmatprep.subr.mxu0 %v593
    %2211 = vmatpush1.msra.mxu0 %v592
    %2212 = vmatprep.subr.mxu0 %v589
    %2213 = vmatpush1.msra.mxu0 %v588
    %2214 = vmatprep.subr.mxu0 %v585
    %2215 = vmatpush1.msra.mxu0 %v584
    %2216 = vmatprep.subr.mxu0 %v581
    %2217 = vmatpush1.msra.mxu0 %v580
    %2218 = vmatprep.subr.mxu0 %v577
    %2219 = vmatpush1.msra.mxu0 %v576
    %2220 = vmatprep.subr.mxu0 %v573
    %2221 = vmatpush1.msra.mxu0 %v572
    %2222 = vmatprep.subr.mxu0 %v569
    %2223 = vmatpush1.msra.mxu0 %v568
    %2224 = vmatprep.subr.mxu0 %v565
    %2225 = vmatpush1.msra.mxu0 %v564
    %2226 = vmatprep.subr.mxu0 %v561
    %2227 = vmatpush1.msra.mxu0 %v560
    %2228 = vmatprep.subr.mxu0 %v557
    %2229 = vmatpush1.msra.mxu0 %v556
    %2230 = vmatprep.subr.mxu0 %v553
    %2231 = vmatpush1.msra.mxu0 %v552
    %2232 = vmatprep.subr.mxu0 %v549
    %2233 = vmatpush1.msra.mxu0 %v548
    %2234 = vmatprep.subr.mxu0 0.0
    %2235 = vmatpush2.msra.mxu0 0.0
    %2236 = vmatprep.subr.mxu0 0.0
    %2237 = vmatpush2.msra.mxu0 0.0
    %2238 = vmatprep.subr.mxu0 0.0
    %2239 = vmatpush2.msra.mxu0 0.0
    %2240 = vmatprep.subr.mxu0 0.0
    %2241 = vmatpush2.msra.mxu0 0.0
    %2242 = vmatprep.subr.mxu0 0.0
    %2243 = vmatpush2.msra.mxu0 0.0
    %2244 = vmatprep.subr.mxu0 0.0
    %2245 = vmatpush2.msra.mxu0 0.0
    %2246 = vmatprep.subr.mxu0 0.0
    %2247 = vmatpush2.msra.mxu0 0.0
    %2248 = vmatprep.subr.mxu0 0.0
    %2249 = vmatpush2.msra.mxu0 0.0
    %2250 = vmatprep.subr.mxu0 0.0
    %2251 = vmatpush2.msra.mxu0 0.0
    %2252 = vmatprep.subr.mxu0 0.0
    %2253 = vmatpush2.msra.mxu0 0.0
    %2254 = vmatprep.subr.mxu0 0.0
    %2255 = vmatpush2.msra.mxu0 0.0
    %2256 = vmatprep.subr.mxu0 0.0
    %2257 = vmatpush2.msra.mxu0 0.0
    %2258 = vmatprep.subr.mxu0 0.0
    %2259 = vmatpush2.msra.mxu0 0.0
    %2260 = vmatprep.subr.mxu0 0.0
    %2261 = vmatpush2.msra.mxu0 0.0
    %2262 = vmatprep.subr.mxu0 0.0
    %2263 = vmatpush2.msra.mxu0 0.0
    %2264 = vmatprep.subr.mxu0 0.0
    %2265 = vmatpush2.msra.mxu0 0.0
    %2266 = vmatprep.mubr.f32.mxu0 0.0
    %2267 = vmatmul.mubr.f32.gmra.mxu0 %v2033
    %v2268 = vpop.f32.mrf.mxu0
    %v2269 = vadd.f32 0.0, %v2268
    %v2270 = vpop.f32.mrf.mxu0
    %v2271 = vadd.f32 0.0, %v2270
    %2272 = vdwg.mxu0
    %2273 = vmatprep.subr.mxu0 %v611
    %2274 = vmatpush1.msra.mxu0 %v610
    %2275 = vmatprep.subr.mxu0 %v607
    %2276 = vmatpush1.msra.mxu0 %v606
    %2277 = vmatprep.subr.mxu0 %v603
    %2278 = vmatpush1.msra.mxu0 %v602
    %2279 = vmatprep.subr.mxu0 %v599
    %2280 = vmatpush1.msra.mxu0 %v598
    %2281 = vmatprep.subr.mxu0 %v595
    %2282 = vmatpush1.msra.mxu0 %v594
    %2283 = vmatprep.subr.mxu0 %v591
    %2284 = vmatpush1.msra.mxu0 %v590
    %2285 = vmatprep.subr.mxu0 %v587
    %2286 = vmatpush1.msra.mxu0 %v586
    %2287 = vmatprep.subr.mxu0 %v583
    %2288 = vmatpush1.msra.mxu0 %v582
    %2289 = vmatprep.subr.mxu0 %v579
    %2290 = vmatpush1.msra.mxu0 %v578
    %2291 = vmatprep.subr.mxu0 %v575
    %2292 = vmatpush1.msra.mxu0 %v574
    %2293 = vmatprep.subr.mxu0 %v571
    %2294 = vmatpush1.msra.mxu0 %v570
    %2295 = vmatprep.subr.mxu0 %v567
    %2296 = vmatpush1.msra.mxu0 %v566
    %2297 = vmatprep.subr.mxu0 %v563
    %2298 = vmatpush1.msra.mxu0 %v562
    %2299 = vmatprep.subr.mxu0 %v559
    %2300 = vmatpush1.msra.mxu0 %v558
    %2301 = vmatprep.subr.mxu0 %v555
    %2302 = vmatpush1.msra.mxu0 %v554
    %2303 = vmatprep.subr.mxu0 %v551
    %2304 = vmatpush1.msra.mxu0 %v550
    %2305 = vmatprep.subr.mxu0 0.0
    %2306 = vmatpush2.msra.mxu0 0.0
    %2307 = vmatprep.subr.mxu0 0.0
    %2308 = vmatpush2.msra.mxu0 0.0
    %2309 = vmatprep.subr.mxu0 0.0
    %2310 = vmatpush2.msra.mxu0 0.0
    %2311 = vmatprep.subr.mxu0 0.0
    %2312 = vmatpush2.msra.mxu0 0.0
    %2313 = vmatprep.subr.mxu0 0.0
    %2314 = vmatpush2.msra.mxu0 0.0
    %2315 = vmatprep.subr.mxu0 0.0
    %2316 = vmatpush2.msra.mxu0 0.0
    %2317 = vmatprep.subr.mxu0 0.0
    %2318 = vmatpush2.msra.mxu0 0.0
    %2319 = vmatprep.subr.mxu0 0.0
    %2320 = vmatpush2.msra.mxu0 0.0
    %2321 = vmatprep.subr.mxu0 0.0
    %2322 = vmatpush2.msra.mxu0 0.0
    %2323 = vmatprep.subr.mxu0 0.0
    %2324 = vmatpush2.msra.mxu0 0.0
    %2325 = vmatprep.subr.mxu0 0.0
    %2326 = vmatpush2.msra.mxu0 0.0
    %2327 = vmatprep.subr.mxu0 0.0
    %2328 = vmatpush2.msra.mxu0 0.0
    %2329 = vmatprep.subr.mxu0 0.0
    %2330 = vmatpush2.msra.mxu0 0.0
    %2331 = vmatprep.subr.mxu0 0.0
    %2332 = vmatpush2.msra.mxu0 0.0
    %2333 = vmatprep.subr.mxu0 0.0
    %2334 = vmatpush2.msra.mxu0 0.0
    %2335 = vmatprep.subr.mxu0 0.0
    %2336 = vmatpush2.msra.mxu0 0.0
    %2337 = vmatprep.mubr.f32.mxu0 0.0
    %2338 = vmatmul.mubr.f32.gmra.mxu0 %v2033
    %v2339 = vpop.f32.mrf.mxu0
    %v2340 = vadd.f32 0.0, %v2339
    %v2341 = vpop.f32.mrf.mxu0
    %v2342 = vadd.f32 0.0, %v2341
    %2343 = vdwg.mxu0
    %v2348 = vcombine.low %v2269, %v2271
    %v2349 = vcombine.low %v2340, %v2342
    %v2351 = vunpack.c.l.s4 1966171168
    %v2352 = vunpack.c.0.s8 %v2351
    %v2353 = vlaneseq
    %v2354 = vshrl.u32 %v2353, 7
    %v2355 = vsub.s32 %v2352, %v2354
    %v2356 = vrot.slane %v2348, %v2355
    %v2358 = vunpack.c.l.s4 1966171168
    %v2359 = vunpack.c.0.s8 %v2358
    %v2360 = vlaneseq
    %v2361 = vshrl.u32 %v2360, 7
    %v2362 = vsub.s32 %v2359, %v2361
    %v2363 = vrot.slane %v2349, %v2362
    %v2364 = vcombine.low %v2356, %v2363
    %v2366 = vunpack.c.l.s4 1966171168
    %v2367 = vunpack.c.0.s8 %v2366
    %v2368 = vlaneseq
    %v2369 = vshrl.u32 %v2368, 7
    %v2370 = vsub.s32 %v2367, %v2369
    %v2371 = vrot.slane %v2364, %v2370
    %v2373 = vadd.f32 %v2201, %v2371
    %v2374 = vxor.u32 %v2373, 2147483648
    %v2375 = vmul.f32 %v2374, 1.442695
    %v2376 = vpow.pop %v2375
    %v2377 = vadd.f32 %v2376, 1.0
    %v2378 = vrcp.pop %v2377
    %v2379 = vmul.f32 1.0, %v2378
    %v2381 = vrot.slane %v2373, 3
    %v2383 = vtanh.pop %v2381
    %v2385 = vrot.slane %v2379, 1
    %v2387 = vmul.f32 %v2385, %v2029
    %v2388 = vmul.f32 %v2379, %v2383
    %v2389 = vadd.f32 %v2387, %v2388
    %v2390 = vtanh.pop %v2389
    %v2391 = vrot.slane %v2379, 2
    %v2393 = vmul.f32 %v2391, %v2390
    %2394 = vmatprep.subr.mxu0 %v865
    %2395 = vmatpush1.msra.mxu0 %v864
    %2396 = vmatprep.subr.mxu0 %v861
    %2397 = vmatpush1.msra.mxu0 %v860
    %2398 = vmatprep.subr.mxu0 %v857
    %2399 = vmatpush1.msra.mxu0 %v856
    %2400 = vmatprep.subr.mxu0 %v853
    %2401 = vmatpush1.msra.mxu0 %v852
    %2402 = vmatprep.subr.mxu0 %v849
    %2403 = vmatpush1.msra.mxu0 %v848
    %2404 = vmatprep.subr.mxu0 %v845
    %2405 = vmatpush1.msra.mxu0 %v844
    %2406 = vmatprep.subr.mxu0 %v841
    %2407 = vmatpush1.msra.mxu0 %v840
    %2408 = vmatprep.subr.mxu0 %v837
    %2409 = vmatpush1.msra.mxu0 %v836
    %2410 = vmatprep.subr.mxu0 %v833
    %2411 = vmatpush1.msra.mxu0 %v832
    %2412 = vmatprep.subr.mxu0 %v829
    %2413 = vmatpush1.msra.mxu0 %v828
    %2414 = vmatprep.subr.mxu0 %v825
    %2415 = vmatpush1.msra.mxu0 %v824
    %2416 = vmatprep.subr.mxu0 %v821
    %2417 = vmatpush1.msra.mxu0 %v820
    %2418 = vmatprep.subr.mxu0 %v817
    %2419 = vmatpush1.msra.mxu0 %v816
    %2420 = vmatprep.subr.mxu0 %v813
    %2421 = vmatpush1.msra.mxu0 %v812
    %2422 = vmatprep.subr.mxu0 %v809
    %2423 = vmatpush1.msra.mxu0 %v808
    %2424 = vmatprep.subr.mxu0 %v805
    %2425 = vmatpush1.msra.mxu0 %v804
    %2426 = vmatprep.subr.mxu0 %v929
    %2427 = vmatpush2.msra.mxu0 %v928
    %2428 = vmatprep.subr.mxu0 %v925
    %2429 = vmatpush2.msra.mxu0 %v924
    %2430 = vmatprep.subr.mxu0 %v921
    %2431 = vmatpush2.msra.mxu0 %v920
    %2432 = vmatprep.subr.mxu0 %v917
    %2433 = vmatpush2.msra.mxu0 %v916
    %2434 = vmatprep.subr.mxu0 %v913
    %2435 = vmatpush2.msra.mxu0 %v912
    %2436 = vmatprep.subr.mxu0 %v909
    %2437 = vmatpush2.msra.mxu0 %v908
    %2438 = vmatprep.subr.mxu0 %v905
    %2439 = vmatpush2.msra.mxu0 %v904
    %2440 = vmatprep.subr.mxu0 %v901
    %2441 = vmatpush2.msra.mxu0 %v900
    %2442 = vmatprep.subr.mxu0 %v897
    %2443 = vmatpush2.msra.mxu0 %v896
    %2444 = vmatprep.subr.mxu0 %v893
    %2445 = vmatpush2.msra.mxu0 %v892
    %2446 = vmatprep.subr.mxu0 %v889
    %2447 = vmatpush2.msra.mxu0 %v888
    %2448 = vmatprep.subr.mxu0 %v885
    %2449 = vmatpush2.msra.mxu0 %v884
    %2450 = vmatprep.subr.mxu0 %v881
    %2451 = vmatpush2.msra.mxu0 %v880
    %2452 = vmatprep.subr.mxu0 %v877
    %2453 = vmatpush2.msra.mxu0 %v876
    %2454 = vmatprep.subr.mxu0 %v873
    %2455 = vmatpush2.msra.mxu0 %v872
    %2456 = vmatprep.subr.mxu0 %v869
    %2457 = vmatpush2.msra.mxu0 %v868
    %2458 = vmatprep.mubr.f32.mxu0 %v2199
    %2459 = vmatmul.mubr.f32.gmra.mxu0 %v2393
    %v2460 = vpop.f32.mrf.mxu0
    %v2461 = vadd.f32 %v937, %v2460
    %v2462 = vpop.f32.mrf.mxu0
    %v2463 = vadd.f32 %v941, %v2462
    %2464 = vdwg.mxu0
    %2465 = vmatprep.subr.mxu0 %v867
    %2466 = vmatpush1.msra.mxu0 %v866
    %2467 = vmatprep.subr.mxu0 %v863
    %2468 = vmatpush1.msra.mxu0 %v862
    %2469 = vmatprep.subr.mxu0 %v859
    %2470 = vmatpush1.msra.mxu0 %v858
    %2471 = vmatprep.subr.mxu0 %v855
    %2472 = vmatpush1.msra.mxu0 %v854
    %2473 = vmatprep.subr.mxu0 %v851
    %2474 = vmatpush1.msra.mxu0 %v850
    %2475 = vmatprep.subr.mxu0 %v847
    %2476 = vmatpush1.msra.mxu0 %v846
    %2477 = vmatprep.subr.mxu0 %v843
    %2478 = vmatpush1.msra.mxu0 %v842
    %2479 = vmatprep.subr.mxu0 %v839
    %2480 = vmatpush1.msra.mxu0 %v838
    %2481 = vmatprep.subr.mxu0 %v835
    %2482 = vmatpush1.msra.mxu0 %v834
    %2483 = vmatprep.subr.mxu0 %v831
    %2484 = vmatpush1.msra.mxu0 %v830
    %2485 = vmatprep.subr.mxu0 %v827
    %2486 = vmatpush1.msra.mxu0 %v826
    %2487 = vmatprep.subr.mxu0 %v823
    %2488 = vmatpush1.msra.mxu0 %v822
    %2489 = vmatprep.subr.mxu0 %v819
    %2490 = vmatpush1.msra.mxu0 %v818
    %2491 = vmatprep.subr.mxu0 %v815
    %2492 = vmatpush1.msra.mxu0 %v814
    %2493 = vmatprep.subr.mxu0 %v811
    %2494 = vmatpush1.msra.mxu0 %v810
    %2495 = vmatprep.subr.mxu0 %v807
    %2496 = vmatpush1.msra.mxu0 %v806
    %2497 = vmatprep.subr.mxu0 %v931
    %2498 = vmatpush2.msra.mxu0 %v930
    %2499 = vmatprep.subr.mxu0 %v927
    %2500 = vmatpush2.msra.mxu0 %v926
    %2501 = vmatprep.subr.mxu0 %v923
    %2502 = vmatpush2.msra.mxu0 %v922
    %2503 = vmatprep.subr.mxu0 %v919
    %2504 = vmatpush2.msra.mxu0 %v918
    %2505 = vmatprep.subr.mxu0 %v915
    %2506 = vmatpush2.msra.mxu0 %v914
    %2507 = vmatprep.subr.mxu0 %v911
    %2508 = vmatpush2.msra.mxu0 %v910
    %2509 = vmatprep.subr.mxu0 %v907
    %2510 = vmatpush2.msra.mxu0 %v906
    %2511 = vmatprep.subr.mxu0 %v903
    %2512 = vmatpush2.msra.mxu0 %v902
    %2513 = vmatprep.subr.mxu0 %v899
    %2514 = vmatpush2.msra.mxu0 %v898
    %2515 = vmatprep.subr.mxu0 %v895
    %2516 = vmatpush2.msra.mxu0 %v894
    %2517 = vmatprep.subr.mxu0 %v891
    %2518 = vmatpush2.msra.mxu0 %v890
    %2519 = vmatprep.subr.mxu0 %v887
    %2520 = vmatpush2.msra.mxu0 %v886
    %2521 = vmatprep.subr.mxu0 %v883
    %2522 = vmatpush2.msra.mxu0 %v882
    %2523 = vmatprep.subr.mxu0 %v879
    %2524 = vmatpush2.msra.mxu0 %v878
    %2525 = vmatprep.subr.mxu0 %v875
    %2526 = vmatpush2.msra.mxu0 %v874
    %2527 = vmatprep.subr.mxu0 %v871
    %2528 = vmatpush2.msra.mxu0 %v870
    %2529 = vmatprep.mubr.f32.mxu0 %v2199
    %2530 = vmatmul.mubr.f32.gmra.mxu0 %v2393
    %v2531 = vpop.f32.mrf.mxu0
    %v2532 = vadd.f32 %v945, %v2531
    %v2533 = vpop.f32.mrf.mxu0
    %v2534 = vadd.f32 %v949, %v2533
    %2535 = vdwg.mxu0
    %v2536 = vxor.u32 %v2461, 2147483648
    %v2537 = vxor.u32 %v2463, 2147483648
    %v2538 = vxor.u32 %v2532, 2147483648
    %v2539 = vmul.f32 %v2536, 1.442695
    %v2540 = vpow.pop %v2539
    %v2541 = vmul.f32 %v2537, 1.442695
    %v2542 = vpow.pop %v2541
    %v2543 = vmul.f32 %v2538, 1.442695
    %v2544 = vpow.pop %v2543
    %v2545 = vadd.f32 %v2540, 1.0
    %v2546 = vadd.f32 %v2542, 1.0
    %v2547 = vadd.f32 %v2544, 1.0
    %v2548 = vrcp.pop %v2545
    %v2549 = vmul.f32 1.0, %v2548
    %v2550 = vrcp.pop %v2546
    %v2551 = vmul.f32 1.0, %v2550
    %v2552 = vrcp.pop %v2547
    %v2553 = vmul.f32 1.0, %v2552
    %v2554 = vtanh.pop %v2534
    %v2555 = vmul.f32 %v2551, %v2197
    %v2556 = vmul.f32 %v2549, %v2554
    %v2557 = vadd.f32 %v2555, %v2556
    %v2558 = vtanh.pop %v2557
    %v2559 = vmul.f32 %v2553, %v2558
    %s2560 = scalar_lea.vmem [#allocation2], 5
    %v2561 = vld [vmem:[%s2560] ss:$8 sm:$0xf]
    %2562 = vmatprep.subr.mxu0 %v609
    %2563 = vmatpush1.msra.mxu0 %v608
    %2564 = vmatprep.subr.mxu0 %v605
    %2565 = vmatpush1.msra.mxu0 %v604
    %2566 = vmatprep.subr.mxu0 %v601
    %2567 = vmatpush1.msra.mxu0 %v600
    %2568 = vmatprep.subr.mxu0 %v597
    %2569 = vmatpush1.msra.mxu0 %v596
    %2570 = vmatprep.subr.mxu0 %v593
    %2571 = vmatpush1.msra.mxu0 %v592
    %2572 = vmatprep.subr.mxu0 %v589
    %2573 = vmatpush1.msra.mxu0 %v588
    %2574 = vmatprep.subr.mxu0 %v585
    %2575 = vmatpush1.msra.mxu0 %v584
    %2576 = vmatprep.subr.mxu0 %v581
    %2577 = vmatpush1.msra.mxu0 %v580
    %2578 = vmatprep.subr.mxu0 %v577
    %2579 = vmatpush1.msra.mxu0 %v576
    %2580 = vmatprep.subr.mxu0 %v573
    %2581 = vmatpush1.msra.mxu0 %v572
    %2582 = vmatprep.subr.mxu0 %v569
    %2583 = vmatpush1.msra.mxu0 %v568
    %2584 = vmatprep.subr.mxu0 %v565
    %2585 = vmatpush1.msra.mxu0 %v564
    %2586 = vmatprep.subr.mxu0 %v561
    %2587 = vmatpush1.msra.mxu0 %v560
    %2588 = vmatprep.subr.mxu0 %v557
    %2589 = vmatpush1.msra.mxu0 %v556
    %2590 = vmatprep.subr.mxu0 %v553
    %2591 = vmatpush1.msra.mxu0 %v552
    %2592 = vmatprep.subr.mxu0 %v549
    %2593 = vmatpush1.msra.mxu0 %v548
    %2594 = vmatprep.subr.mxu0 0.0
    %2595 = vmatpush2.msra.mxu0 0.0
    %2596 = vmatprep.subr.mxu0 0.0
    %2597 = vmatpush2.msra.mxu0 0.0
    %2598 = vmatprep.subr.mxu0 0.0
    %2599 = vmatpush2.msra.mxu0 0.0
    %2600 = vmatprep.subr.mxu0 0.0
    %2601 = vmatpush2.msra.mxu0 0.0
    %2602 = vmatprep.subr.mxu0 0.0
    %2603 = vmatpush2.msra.mxu0 0.0
    %2604 = vmatprep.subr.mxu0 0.0
    %2605 = vmatpush2.msra.mxu0 0.0
    %2606 = vmatprep.subr.mxu0 0.0
    %2607 = vmatpush2.msra.mxu0 0.0
    %2608 = vmatprep.subr.mxu0 0.0
    %2609 = vmatpush2.msra.mxu0 0.0
    %2610 = vmatprep.subr.mxu0 0.0
    %2611 = vmatpush2.msra.mxu0 0.0
    %2612 = vmatprep.subr.mxu0 0.0
    %2613 = vmatpush2.msra.mxu0 0.0
    %2614 = vmatprep.subr.mxu0 0.0
    %2615 = vmatpush2.msra.mxu0 0.0
    %2616 = vmatprep.subr.mxu0 0.0
    %2617 = vmatpush2.msra.mxu0 0.0
    %2618 = vmatprep.subr.mxu0 0.0
    %2619 = vmatpush2.msra.mxu0 0.0
    %2620 = vmatprep.subr.mxu0 0.0
    %2621 = vmatpush2.msra.mxu0 0.0
    %2622 = vmatprep.subr.mxu0 0.0
    %2623 = vmatpush2.msra.mxu0 0.0
    %2624 = vmatprep.subr.mxu0 0.0
    %2625 = vmatpush2.msra.mxu0 0.0
    %2626 = vmatprep.mubr.f32.mxu0 0.0
    %2627 = vmatmul.mubr.f32.gmra.mxu0 %v2393
    %v2628 = vpop.f32.mrf.mxu0
    %v2629 = vadd.f32 0.0, %v2628
    %v2630 = vpop.f32.mrf.mxu0
    %v2631 = vadd.f32 0.0, %v2630
    %2632 = vdwg.mxu0
    %2633 = vmatprep.subr.mxu0 %v611
    %2634 = vmatpush1.msra.mxu0 %v610
    %2635 = vmatprep.subr.mxu0 %v607
    %2636 = vmatpush1.msra.mxu0 %v606
    %2637 = vmatprep.subr.mxu0 %v603
    %2638 = vmatpush1.msra.mxu0 %v602
    %2639 = vmatprep.subr.mxu0 %v599
    %2640 = vmatpush1.msra.mxu0 %v598
    %2641 = vmatprep.subr.mxu0 %v595
    %2642 = vmatpush1.msra.mxu0 %v594
    %2643 = vmatprep.subr.mxu0 %v591
    %2644 = vmatpush1.msra.mxu0 %v590
    %2645 = vmatprep.subr.mxu0 %v587
    %2646 = vmatpush1.msra.mxu0 %v586
    %2647 = vmatprep.subr.mxu0 %v583
    %2648 = vmatpush1.msra.mxu0 %v582
    %2649 = vmatprep.subr.mxu0 %v579
    %2650 = vmatpush1.msra.mxu0 %v578
    %2651 = vmatprep.subr.mxu0 %v575
    %2652 = vmatpush1.msra.mxu0 %v574
    %2653 = vmatprep.subr.mxu0 %v571
    %2654 = vmatpush1.msra.mxu0 %v570
    %2655 = vmatprep.subr.mxu0 %v567
    %2656 = vmatpush1.msra.mxu0 %v566
    %2657 = vmatprep.subr.mxu0 %v563
    %2658 = vmatpush1.msra.mxu0 %v562
    %2659 = vmatprep.subr.mxu0 %v559
    %2660 = vmatpush1.msra.mxu0 %v558
    %2661 = vmatprep.subr.mxu0 %v555
    %2662 = vmatpush1.msra.mxu0 %v554
    %2663 = vmatprep.subr.mxu0 %v551
    %2664 = vmatpush1.msra.mxu0 %v550
    %2665 = vmatprep.subr.mxu0 0.0
    %2666 = vmatpush2.msra.mxu0 0.0
    %2667 = vmatprep.subr.mxu0 0.0
    %2668 = vmatpush2.msra.mxu0 0.0
    %2669 = vmatprep.subr.mxu0 0.0
    %2670 = vmatpush2.msra.mxu0 0.0
    %2671 = vmatprep.subr.mxu0 0.0
    %2672 = vmatpush2.msra.mxu0 0.0
    %2673 = vmatprep.subr.mxu0 0.0
    %2674 = vmatpush2.msra.mxu0 0.0
    %2675 = vmatprep.subr.mxu0 0.0
    %2676 = vmatpush2.msra.mxu0 0.0
    %2677 = vmatprep.subr.mxu0 0.0
    %2678 = vmatpush2.msra.mxu0 0.0
    %2679 = vmatprep.subr.mxu0 0.0
    %2680 = vmatpush2.msra.mxu0 0.0
    %2681 = vmatprep.subr.mxu0 0.0
    %2682 = vmatpush2.msra.mxu0 0.0
    %2683 = vmatprep.subr.mxu0 0.0
    %2684 = vmatpush2.msra.mxu0 0.0
    %2685 = vmatprep.subr.mxu0 0.0
    %2686 = vmatpush2.msra.mxu0 0.0
    %2687 = vmatprep.subr.mxu0 0.0
    %2688 = vmatpush2.msra.mxu0 0.0
    %2689 = vmatprep.subr.mxu0 0.0
    %2690 = vmatpush2.msra.mxu0 0.0
    %2691 = vmatprep.subr.mxu0 0.0
    %2692 = vmatpush2.msra.mxu0 0.0
    %2693 = vmatprep.subr.mxu0 0.0
    %2694 = vmatpush2.msra.mxu0 0.0
    %2695 = vmatprep.subr.mxu0 0.0
    %2696 = vmatpush2.msra.mxu0 0.0
    %2697 = vmatprep.mubr.f32.mxu0 0.0
    %2698 = vmatmul.mubr.f32.gmra.mxu0 %v2393
    %v2699 = vpop.f32.mrf.mxu0
    %v2700 = vadd.f32 0.0, %v2699
    %v2701 = vpop.f32.mrf.mxu0
    %v2702 = vadd.f32 0.0, %v2701
    %2703 = vdwg.mxu0
    %v2708 = vcombine.low %v2629, %v2631
    %v2709 = vcombine.low %v2700, %v2702
    %v2711 = vunpack.c.l.s4 1966171168
    %v2712 = vunpack.c.0.s8 %v2711
    %v2713 = vlaneseq
    %v2714 = vshrl.u32 %v2713, 7
    %v2715 = vsub.s32 %v2712, %v2714
    %v2716 = vrot.slane %v2708, %v2715
    %v2718 = vunpack.c.l.s4 1966171168
    %v2719 = vunpack.c.0.s8 %v2718
    %v2720 = vlaneseq
    %v2721 = vshrl.u32 %v2720, 7
    %v2722 = vsub.s32 %v2719, %v2721
    %v2723 = vrot.slane %v2709, %v2722
    %v2724 = vcombine.low %v2716, %v2723
    %v2726 = vunpack.c.l.s4 1966171168
    %v2727 = vunpack.c.0.s8 %v2726
    %v2728 = vlaneseq
    %v2729 = vshrl.u32 %v2728, 7
    %v2730 = vsub.s32 %v2727, %v2729
    %v2731 = vrot.slane %v2724, %v2730
    %v2733 = vadd.f32 %v2561, %v2731
    %v2734 = vxor.u32 %v2733, 2147483648
    %v2735 = vmul.f32 %v2734, 1.442695
    %v2736 = vpow.pop %v2735
    %v2737 = vadd.f32 %v2736, 1.0
    %v2738 = vrcp.pop %v2737
    %v2739 = vmul.f32 1.0, %v2738
    %v2741 = vrot.slane %v2733, 3
    %v2743 = vtanh.pop %v2741
    %v2745 = vrot.slane %v2739, 1
    %v2747 = vmul.f32 %v2745, %v2389
    %v2748 = vmul.f32 %v2739, %v2743
    %v2749 = vadd.f32 %v2747, %v2748
    %v2750 = vtanh.pop %v2749
    %v2751 = vrot.slane %v2739, 2
    %v2753 = vmul.f32 %v2751, %v2750
    %2754 = vmatprep.subr.mxu0 %v865
    %2755 = vmatpush1.msra.mxu0 %v864
    %2756 = vmatprep.subr.mxu0 %v861
    %2757 = vmatpush1.msra.mxu0 %v860
    %2758 = vmatprep.subr.mxu0 %v857
    %2759 = vmatpush1.msra.mxu0 %v856
    %2760 = vmatprep.subr.mxu0 %v853
    %2761 = vmatpush1.msra.mxu0 %v852
    %2762 = vmatprep.subr.mxu0 %v849
    %2763 = vmatpush1.msra.mxu0 %v848
    %2764 = vmatprep.subr.mxu0 %v845
    %2765 = vmatpush1.msra.mxu0 %v844
    %2766 = vmatprep.subr.mxu0 %v841
    %2767 = vmatpush1.msra.mxu0 %v840
    %2768 = vmatprep.subr.mxu0 %v837
    %2769 = vmatpush1.msra.mxu0 %v836
    %2770 = vmatprep.subr.mxu0 %v833
    %2771 = vmatpush1.msra.mxu0 %v832
    %2772 = vmatprep.subr.mxu0 %v829
    %2773 = vmatpush1.msra.mxu0 %v828
    %2774 = vmatprep.subr.mxu0 %v825
    %2775 = vmatpush1.msra.mxu0 %v824
    %2776 = vmatprep.subr.mxu0 %v821
    %2777 = vmatpush1.msra.mxu0 %v820
    %2778 = vmatprep.subr.mxu0 %v817
    %2779 = vmatpush1.msra.mxu0 %v816
    %2780 = vmatprep.subr.mxu0 %v813
    %2781 = vmatpush1.msra.mxu0 %v812
    %2782 = vmatprep.subr.mxu0 %v809
    %2783 = vmatpush1.msra.mxu0 %v808
    %2784 = vmatprep.subr.mxu0 %v805
    %2785 = vmatpush1.msra.mxu0 %v804
    %2786 = vmatprep.subr.mxu0 %v929
    %2787 = vmatpush2.msra.mxu0 %v928
    %2788 = vmatprep.subr.mxu0 %v925
    %2789 = vmatpush2.msra.mxu0 %v924
    %2790 = vmatprep.subr.mxu0 %v921
    %2791 = vmatpush2.msra.mxu0 %v920
    %2792 = vmatprep.subr.mxu0 %v917
    %2793 = vmatpush2.msra.mxu0 %v916
    %2794 = vmatprep.subr.mxu0 %v913
    %2795 = vmatpush2.msra.mxu0 %v912
    %2796 = vmatprep.subr.mxu0 %v909
    %2797 = vmatpush2.msra.mxu0 %v908
    %2798 = vmatprep.subr.mxu0 %v905
    %2799 = vmatpush2.msra.mxu0 %v904
    %2800 = vmatprep.subr.mxu0 %v901
    %2801 = vmatpush2.msra.mxu0 %v900
    %2802 = vmatprep.subr.mxu0 %v897
    %2803 = vmatpush2.msra.mxu0 %v896
    %2804 = vmatprep.subr.mxu0 %v893
    %2805 = vmatpush2.msra.mxu0 %v892
    %2806 = vmatprep.subr.mxu0 %v889
    %2807 = vmatpush2.msra.mxu0 %v888
    %2808 = vmatprep.subr.mxu0 %v885
    %2809 = vmatpush2.msra.mxu0 %v884
    %2810 = vmatprep.subr.mxu0 %v881
    %2811 = vmatpush2.msra.mxu0 %v880
    %2812 = vmatprep.subr.mxu0 %v877
    %2813 = vmatpush2.msra.mxu0 %v876
    %2814 = vmatprep.subr.mxu0 %v873
    %2815 = vmatpush2.msra.mxu0 %v872
    %2816 = vmatprep.subr.mxu0 %v869
    %2817 = vmatpush2.msra.mxu0 %v868
    %2818 = vmatprep.mubr.f32.mxu0 %v2559
    %2819 = vmatmul.mubr.f32.gmra.mxu0 %v2753
    %v2820 = vpop.f32.mrf.mxu0
    %v2821 = vadd.f32 %v937, %v2820
    %v2822 = vpop.f32.mrf.mxu0
    %v2823 = vadd.f32 %v941, %v2822
    %2824 = vdwg.mxu0
    %2825 = vmatprep.subr.mxu0 %v867
    %2826 = vmatpush1.msra.mxu0 %v866
    %2827 = vmatprep.subr.mxu0 %v863
    %2828 = vmatpush1.msra.mxu0 %v862
    %2829 = vmatprep.subr.mxu0 %v859
    %2830 = vmatpush1.msra.mxu0 %v858
    %2831 = vmatprep.subr.mxu0 %v855
    %2832 = vmatpush1.msra.mxu0 %v854
    %2833 = vmatprep.subr.mxu0 %v851
    %2834 = vmatpush1.msra.mxu0 %v850
    %2835 = vmatprep.subr.mxu0 %v847
    %2836 = vmatpush1.msra.mxu0 %v846
    %2837 = vmatprep.subr.mxu0 %v843
    %2838 = vmatpush1.msra.mxu0 %v842
    %2839 = vmatprep.subr.mxu0 %v839
    %2840 = vmatpush1.msra.mxu0 %v838
    %2841 = vmatprep.subr.mxu0 %v835
    %2842 = vmatpush1.msra.mxu0 %v834
    %2843 = vmatprep.subr.mxu0 %v831
    %2844 = vmatpush1.msra.mxu0 %v830
    %2845 = vmatprep.subr.mxu0 %v827
    %2846 = vmatpush1.msra.mxu0 %v826
    %2847 = vmatprep.subr.mxu0 %v823
    %2848 = vmatpush1.msra.mxu0 %v822
    %2849 = vmatprep.subr.mxu0 %v819
    %2850 = vmatpush1.msra.mxu0 %v818
    %2851 = vmatprep.subr.mxu0 %v815
    %2852 = vmatpush1.msra.mxu0 %v814
    %2853 = vmatprep.subr.mxu0 %v811
    %2854 = vmatpush1.msra.mxu0 %v810
    %2855 = vmatprep.subr.mxu0 %v807
    %2856 = vmatpush1.msra.mxu0 %v806
    %2857 = vmatprep.subr.mxu0 %v931
    %2858 = vmatpush2.msra.mxu0 %v930
    %2859 = vmatprep.subr.mxu0 %v927
    %2860 = vmatpush2.msra.mxu0 %v926
    %2861 = vmatprep.subr.mxu0 %v923
    %2862 = vmatpush2.msra.mxu0 %v922
    %2863 = vmatprep.subr.mxu0 %v919
    %2864 = vmatpush2.msra.mxu0 %v918
    %2865 = vmatprep.subr.mxu0 %v915
    %2866 = vmatpush2.msra.mxu0 %v914
    %2867 = vmatprep.subr.mxu0 %v911
    %2868 = vmatpush2.msra.mxu0 %v910
    %2869 = vmatprep.subr.mxu0 %v907
    %2870 = vmatpush2.msra.mxu0 %v906
    %2871 = vmatprep.subr.mxu0 %v903
    %2872 = vmatpush2.msra.mxu0 %v902
    %2873 = vmatprep.subr.mxu0 %v899
    %2874 = vmatpush2.msra.mxu0 %v898
    %2875 = vmatprep.subr.mxu0 %v895
    %2876 = vmatpush2.msra.mxu0 %v894
    %2877 = vmatprep.subr.mxu0 %v891
    %2878 = vmatpush2.msra.mxu0 %v890
    %2879 = vmatprep.subr.mxu0 %v887
    %2880 = vmatpush2.msra.mxu0 %v886
    %2881 = vmatprep.subr.mxu0 %v883
    %2882 = vmatpush2.msra.mxu0 %v882
    %2883 = vmatprep.subr.mxu0 %v879
    %2884 = vmatpush2.msra.mxu0 %v878
    %2885 = vmatprep.subr.mxu0 %v875
    %2886 = vmatpush2.msra.mxu0 %v874
    %2887 = vmatprep.subr.mxu0 %v871
    %2888 = vmatpush2.msra.mxu0 %v870
    %2889 = vmatprep.mubr.f32.mxu0 %v2559
    %2890 = vmatmul.mubr.f32.gmra.mxu0 %v2753
    %v2891 = vpop.f32.mrf.mxu0
    %v2892 = vadd.f32 %v945, %v2891
    %v2893 = vpop.f32.mrf.mxu0
    %v2894 = vadd.f32 %v949, %v2893
    %2895 = vdwg.mxu0
    %v2896 = vxor.u32 %v2821, 2147483648
    %v2897 = vxor.u32 %v2823, 2147483648
    %v2898 = vxor.u32 %v2892, 2147483648
    %v2899 = vmul.f32 %v2896, 1.442695
    %v2900 = vpow.pop %v2899
    %v2901 = vmul.f32 %v2897, 1.442695
    %v2902 = vpow.pop %v2901
    %v2903 = vmul.f32 %v2898, 1.442695
    %v2904 = vpow.pop %v2903
    %v2905 = vadd.f32 %v2900, 1.0
    %v2906 = vadd.f32 %v2902, 1.0
    %v2907 = vadd.f32 %v2904, 1.0
    %v2908 = vrcp.pop %v2905
    %v2909 = vmul.f32 1.0, %v2908
    %v2910 = vrcp.pop %v2906
    %v2911 = vmul.f32 1.0, %v2910
    %v2912 = vrcp.pop %v2907
    %v2913 = vmul.f32 1.0, %v2912
    %v2914 = vtanh.pop %v2894
    %v2915 = vmul.f32 %v2911, %v2557
    %v2916 = vmul.f32 %v2909, %v2914
    %v2917 = vadd.f32 %v2915, %v2916
    %v2918 = vtanh.pop %v2917
    %v2919 = vmul.f32 %v2913, %v2918
    %s2920 = scalar_lea.vmem [#allocation2], 6
    %v2921 = vld [vmem:[%s2920] ss:$8 sm:$0xf]
    %2922 = vmatprep.subr.mxu0 %v609
    %2923 = vmatpush1.msra.mxu0 %v608
    %2924 = vmatprep.subr.mxu0 %v605
    %2925 = vmatpush1.msra.mxu0 %v604
    %2926 = vmatprep.subr.mxu0 %v601
    %2927 = vmatpush1.msra.mxu0 %v600
    %2928 = vmatprep.subr.mxu0 %v597
    %2929 = vmatpush1.msra.mxu0 %v596
    %2930 = vmatprep.subr.mxu0 %v593
    %2931 = vmatpush1.msra.mxu0 %v592
    %2932 = vmatprep.subr.mxu0 %v589
    %2933 = vmatpush1.msra.mxu0 %v588
    %2934 = vmatprep.subr.mxu0 %v585
    %2935 = vmatpush1.msra.mxu0 %v584
    %2936 = vmatprep.subr.mxu0 %v581
    %2937 = vmatpush1.msra.mxu0 %v580
    %2938 = vmatprep.subr.mxu0 %v577
    %2939 = vmatpush1.msra.mxu0 %v576
    %2940 = vmatprep.subr.mxu0 %v573
    %2941 = vmatpush1.msra.mxu0 %v572
    %2942 = vmatprep.subr.mxu0 %v569
    %2943 = vmatpush1.msra.mxu0 %v568
    %2944 = vmatprep.subr.mxu0 %v565
    %2945 = vmatpush1.msra.mxu0 %v564
    %2946 = vmatprep.subr.mxu0 %v561
    %2947 = vmatpush1.msra.mxu0 %v560
    %2948 = vmatprep.subr.mxu0 %v557
    %2949 = vmatpush1.msra.mxu0 %v556
    %2950 = vmatprep.subr.mxu0 %v553
    %2951 = vmatpush1.msra.mxu0 %v552
    %2952 = vmatprep.subr.mxu0 %v549
    %2953 = vmatpush1.msra.mxu0 %v548
    %2954 = vmatprep.subr.mxu0 0.0
    %2955 = vmatpush2.msra.mxu0 0.0
    %2956 = vmatprep.subr.mxu0 0.0
    %2957 = vmatpush2.msra.mxu0 0.0
    %2958 = vmatprep.subr.mxu0 0.0
    %2959 = vmatpush2.msra.mxu0 0.0
    %2960 = vmatprep.subr.mxu0 0.0
    %2961 = vmatpush2.msra.mxu0 0.0
    %2962 = vmatprep.subr.mxu0 0.0
    %2963 = vmatpush2.msra.mxu0 0.0
    %2964 = vmatprep.subr.mxu0 0.0
    %2965 = vmatpush2.msra.mxu0 0.0
    %2966 = vmatprep.subr.mxu0 0.0
    %2967 = vmatpush2.msra.mxu0 0.0
    %2968 = vmatprep.subr.mxu0 0.0
    %2969 = vmatpush2.msra.mxu0 0.0
    %2970 = vmatprep.subr.mxu0 0.0
    %2971 = vmatpush2.msra.mxu0 0.0
    %2972 = vmatprep.subr.mxu0 0.0
    %2973 = vmatpush2.msra.mxu0 0.0
    %2974 = vmatprep.subr.mxu0 0.0
    %2975 = vmatpush2.msra.mxu0 0.0
    %2976 = vmatprep.subr.mxu0 0.0
    %2977 = vmatpush2.msra.mxu0 0.0
    %2978 = vmatprep.subr.mxu0 0.0
    %2979 = vmatpush2.msra.mxu0 0.0
    %2980 = vmatprep.subr.mxu0 0.0
    %2981 = vmatpush2.msra.mxu0 0.0
    %2982 = vmatprep.subr.mxu0 0.0
    %2983 = vmatpush2.msra.mxu0 0.0
    %2984 = vmatprep.subr.mxu0 0.0
    %2985 = vmatpush2.msra.mxu0 0.0
    %2986 = vmatprep.mubr.f32.mxu0 0.0
    %2987 = vmatmul.mubr.f32.gmra.mxu0 %v2753
    %v2988 = vpop.f32.mrf.mxu0
    %v2989 = vadd.f32 0.0, %v2988
    %v2990 = vpop.f32.mrf.mxu0
    %v2991 = vadd.f32 0.0, %v2990
    %2992 = vdwg.mxu0
    %2993 = vmatprep.subr.mxu0 %v611
    %2994 = vmatpush1.msra.mxu0 %v610
    %2995 = vmatprep.subr.mxu0 %v607
    %2996 = vmatpush1.msra.mxu0 %v606
    %2997 = vmatprep.subr.mxu0 %v603
    %2998 = vmatpush1.msra.mxu0 %v602
    %2999 = vmatprep.subr.mxu0 %v599
    %3000 = vmatpush1.msra.mxu0 %v598
    %3001 = vmatprep.subr.mxu0 %v595
    %3002 = vmatpush1.msra.mxu0 %v594
    %3003 = vmatprep.subr.mxu0 %v591
    %3004 = vmatpush1.msra.mxu0 %v590
    %3005 = vmatprep.subr.mxu0 %v587
    %3006 = vmatpush1.msra.mxu0 %v586
    %3007 = vmatprep.subr.mxu0 %v583
    %3008 = vmatpush1.msra.mxu0 %v582
    %3009 = vmatprep.subr.mxu0 %v579
    %3010 = vmatpush1.msra.mxu0 %v578
    %3011 = vmatprep.subr.mxu0 %v575
    %3012 = vmatpush1.msra.mxu0 %v574
    %3013 = vmatprep.subr.mxu0 %v571
    %3014 = vmatpush1.msra.mxu0 %v570
    %3015 = vmatprep.subr.mxu0 %v567
    %3016 = vmatpush1.msra.mxu0 %v566
    %3017 = vmatprep.subr.mxu0 %v563
    %3018 = vmatpush1.msra.mxu0 %v562
    %3019 = vmatprep.subr.mxu0 %v559
    %3020 = vmatpush1.msra.mxu0 %v558
    %3021 = vmatprep.subr.mxu0 %v555
    %3022 = vmatpush1.msra.mxu0 %v554
    %3023 = vmatprep.subr.mxu0 %v551
    %3024 = vmatpush1.msra.mxu0 %v550
    %3025 = vmatprep.subr.mxu0 0.0
    %3026 = vmatpush2.msra.mxu0 0.0
    %3027 = vmatprep.subr.mxu0 0.0
    %3028 = vmatpush2.msra.mxu0 0.0
    %3029 = vmatprep.subr.mxu0 0.0
    %3030 = vmatpush2.msra.mxu0 0.0
    %3031 = vmatprep.subr.mxu0 0.0
    %3032 = vmatpush2.msra.mxu0 0.0
    %3033 = vmatprep.subr.mxu0 0.0
    %3034 = vmatpush2.msra.mxu0 0.0
    %3035 = vmatprep.subr.mxu0 0.0
    %3036 = vmatpush2.msra.mxu0 0.0
    %3037 = vmatprep.subr.mxu0 0.0
    %3038 = vmatpush2.msra.mxu0 0.0
    %3039 = vmatprep.subr.mxu0 0.0
    %3040 = vmatpush2.msra.mxu0 0.0
    %3041 = vmatprep.subr.mxu0 0.0
    %3042 = vmatpush2.msra.mxu0 0.0
    %3043 = vmatprep.subr.mxu0 0.0
    %3044 = vmatpush2.msra.mxu0 0.0
    %3045 = vmatprep.subr.mxu0 0.0
    %3046 = vmatpush2.msra.mxu0 0.0
    %3047 = vmatprep.subr.mxu0 0.0
    %3048 = vmatpush2.msra.mxu0 0.0
    %3049 = vmatprep.subr.mxu0 0.0
    %3050 = vmatpush2.msra.mxu0 0.0
    %3051 = vmatprep.subr.mxu0 0.0
    %3052 = vmatpush2.msra.mxu0 0.0
    %3053 = vmatprep.subr.mxu0 0.0
    %3054 = vmatpush2.msra.mxu0 0.0
    %3055 = vmatprep.subr.mxu0 0.0
    %3056 = vmatpush2.msra.mxu0 0.0
    %3057 = vmatprep.mubr.f32.mxu0 0.0
    %3058 = vmatmul.mubr.f32.gmra.mxu0 %v2753
    %v3059 = vpop.f32.mrf.mxu0
    %v3060 = vadd.f32 0.0, %v3059
    %v3061 = vpop.f32.mrf.mxu0
    %v3062 = vadd.f32 0.0, %v3061
    %3063 = vdwg.mxu0
    %v3068 = vcombine.low %v2989, %v2991
    %v3069 = vcombine.low %v3060, %v3062
    %v3071 = vunpack.c.l.s4 1966171168
    %v3072 = vunpack.c.0.s8 %v3071
    %v3073 = vlaneseq
    %v3074 = vshrl.u32 %v3073, 7
    %v3075 = vsub.s32 %v3072, %v3074
    %v3076 = vrot.slane %v3068, %v3075
    %v3078 = vunpack.c.l.s4 1966171168
    %v3079 = vunpack.c.0.s8 %v3078
    %v3080 = vlaneseq
    %v3081 = vshrl.u32 %v3080, 7
    %v3082 = vsub.s32 %v3079, %v3081
    %v3083 = vrot.slane %v3069, %v3082
    %v3084 = vcombine.low %v3076, %v3083
    %v3086 = vunpack.c.l.s4 1966171168
    %v3087 = vunpack.c.0.s8 %v3086
    %v3088 = vlaneseq
    %v3089 = vshrl.u32 %v3088, 7
    %v3090 = vsub.s32 %v3087, %v3089
    %v3091 = vrot.slane %v3084, %v3090
    %v3093 = vadd.f32 %v2921, %v3091
    %v3094 = vxor.u32 %v3093, 2147483648
    %v3095 = vmul.f32 %v3094, 1.442695
    %v3096 = vpow.pop %v3095
    %v3097 = vadd.f32 %v3096, 1.0
    %v3098 = vrcp.pop %v3097
    %v3099 = vmul.f32 1.0, %v3098
    %v3101 = vrot.slane %v3093, 3
    %v3103 = vtanh.pop %v3101
    %v3105 = vrot.slane %v3099, 1
    %v3107 = vmul.f32 %v3105, %v2749
    %v3108 = vmul.f32 %v3099, %v3103
    %v3109 = vadd.f32 %v3107, %v3108
    %v3110 = vtanh.pop %v3109
    %v3111 = vrot.slane %v3099, 2
    %v3113 = vmul.f32 %v3111, %v3110
    %3114 = vmatprep.subr.mxu0 %v865
    %3115 = vmatpush1.msra.mxu0 %v864
    %3116 = vmatprep.subr.mxu0 %v861
    %3117 = vmatpush1.msra.mxu0 %v860
    %3118 = vmatprep.subr.mxu0 %v857
    %3119 = vmatpush1.msra.mxu0 %v856
    %3120 = vmatprep.subr.mxu0 %v853
    %3121 = vmatpush1.msra.mxu0 %v852
    %3122 = vmatprep.subr.mxu0 %v849
    %3123 = vmatpush1.msra.mxu0 %v848
    %3124 = vmatprep.subr.mxu0 %v845
    %3125 = vmatpush1.msra.mxu0 %v844
    %3126 = vmatprep.subr.mxu0 %v841
    %3127 = vmatpush1.msra.mxu0 %v840
    %3128 = vmatprep.subr.mxu0 %v837
    %3129 = vmatpush1.msra.mxu0 %v836
    %3130 = vmatprep.subr.mxu0 %v833
    %3131 = vmatpush1.msra.mxu0 %v832
    %3132 = vmatprep.subr.mxu0 %v829
    %3133 = vmatpush1.msra.mxu0 %v828
    %3134 = vmatprep.subr.mxu0 %v825
    %3135 = vmatpush1.msra.mxu0 %v824
    %3136 = vmatprep.subr.mxu0 %v821
    %3137 = vmatpush1.msra.mxu0 %v820
    %3138 = vmatprep.subr.mxu0 %v817
    %3139 = vmatpush1.msra.mxu0 %v816
    %3140 = vmatprep.subr.mxu0 %v813
    %3141 = vmatpush1.msra.mxu0 %v812
    %3142 = vmatprep.subr.mxu0 %v809
    %3143 = vmatpush1.msra.mxu0 %v808
    %3144 = vmatprep.subr.mxu0 %v805
    %3145 = vmatpush1.msra.mxu0 %v804
    %3146 = vmatprep.subr.mxu0 %v929
    %3147 = vmatpush2.msra.mxu0 %v928
    %3148 = vmatprep.subr.mxu0 %v925
    %3149 = vmatpush2.msra.mxu0 %v924
    %3150 = vmatprep.subr.mxu0 %v921
    %3151 = vmatpush2.msra.mxu0 %v920
    %3152 = vmatprep.subr.mxu0 %v917
    %3153 = vmatpush2.msra.mxu0 %v916
    %3154 = vmatprep.subr.mxu0 %v913
    %3155 = vmatpush2.msra.mxu0 %v912
    %3156 = vmatprep.subr.mxu0 %v909
    %3157 = vmatpush2.msra.mxu0 %v908
    %3158 = vmatprep.subr.mxu0 %v905
    %3159 = vmatpush2.msra.mxu0 %v904
    %3160 = vmatprep.subr.mxu0 %v901
    %3161 = vmatpush2.msra.mxu0 %v900
    %3162 = vmatprep.subr.mxu0 %v897
    %3163 = vmatpush2.msra.mxu0 %v896
    %3164 = vmatprep.subr.mxu0 %v893
    %3165 = vmatpush2.msra.mxu0 %v892
    %3166 = vmatprep.subr.mxu0 %v889
    %3167 = vmatpush2.msra.mxu0 %v888
    %3168 = vmatprep.subr.mxu0 %v885
    %3169 = vmatpush2.msra.mxu0 %v884
    %3170 = vmatprep.subr.mxu0 %v881
    %3171 = vmatpush2.msra.mxu0 %v880
    %3172 = vmatprep.subr.mxu0 %v877
    %3173 = vmatpush2.msra.mxu0 %v876
    %3174 = vmatprep.subr.mxu0 %v873
    %3175 = vmatpush2.msra.mxu0 %v872
    %3176 = vmatprep.subr.mxu0 %v869
    %3177 = vmatpush2.msra.mxu0 %v868
    %3178 = vmatprep.mubr.f32.mxu0 %v2919
    %3179 = vmatmul.mubr.f32.gmra.mxu0 %v3113
    %v3180 = vpop.f32.mrf.mxu0
    %v3181 = vadd.f32 %v937, %v3180
    %v3182 = vpop.f32.mrf.mxu0
    %v3183 = vadd.f32 %v941, %v3182
    %3184 = vdwg.mxu0
    %3185 = vmatprep.subr.mxu0 %v867
    %3186 = vmatpush1.msra.mxu0 %v866
    %3187 = vmatprep.subr.mxu0 %v863
    %3188 = vmatpush1.msra.mxu0 %v862
    %3189 = vmatprep.subr.mxu0 %v859
    %3190 = vmatpush1.msra.mxu0 %v858
    %3191 = vmatprep.subr.mxu0 %v855
    %3192 = vmatpush1.msra.mxu0 %v854
    %3193 = vmatprep.subr.mxu0 %v851
    %3194 = vmatpush1.msra.mxu0 %v850
    %3195 = vmatprep.subr.mxu0 %v847
    %3196 = vmatpush1.msra.mxu0 %v846
    %3197 = vmatprep.subr.mxu0 %v843
    %3198 = vmatpush1.msra.mxu0 %v842
    %3199 = vmatprep.subr.mxu0 %v839
    %3200 = vmatpush1.msra.mxu0 %v838
    %3201 = vmatprep.subr.mxu0 %v835
    %3202 = vmatpush1.msra.mxu0 %v834
    %3203 = vmatprep.subr.mxu0 %v831
    %3204 = vmatpush1.msra.mxu0 %v830
    %3205 = vmatprep.subr.mxu0 %v827
    %3206 = vmatpush1.msra.mxu0 %v826
    %3207 = vmatprep.subr.mxu0 %v823
    %3208 = vmatpush1.msra.mxu0 %v822
    %3209 = vmatprep.subr.mxu0 %v819
    %3210 = vmatpush1.msra.mxu0 %v818
    %3211 = vmatprep.subr.mxu0 %v815
    %3212 = vmatpush1.msra.mxu0 %v814
    %3213 = vmatprep.subr.mxu0 %v811
    %3214 = vmatpush1.msra.mxu0 %v810
    %3215 = vmatprep.subr.mxu0 %v807
    %3216 = vmatpush1.msra.mxu0 %v806
    %3217 = vmatprep.subr.mxu0 %v931
    %3218 = vmatpush2.msra.mxu0 %v930
    %3219 = vmatprep.subr.mxu0 %v927
    %3220 = vmatpush2.msra.mxu0 %v926
    %3221 = vmatprep.subr.mxu0 %v923
    %3222 = vmatpush2.msra.mxu0 %v922
    %3223 = vmatprep.subr.mxu0 %v919
    %3224 = vmatpush2.msra.mxu0 %v918
    %3225 = vmatprep.subr.mxu0 %v915
    %3226 = vmatpush2.msra.mxu0 %v914
    %3227 = vmatprep.subr.mxu0 %v911
    %3228 = vmatpush2.msra.mxu0 %v910
    %3229 = vmatprep.subr.mxu0 %v907
    %3230 = vmatpush2.msra.mxu0 %v906
    %3231 = vmatprep.subr.mxu0 %v903
    %3232 = vmatpush2.msra.mxu0 %v902
    %3233 = vmatprep.subr.mxu0 %v899
    %3234 = vmatpush2.msra.mxu0 %v898
    %3235 = vmatprep.subr.mxu0 %v895
    %3236 = vmatpush2.msra.mxu0 %v894
    %3237 = vmatprep.subr.mxu0 %v891
    %3238 = vmatpush2.msra.mxu0 %v890
    %3239 = vmatprep.subr.mxu0 %v887
    %3240 = vmatpush2.msra.mxu0 %v886
    %3241 = vmatprep.subr.mxu0 %v883
    %3242 = vmatpush2.msra.mxu0 %v882
    %3243 = vmatprep.subr.mxu0 %v879
    %3244 = vmatpush2.msra.mxu0 %v878
    %3245 = vmatprep.subr.mxu0 %v875
    %3246 = vmatpush2.msra.mxu0 %v874
    %3247 = vmatprep.subr.mxu0 %v871
    %3248 = vmatpush2.msra.mxu0 %v870
    %3249 = vmatprep.mubr.f32.mxu0 %v2919
    %3250 = vmatmul.mubr.f32.gmra.mxu0 %v3113
    %v3251 = vpop.f32.mrf.mxu0
    %v3252 = vadd.f32 %v945, %v3251
    %v3253 = vpop.f32.mrf.mxu0
    %v3254 = vadd.f32 %v949, %v3253
    %3255 = vdwg.mxu0
    %v3256 = vxor.u32 %v3181, 2147483648
    %v3257 = vxor.u32 %v3183, 2147483648
    %v3258 = vxor.u32 %v3252, 2147483648
    %v3259 = vmul.f32 %v3256, 1.442695
    %v3260 = vpow.pop %v3259
    %v3261 = vmul.f32 %v3257, 1.442695
    %v3262 = vpow.pop %v3261
    %v3263 = vmul.f32 %v3258, 1.442695
    %v3264 = vpow.pop %v3263
    %v3265 = vadd.f32 %v3260, 1.0
    %v3266 = vadd.f32 %v3262, 1.0
    %v3267 = vadd.f32 %v3264, 1.0
    %v3268 = vrcp.pop %v3265
    %v3269 = vmul.f32 1.0, %v3268
    %v3270 = vrcp.pop %v3266
    %v3271 = vmul.f32 1.0, %v3270
    %v3272 = vrcp.pop %v3267
    %v3273 = vmul.f32 1.0, %v3272
    %v3274 = vtanh.pop %v3254
    %v3275 = vmul.f32 %v3271, %v2917
    %v3276 = vmul.f32 %v3269, %v3274
    %v3277 = vadd.f32 %v3275, %v3276
    %v3278 = vtanh.pop %v3277
    %v3279 = vmul.f32 %v3273, %v3278
    %s3280 = scalar_lea.vmem [#allocation2], 7
    %v3281 = vld [vmem:[%s3280] ss:$8 sm:$0xf]
    %3282 = vmatprep.subr.mxu0 %v609
    %3283 = vmatpush1.msra.mxu0 %v608
    %3284 = vmatprep.subr.mxu0 %v605
    %3285 = vmatpush1.msra.mxu0 %v604
    %3286 = vmatprep.subr.mxu0 %v601
    %3287 = vmatpush1.msra.mxu0 %v600
    %3288 = vmatprep.subr.mxu0 %v597
    %3289 = vmatpush1.msra.mxu0 %v596
    %3290 = vmatprep.subr.mxu0 %v593
    %3291 = vmatpush1.msra.mxu0 %v592
    %3292 = vmatprep.subr.mxu0 %v589
    %3293 = vmatpush1.msra.mxu0 %v588
    %3294 = vmatprep.subr.mxu0 %v585
    %3295 = vmatpush1.msra.mxu0 %v584
    %3296 = vmatprep.subr.mxu0 %v581
    %3297 = vmatpush1.msra.mxu0 %v580
    %3298 = vmatprep.subr.mxu0 %v577
    %3299 = vmatpush1.msra.mxu0 %v576
    %3300 = vmatprep.subr.mxu0 %v573
    %3301 = vmatpush1.msra.mxu0 %v572
    %3302 = vmatprep.subr.mxu0 %v569
    %3303 = vmatpush1.msra.mxu0 %v568
    %3304 = vmatprep.subr.mxu0 %v565
    %3305 = vmatpush1.msra.mxu0 %v564
    %3306 = vmatprep.subr.mxu0 %v561
    %3307 = vmatpush1.msra.mxu0 %v560
    %3308 = vmatprep.subr.mxu0 %v557
    %3309 = vmatpush1.msra.mxu0 %v556
    %3310 = vmatprep.subr.mxu0 %v553
    %3311 = vmatpush1.msra.mxu0 %v552
    %3312 = vmatprep.subr.mxu0 %v549
    %3313 = vmatpush1.msra.mxu0 %v548
    %3314 = vmatprep.subr.mxu0 0.0
    %3315 = vmatpush2.msra.mxu0 0.0
    %3316 = vmatprep.subr.mxu0 0.0
    %3317 = vmatpush2.msra.mxu0 0.0
    %3318 = vmatprep.subr.mxu0 0.0
    %3319 = vmatpush2.msra.mxu0 0.0
    %3320 = vmatprep.subr.mxu0 0.0
    %3321 = vmatpush2.msra.mxu0 0.0
    %3322 = vmatprep.subr.mxu0 0.0
    %3323 = vmatpush2.msra.mxu0 0.0
    %3324 = vmatprep.subr.mxu0 0.0
    %3325 = vmatpush2.msra.mxu0 0.0
    %3326 = vmatprep.subr.mxu0 0.0
    %3327 = vmatpush2.msra.mxu0 0.0
    %3328 = vmatprep.subr.mxu0 0.0
    %3329 = vmatpush2.msra.mxu0 0.0
    %3330 = vmatprep.subr.mxu0 0.0
    %3331 = vmatpush2.msra.mxu0 0.0
    %3332 = vmatprep.subr.mxu0 0.0
    %3333 = vmatpush2.msra.mxu0 0.0
    %3334 = vmatprep.subr.mxu0 0.0
    %3335 = vmatpush2.msra.mxu0 0.0
    %3336 = vmatprep.subr.mxu0 0.0
    %3337 = vmatpush2.msra.mxu0 0.0
    %3338 = vmatprep.subr.mxu0 0.0
    %3339 = vmatpush2.msra.mxu0 0.0
    %3340 = vmatprep.subr.mxu0 0.0
    %3341 = vmatpush2.msra.mxu0 0.0
    %3342 = vmatprep.subr.mxu0 0.0
    %3343 = vmatpush2.msra.mxu0 0.0
    %3344 = vmatprep.subr.mxu0 0.0
    %3345 = vmatpush2.msra.mxu0 0.0
    %3346 = vmatprep.mubr.f32.mxu0 0.0
    %3347 = vmatmul.mubr.f32.gmra.mxu0 %v3113
    %v3348 = vpop.f32.mrf.mxu0
    %v3349 = vadd.f32 0.0, %v3348
    %v3350 = vpop.f32.mrf.mxu0
    %v3351 = vadd.f32 0.0, %v3350
    %3352 = vdwg.mxu0
    %3353 = vmatprep.subr.mxu0 %v611
    %3354 = vmatpush1.msra.mxu0 %v610
    %3355 = vmatprep.subr.mxu0 %v607
    %3356 = vmatpush1.msra.mxu0 %v606
    %3357 = vmatprep.subr.mxu0 %v603
    %3358 = vmatpush1.msra.mxu0 %v602
    %3359 = vmatprep.subr.mxu0 %v599
    %3360 = vmatpush1.msra.mxu0 %v598
    %3361 = vmatprep.subr.mxu0 %v595
    %3362 = vmatpush1.msra.mxu0 %v594
    %3363 = vmatprep.subr.mxu0 %v591
    %3364 = vmatpush1.msra.mxu0 %v590
    %3365 = vmatprep.subr.mxu0 %v587
    %3366 = vmatpush1.msra.mxu0 %v586
    %3367 = vmatprep.subr.mxu0 %v583
    %3368 = vmatpush1.msra.mxu0 %v582
    %3369 = vmatprep.subr.mxu0 %v579
    %3370 = vmatpush1.msra.mxu0 %v578
    %3371 = vmatprep.subr.mxu0 %v575
    %3372 = vmatpush1.msra.mxu0 %v574
    %3373 = vmatprep.subr.mxu0 %v571
    %3374 = vmatpush1.msra.mxu0 %v570
    %3375 = vmatprep.subr.mxu0 %v567
    %3376 = vmatpush1.msra.mxu0 %v566
    %3377 = vmatprep.subr.mxu0 %v563
    %3378 = vmatpush1.msra.mxu0 %v562
    %3379 = vmatprep.subr.mxu0 %v559
    %3380 = vmatpush1.msra.mxu0 %v558
    %3381 = vmatprep.subr.mxu0 %v555
    %3382 = vmatpush1.msra.mxu0 %v554
    %3383 = vmatprep.subr.mxu0 %v551
    %3384 = vmatpush1.msra.mxu0 %v550
    %3385 = vmatprep.subr.mxu0 0.0
    %3386 = vmatpush2.msra.mxu0 0.0
    %3387 = vmatprep.subr.mxu0 0.0
    %3388 = vmatpush2.msra.mxu0 0.0
    %3389 = vmatprep.subr.mxu0 0.0
    %3390 = vmatpush2.msra.mxu0 0.0
    %3391 = vmatprep.subr.mxu0 0.0
    %3392 = vmatpush2.msra.mxu0 0.0
    %3393 = vmatprep.subr.mxu0 0.0
    %3394 = vmatpush2.msra.mxu0 0.0
    %3395 = vmatprep.subr.mxu0 0.0
    %3396 = vmatpush2.msra.mxu0 0.0
    %3397 = vmatprep.subr.mxu0 0.0
    %3398 = vmatpush2.msra.mxu0 0.0
    %3399 = vmatprep.subr.mxu0 0.0
    %3400 = vmatpush2.msra.mxu0 0.0
    %3401 = vmatprep.subr.mxu0 0.0
    %3402 = vmatpush2.msra.mxu0 0.0
    %3403 = vmatprep.subr.mxu0 0.0
    %3404 = vmatpush2.msra.mxu0 0.0
    %3405 = vmatprep.subr.mxu0 0.0
    %3406 = vmatpush2.msra.mxu0 0.0
    %3407 = vmatprep.subr.mxu0 0.0
    %3408 = vmatpush2.msra.mxu0 0.0
    %3409 = vmatprep.subr.mxu0 0.0
    %3410 = vmatpush2.msra.mxu0 0.0
    %3411 = vmatprep.subr.mxu0 0.0
    %3412 = vmatpush2.msra.mxu0 0.0
    %3413 = vmatprep.subr.mxu0 0.0
    %3414 = vmatpush2.msra.mxu0 0.0
    %3415 = vmatprep.subr.mxu0 0.0
    %3416 = vmatpush2.msra.mxu0 0.0
    %3417 = vmatprep.mubr.f32.mxu0 0.0
    %3418 = vmatmul.mubr.f32.gmra.mxu0 %v3113
    %v3419 = vpop.f32.mrf.mxu0
    %v3420 = vadd.f32 0.0, %v3419
    %v3421 = vpop.f32.mrf.mxu0
    %v3422 = vadd.f32 0.0, %v3421
    %3423 = vdwg.mxu0
    %v3428 = vcombine.low %v3349, %v3351
    %v3429 = vcombine.low %v3420, %v3422
    %v3431 = vunpack.c.l.s4 1966171168
    %v3432 = vunpack.c.0.s8 %v3431
    %v3433 = vlaneseq
    %v3434 = vshrl.u32 %v3433, 7
    %v3435 = vsub.s32 %v3432, %v3434
    %v3436 = vrot.slane %v3428, %v3435
    %v3438 = vunpack.c.l.s4 1966171168
    %v3439 = vunpack.c.0.s8 %v3438
    %v3440 = vlaneseq
    %v3441 = vshrl.u32 %v3440, 7
    %v3442 = vsub.s32 %v3439, %v3441
    %v3443 = vrot.slane %v3429, %v3442
    %v3444 = vcombine.low %v3436, %v3443
    %v3446 = vunpack.c.l.s4 1966171168
    %v3447 = vunpack.c.0.s8 %v3446
    %v3448 = vlaneseq
    %v3449 = vshrl.u32 %v3448, 7
    %v3450 = vsub.s32 %v3447, %v3449
    %v3451 = vrot.slane %v3444, %v3450
    %v3453 = vadd.f32 %v3281, %v3451
    %v3454 = vxor.u32 %v3453, 2147483648
    %v3455 = vmul.f32 %v3454, 1.442695
    %v3456 = vpow.pop %v3455
    %v3457 = vadd.f32 %v3456, 1.0
    %v3458 = vrcp.pop %v3457
    %v3459 = vmul.f32 1.0, %v3458
    %v3461 = vrot.slane %v3453, 3
    %v3463 = vtanh.pop %v3461
    %v3465 = vrot.slane %v3459, 1
    %v3467 = vmul.f32 %v3465, %v3109
    %v3468 = vmul.f32 %v3459, %v3463
    %v3469 = vadd.f32 %v3467, %v3468
    %v3470 = vtanh.pop %v3469
    %v3471 = vrot.slane %v3459, 2
    %v3473 = vmul.f32 %v3471, %v3470
    %3474 = vmatprep.subr.mxu0 %v865
    %3475 = vmatpush1.msra.mxu0 %v864
    %3476 = vmatprep.subr.mxu0 %v861
    %3477 = vmatpush1.msra.mxu0 %v860
    %3478 = vmatprep.subr.mxu0 %v857
    %3479 = vmatpush1.msra.mxu0 %v856
    %3480 = vmatprep.subr.mxu0 %v853
    %3481 = vmatpush1.msra.mxu0 %v852
    %3482 = vmatprep.subr.mxu0 %v849
    %3483 = vmatpush1.msra.mxu0 %v848
    %3484 = vmatprep.subr.mxu0 %v845
    %3485 = vmatpush1.msra.mxu0 %v844
    %3486 = vmatprep.subr.mxu0 %v841
    %3487 = vmatpush1.msra.mxu0 %v840
    %3488 = vmatprep.subr.mxu0 %v837
    %3489 = vmatpush1.msra.mxu0 %v836
    %3490 = vmatprep.subr.mxu0 %v833
    %3491 = vmatpush1.msra.mxu0 %v832
    %3492 = vmatprep.subr.mxu0 %v829
    %3493 = vmatpush1.msra.mxu0 %v828
    %3494 = vmatprep.subr.mxu0 %v825
    %3495 = vmatpush1.msra.mxu0 %v824
    %3496 = vmatprep.subr.mxu0 %v821
    %3497 = vmatpush1.msra.mxu0 %v820
    %3498 = vmatprep.subr.mxu0 %v817
    %3499 = vmatpush1.msra.mxu0 %v816
    %3500 = vmatprep.subr.mxu0 %v813
    %3501 = vmatpush1.msra.mxu0 %v812
    %3502 = vmatprep.subr.mxu0 %v809
    %3503 = vmatpush1.msra.mxu0 %v808
    %3504 = vmatprep.subr.mxu0 %v805
    %3505 = vmatpush1.msra.mxu0 %v804
    %3506 = vmatprep.subr.mxu0 %v929
    %3507 = vmatpush2.msra.mxu0 %v928
    %3508 = vmatprep.subr.mxu0 %v925
    %3509 = vmatpush2.msra.mxu0 %v924
    %3510 = vmatprep.subr.mxu0 %v921
    %3511 = vmatpush2.msra.mxu0 %v920
    %3512 = vmatprep.subr.mxu0 %v917
    %3513 = vmatpush2.msra.mxu0 %v916
    %3514 = vmatprep.subr.mxu0 %v913
    %3515 = vmatpush2.msra.mxu0 %v912
    %3516 = vmatprep.subr.mxu0 %v909
    %3517 = vmatpush2.msra.mxu0 %v908
    %3518 = vmatprep.subr.mxu0 %v905
    %3519 = vmatpush2.msra.mxu0 %v904
    %3520 = vmatprep.subr.mxu0 %v901
    %3521 = vmatpush2.msra.mxu0 %v900
    %3522 = vmatprep.subr.mxu0 %v897
    %3523 = vmatpush2.msra.mxu0 %v896
    %3524 = vmatprep.subr.mxu0 %v893
    %3525 = vmatpush2.msra.mxu0 %v892
    %3526 = vmatprep.subr.mxu0 %v889
    %3527 = vmatpush2.msra.mxu0 %v888
    %3528 = vmatprep.subr.mxu0 %v885
    %3529 = vmatpush2.msra.mxu0 %v884
    %3530 = vmatprep.subr.mxu0 %v881
    %3531 = vmatpush2.msra.mxu0 %v880
    %3532 = vmatprep.subr.mxu0 %v877
    %3533 = vmatpush2.msra.mxu0 %v876
    %3534 = vmatprep.subr.mxu0 %v873
    %3535 = vmatpush2.msra.mxu0 %v872
    %3536 = vmatprep.subr.mxu0 %v869
    %3537 = vmatpush2.msra.mxu0 %v868
    %3538 = vmatprep.mubr.f32.mxu0 %v3279
    %3539 = vmatmul.mubr.f32.gmra.mxu0 %v3473
    %v3540 = vpop.f32.mrf.mxu0
    %v3541 = vadd.f32 %v937, %v3540
    %v3542 = vpop.f32.mrf.mxu0
    %v3543 = vadd.f32 %v941, %v3542
    %3544 = vdwg.mxu0
    %3545 = vmatprep.subr.mxu0 %v867
    %3546 = vmatpush1.msra.mxu0 %v866
    %3547 = vmatprep.subr.mxu0 %v863
    %3548 = vmatpush1.msra.mxu0 %v862
    %3549 = vmatprep.subr.mxu0 %v859
    %3550 = vmatpush1.msra.mxu0 %v858
    %3551 = vmatprep.subr.mxu0 %v855
    %3552 = vmatpush1.msra.mxu0 %v854
    %3553 = vmatprep.subr.mxu0 %v851
    %3554 = vmatpush1.msra.mxu0 %v850
    %3555 = vmatprep.subr.mxu0 %v847
    %3556 = vmatpush1.msra.mxu0 %v846
    %3557 = vmatprep.subr.mxu0 %v843
    %3558 = vmatpush1.msra.mxu0 %v842
    %3559 = vmatprep.subr.mxu0 %v839
    %3560 = vmatpush1.msra.mxu0 %v838
    %3561 = vmatprep.subr.mxu0 %v835
    %3562 = vmatpush1.msra.mxu0 %v834
    %3563 = vmatprep.subr.mxu0 %v831
    %3564 = vmatpush1.msra.mxu0 %v830
    %3565 = vmatprep.subr.mxu0 %v827
    %3566 = vmatpush1.msra.mxu0 %v826
    %3567 = vmatprep.subr.mxu0 %v823
    %3568 = vmatpush1.msra.mxu0 %v822
    %3569 = vmatprep.subr.mxu0 %v819
    %3570 = vmatpush1.msra.mxu0 %v818
    %3571 = vmatprep.subr.mxu0 %v815
    %3572 = vmatpush1.msra.mxu0 %v814
    %3573 = vmatprep.subr.mxu0 %v811
    %3574 = vmatpush1.msra.mxu0 %v810
    %3575 = vmatprep.subr.mxu0 %v807
    %3576 = vmatpush1.msra.mxu0 %v806
    %3577 = vmatprep.subr.mxu0 %v931
    %3578 = vmatpush2.msra.mxu0 %v930
    %3579 = vmatprep.subr.mxu0 %v927
    %3580 = vmatpush2.msra.mxu0 %v926
    %3581 = vmatprep.subr.mxu0 %v923
    %3582 = vmatpush2.msra.mxu0 %v922
    %3583 = vmatprep.subr.mxu0 %v919
    %3584 = vmatpush2.msra.mxu0 %v918
    %3585 = vmatprep.subr.mxu0 %v915
    %3586 = vmatpush2.msra.mxu0 %v914
    %3587 = vmatprep.subr.mxu0 %v911
    %3588 = vmatpush2.msra.mxu0 %v910
    %3589 = vmatprep.subr.mxu0 %v907
    %3590 = vmatpush2.msra.mxu0 %v906
    %3591 = vmatprep.subr.mxu0 %v903
    %3592 = vmatpush2.msra.mxu0 %v902
    %3593 = vmatprep.subr.mxu0 %v899
    %3594 = vmatpush2.msra.mxu0 %v898
    %3595 = vmatprep.subr.mxu0 %v895
    %3596 = vmatpush2.msra.mxu0 %v894
    %3597 = vmatprep.subr.mxu0 %v891
    %3598 = vmatpush2.msra.mxu0 %v890
    %3599 = vmatprep.subr.mxu0 %v887
    %3600 = vmatpush2.msra.mxu0 %v886
    %3601 = vmatprep.subr.mxu0 %v883
    %3602 = vmatpush2.msra.mxu0 %v882
    %3603 = vmatprep.subr.mxu0 %v879
    %3604 = vmatpush2.msra.mxu0 %v878
    %3605 = vmatprep.subr.mxu0 %v875
    %3606 = vmatpush2.msra.mxu0 %v874
    %3607 = vmatprep.subr.mxu0 %v871
    %3608 = vmatpush2.msra.mxu0 %v870
    %3609 = vmatprep.mubr.f32.mxu0 %v3279
    %3610 = vmatmul.mubr.f32.gmra.mxu0 %v3473
    %v3611 = vpop.f32.mrf.mxu0
    %v3612 = vadd.f32 %v945, %v3611
    %v3613 = vpop.f32.mrf.mxu0
    %v3614 = vadd.f32 %v949, %v3613
    %3615 = vdwg.mxu0
    %v3616 = vxor.u32 %v3541, 2147483648
    %v3617 = vxor.u32 %v3543, 2147483648
    %v3618 = vxor.u32 %v3612, 2147483648
    %v3619 = vmul.f32 %v3616, 1.442695
    %v3620 = vpow.pop %v3619
    %v3621 = vmul.f32 %v3617, 1.442695
    %v3622 = vpow.pop %v3621
    %v3623 = vmul.f32 %v3618, 1.442695
    %v3624 = vpow.pop %v3623
    %v3625 = vadd.f32 %v3620, 1.0
    %v3626 = vadd.f32 %v3622, 1.0
    %v3627 = vadd.f32 %v3624, 1.0
    %v3628 = vrcp.pop %v3625
    %v3629 = vmul.f32 1.0, %v3628
    %v3630 = vrcp.pop %v3626
    %v3631 = vmul.f32 1.0, %v3630
    %v3632 = vrcp.pop %v3627
    %v3633 = vmul.f32 1.0, %v3632
    %v3634 = vtanh.pop %v3614
    %v3635 = vmul.f32 %v3631, %v3277
    %v3636 = vmul.f32 %v3629, %v3634
    %v3637 = vadd.f32 %v3635, %v3636
    %v3638 = vtanh.pop %v3637
    %v3639 = vmul.f32 %v3633, %v3638
    %3640 = vst [vmem:[#allocation14] sm:$0x1] %v3473
    %3641 = vst [vmem:[#allocation15] sm:$0x1] %v3469
    %3642 = vst [vmem:[#allocation14 + $0x1] sm:$0x1] %v3639
    %3643 = vst [vmem:[#allocation15 + $0x1] sm:$0x1] %v3637
    // Predicated region
    $region54: #{encoder_forward.1} parent=1 // pred_check
      _
    $region55: #{encoder_forward.1} parent=1 // pred_check_branch
      %3645 = sbr.rel (0) target = $region57
    $region56: #{encoder_forward.1} parent=1 // pred_region
      %s3647 = ssub.s32 32, 32
      %3648 = vsyncadd [#allocation5], %s3647
      %s3650 = sshll.u32 [#allocation14], 4
      %s3651 = int_to_ptr.vmem [resolvable:$true] %s3650
      %3653 = dma.vmem_to_hbm [thread:$0]  %s3651, 32, %s7, [#allocation5]
    $region57: #{encoder_forward.1} parent=1 // pred_fallthru
      _
    // Predicated region
    $region58: #{encoder_forward.1} parent=1 // pred_check
      _
    $region59: #{encoder_forward.1} parent=1 // pred_check_branch
      %3655 = sbr.rel (0) target = $region61
    $region60: #{encoder_forward.1} parent=1 // pred_region
      %s3657 = ssub.s32 32, 32
      %3658 = vsyncadd [#allocation16], %s3657
      %s3660 = sshll.u32 [#allocation15], 4
      %s3661 = int_to_ptr.vmem [resolvable:$true] %s3660
      %3663 = dma.vmem_to_hbm [thread:$0]  %s3661, 32, %s8, [#allocation16]
    $region61: #{encoder_forward.1} parent=1 // pred_fallthru
      _
    // Predicated region
    $region62: #{encoder_forward.1} parent=1 // pred_check
      _
    $region63: #{encoder_forward.1} parent=1 // pred_check_branch
      %3665 = sbr.rel (0) target = $region65
    $region64: #{encoder_forward.1} parent=1 // pred_region
      %3666 = dma.done [#allocation5], 32
    $region65: #{encoder_forward.1} parent=1 // pred_fallthru
      _
    // Predicated region
    $region66: #{encoder_forward.1} parent=1 // pred_check
      _
    $region67: #{encoder_forward.1} parent=1 // pred_check_branch
      %3668 = sbr.rel (0) target = $region69
    $region68: #{encoder_forward.1} parent=1 // pred_region
      %3669 = dma.done [#allocation16], 32
    $region69: #{encoder_forward.1} parent=1 // pred_fallthru
      _
    %3670 = vsyncpa [#allocation4], 1
    %3671 = vsyncpa [#allocation9], 1
    %3672 = vsyncpa [#allocation12], 1
    %3673 = vsyncpa [#allocation5], 1
    %3674 = vsyncpa [#allocation16], 1
    %3675 = vsyncpa [#allocation6], 1

</llo_original>
